<compile_context>
chip_gen: v7x
topology: tpu7x:2x2x1
jax: 0.10.0
libtpu: 0.0.40
codegen_flags: <defaults>
</compile_context>

<pallas_src>
import numpy as np

import jax
import jax.numpy as jnp
from jax.experimental import pallas as pl
from jax.experimental.pallas import tpu as pltpu

# ----------------------------- static geometry -----------------------------
KH, KW = 5, 5
H0, W0, C0 = 32, 32, 3            # input image (NCHW 3x32x32)
OH1, OW1 = 28, 28                 # conv1 output
PH1, PW1 = 14, 14                 # after 2x2 max-pool
C1, C1P = 6, 8                    # conv1 channels (real / lane-padded)
OH2, OW2 = 10, 10                 # conv2 output
PH2, PW2 = 5, 5                   # after 2x2 max-pool
C2 = 16                           # conv2 channels
NF1, NF2, NF3 = 120, 84, 10       # fc sizes
FPAD = 128                        # fc lane padding
QUAD = 128                        # lane offset of the odd-column quadrant


# ------------------------------ fused kernel -------------------------------

def _cnn_kernel(x_ref, r1_ref, b1_ref, r2_ref, b2_ref,
                f1_ref, fb1_ref, w2_ref, fb2_ref, w3_ref, fb3_ref, o_ref):
    tb = x_ref.shape[1]                                        # batch tile

    # ---- conv1 + bias + ReLU + 2x2 max-pool (5 MXU matmuls) ----
    x = x_ref[...].reshape(H0 * tb, W0 * C0)                   # [32*tb, 96] bf16
    acc = jnp.dot(x[0:OH1 * tb], r1_ref[0], preferred_element_type=jnp.float32)
    for i in range(1, KH):
        acc += jnp.dot(x[i * tb:(i + OH1) * tb], r1_ref[i],
                       preferred_element_type=jnp.float32)     # [28*tb, 256]
    acc = jnp.maximum(acc + b1_ref[...], 0.0)
    a = acc.reshape(PH1, 2, tb, 2 * QUAD)
    a = jnp.maximum(a[:, 0], a[:, 1])                          # pool row pairs
    y = jnp.maximum(a[..., :PW1 * C1P],                        # pool col quads
                    a[..., QUAD:QUAD + PW1 * C1P])             # [14, tb, 112]
    y = y.astype(jnp.bfloat16).reshape(PH1 * tb, PW1 * C1P)

    # ---- conv2 + bias + ReLU + 2x2 max-pool (5 MXU matmuls) ----
    acc = jnp.dot(y[0:OH2 * tb], r2_ref[0], preferred_element_type=jnp.float32)
    for i in range(1, KH):
        acc += jnp.dot(y[i * tb:(i + OH2) * tb], r2_ref[i],
                       preferred_element_type=jnp.float32)     # [10*tb, 256]
    acc = jnp.maximum(acc + b2_ref[...], 0.0)
    a = acc.reshape(PH2, 2, tb, 2 * QUAD)
    a = jnp.maximum(a[:, 0], a[:, 1])                          # [5, tb, 256]
    y2 = jnp.maximum(a[..., :PW2 * C2],
                     a[..., QUAD:QUAD + PW2 * C2])             # [5, tb, 80]
    y2 = y2.astype(jnp.bfloat16)

    # ---- fc1(ReLU) -> fc2(ReLU) -> fc3 ----
    h = jnp.dot(y2[0], f1_ref[0], preferred_element_type=jnp.float32)
    for r in range(1, PH2):
        h += jnp.dot(y2[r], f1_ref[r], preferred_element_type=jnp.float32)
    h = jnp.maximum(h + fb1_ref[...], 0.0).astype(jnp.bfloat16)
    h = jnp.dot(h, w2_ref[...], preferred_element_type=jnp.float32) + fb2_ref[...]
    h = jnp.maximum(h, 0.0).astype(jnp.bfloat16)
    o_ref[...] = (jnp.dot(h, w3_ref[...], preferred_element_type=jnp.float32)
                  + fb3_ref[...])


# ------------------------------ model / params ------------------------------

def init_params(key):
    """Deterministic PyTorch-style uniform(-1/sqrt(fan_in), 1/sqrt(fan_in)) init."""
    def uniform(k, shape, fan_in):
        bound = 1.0 / float(fan_in) ** 0.5
        return jax.random.uniform(k, shape, jnp.float32, -bound, bound)

    ks = jax.random.split(key, 10)
    return {
        "conv1_w": uniform(ks[0], (6, 3, 5, 5), 3 * 5 * 5),
        "conv1_b": uniform(ks[1], (6,), 3 * 5 * 5),
        "conv2_w": uniform(ks[2], (16, 6, 5, 5), 6 * 5 * 5),
        "conv2_b": uniform(ks[3], (16,), 6 * 5 * 5),
        "fc1_w": uniform(ks[4], (120, 16 * 5 * 5), 16 * 5 * 5),
        "fc1_b": uniform(ks[5], (120,), 16 * 5 * 5),
        "fc2_w": uniform(ks[6], (84, 120), 120),
        "fc2_b": uniform(ks[7], (84,), 120),
        "fc3_w": uniform(ks[8], (10, 84), 84),
        "fc3_b": uniform(ks[9], (10,), 84),
    }


def prepare_params(p):
    """One-time construction of width-lowered, quadrant-stacked bf16 weight mats."""
    w1 = np.asarray(p["conv1_w"], np.float32)     # [6, 3, 5, 5]
    cb1 = np.asarray(p["conv1_b"], np.float32)
    w2 = np.asarray(p["conv2_w"], np.float32)     # [16, 6, 5, 5]
    cb2 = np.asarray(p["conv2_b"], np.float32)
    fc1 = np.asarray(p["fc1_w"], np.float32)      # [120, 400]
    fc1b = np.asarray(p["fc1_b"], np.float32)
    fc2 = np.asarray(p["fc2_w"], np.float32)      # [84, 120]
    fc2b = np.asarray(p["fc2_b"], np.float32)
    fc3 = np.asarray(p["fc3_w"], np.float32)      # [10, 84]
    fc3b = np.asarray(p["fc3_b"], np.float32)

    # conv1: r1[i][(2*ow2+dj+j)*C0 + c, dj*QUAD + ow2*C1P + n] = w1[n, c, i, j]
    r1 = np.zeros((KH, W0 * C0, 2 * QUAD), np.float32)
    b1row = np.zeros((1, 2 * QUAD), np.float32)
    for i in range(KH):
        for j in range(KW):
            blk = w1[:, :, i, j].T                             # [cin=3, cout=6]
            for dj in range(2):
                for ow2 in range(PW1):
                    r = (2 * ow2 + dj + j) * C0
                    col = dj * QUAD + ow2 * C1P
                    r1[i, r:r + C0, col:col + C1] = blk
    for dj in range(2):
        for ow2 in range(PW1):
            col = dj * QUAD + ow2 * C1P
            b1row[0, col:col + C1] = cb1

    # conv2: r2[i][(2*ow2+dj+j)*C1P + c, dj*QUAD + ow2*C2 + n] = w2[n, c, i, j]
    r2 = np.zeros((KH, PW1 * C1P, 2 * QUAD), np.float32)
    b2row = np.zeros((1, 2 * QUAD), np.float32)
    for i in range(KH):
        for j in range(KW):
            blk = w2[:, :, i, j].T                             # [cin=6, cout=16]
            for dj in range(2):
                for ow2 in range(PW2):
                    r = (2 * ow2 + dj + j) * C1P
                    col = dj * QUAD + ow2 * C2
                    r2[i, r:r + C1, col:col + C2] = blk
    for dj in range(2):
        for ow2 in range(PW2):
            col = dj * QUAD + ow2 * C2
            b2row[0, col:col + C2] = cb2

    # fc1: f1m[h][w*C2 + n, m] = fc1_w[m, n*25 + h*5 + w]  (torch (c,h,w) flatten)
    f1m = np.zeros((PH2, PW2 * C2, FPAD), np.float32)
    for h in range(PH2):
        for w in range(PW2):
            for n in range(C2):
                f1m[h, w * C2 + n, :NF1] = fc1[:, n * (PH2 * PW2) + h * PW2 + w]
    fb1row = np.zeros((1, FPAD), np.float32)
    fb1row[0, :NF1] = fc1b

    w2m = np.zeros((FPAD, FPAD), np.float32)
    w2m[:NF1, :NF2] = fc2.T
    fb2row = np.zeros((1, FPAD), np.float32)
    fb2row[0, :NF2] = fc2b

    w3m = np.zeros((FPAD, FPAD), np.float32)
    w3m[:NF2, :NF3] = fc3.T
    fb3row = np.zeros((1, FPAD), np.float32)
    fb3row[0, :NF3] = fc3b

    bf16 = jnp.bfloat16
    return {
        "r1": jnp.asarray(r1, bf16), "b1": jnp.asarray(b1row),
        "r2": jnp.asarray(r2, bf16), "b2": jnp.asarray(b2row),
        "f1": jnp.asarray(f1m, bf16), "fb1": jnp.asarray(fb1row),
        "w2": jnp.asarray(w2m, bf16), "fb2": jnp.asarray(fb2row),
        "w3": jnp.asarray(w3m, bf16), "fb3": jnp.asarray(fb3row),
    }


def cnn_forward(prepared, x):
    """x: [B, 3, 32, 32] float32 (NCHW, CIFAR-sized).  Returns [B, 10] float32."""
    B = x.shape[0]
    assert x.shape[1:] == (C0, H0, W0)

    # Batch tiling: always >= 2 blocks on the parallel grid axis (v7x megacore),
    # tiles are multiples of 16 so bf16 sublane merges stay layout-aligned.
    if B <= 32:
        bpad, tb = 32, 16
    else:
        bpad = ((B + 31) // 32) * 32
        tb = 32

    # [B, C, H, W] -> [H, B, W*C]: spatial row outermost, batch in sublanes,
    # (width, channel) merged into a dense lane dim.  Done once on ~12 KB/img.
    xin = jnp.transpose(x, (2, 0, 3, 1)).reshape(H0, B, W0 * C0)
    if bpad != B:
        xin = jnp.pad(xin, ((0, 0), (0, bpad - B), (0, 0)))
    xin = xin.astype(jnp.bfloat16)

    def inv(shape):  # grid-invariant (weight) operand: same block every step
        return pl.BlockSpec(shape, lambda t: (0,) * len(shape))

    out = pl.pallas_call(
        _cnn_kernel,
        out_shape=jax.ShapeDtypeStruct((bpad, FPAD), jnp.float32),
        grid=(bpad // tb,),
        in_specs=[
            pl.BlockSpec((H0, tb, W0 * C0), lambda t: (0, t, 0)),
            inv((KH, W0 * C0, 2 * QUAD)), inv((1, 2 * QUAD)),
            inv((KH, PW1 * C1P, 2 * QUAD)), inv((1, 2 * QUAD)),
            inv((PH2, PW2 * C2, FPAD)), inv((1, FPAD)),
            inv((FPAD, FPAD)), inv((1, FPAD)),
            inv((FPAD, FPAD)), inv((1, FPAD)),
        ],
        out_specs=pl.BlockSpec((tb, FPAD), lambda t: (t, 0)),
        compiler_params=pltpu.CompilerParams(
            dimension_semantics=("parallel",)),
    )(xin, prepared["r1"], prepared["b1"], prepared["r2"], prepared["b2"],
      prepared["f1"], prepared["fb1"], prepared["w2"], prepared["fb2"],
      prepared["w3"], prepared["fb3"])
    return out[:B, :NF3]


if __name__ == "__main__":
    key = jax.random.PRNGKey(0)
    pkey, xkey = jax.random.split(key)
    params = init_params(pkey)
    prepared = prepare_params(params)
    x = jax.random.normal(xkey, (2, 3, 32, 32), dtype=jnp.float32)

    out = jax.jit(cnn_forward)(prepared, x)
    out = jax.block_until_ready(out)
    assert out.shape == (2, 10) and out.dtype == jnp.float32
    print("KERNEL_OK")
</pallas_src>

<mosaic_0001>
module attributes {stable_mosaic.version = 11 : i64} {
  func.func @_cnn_kernel(%arg0: i32, %arg1: memref<32x16x96xbf16, #tpu.memory_space<vmem>>, %arg2: memref<5x96x256xbf16, #tpu.memory_space<vmem>>, %arg3: memref<1x256xf32, #tpu.memory_space<vmem>>, %arg4: memref<5x112x256xbf16, #tpu.memory_space<vmem>>, %arg5: memref<1x256xf32, #tpu.memory_space<vmem>>, %arg6: memref<5x80x128xbf16, #tpu.memory_space<vmem>>, %arg7: memref<1x128xf32, #tpu.memory_space<vmem>>, %arg8: memref<128x128xbf16, #tpu.memory_space<vmem>>, %arg9: memref<1x128xf32, #tpu.memory_space<vmem>>, %arg10: memref<128x128xbf16, #tpu.memory_space<vmem>>, %arg11: memref<1x128xf32, #tpu.memory_space<vmem>>, %arg12: memref<16x128xf32, #tpu.memory_space<vmem>>) attributes {dimension_semantics = [#tpu.dimension_semantics<parallel>], iteration_bounds = array<i64: 2>, scalar_prefetch = 0 : i64, scratch_operands = 0 : i64, tpu.core_type = #tpu.core_type<tc>, window_params = [{transform_indices = @transform_0, window_bounds = array<i64: 32, 16, 96>}, {pipeline_mode = #tpu.pipeline_mode<synchronous>, transform_indices = @transform_1, window_bounds = array<i64: 5, 96, 256>}, {pipeline_mode = #tpu.pipeline_mode<synchronous>, transform_indices = @transform_2, window_bounds = array<i64: 1, 256>}, {pipeline_mode = #tpu.pipeline_mode<synchronous>, transform_indices = @transform_3, window_bounds = array<i64: 5, 112, 256>}, {pipeline_mode = #tpu.pipeline_mode<synchronous>, transform_indices = @transform_4, window_bounds = array<i64: 1, 256>}, {pipeline_mode = #tpu.pipeline_mode<synchronous>, transform_indices = @transform_5, window_bounds = array<i64: 5, 80, 128>}, {pipeline_mode = #tpu.pipeline_mode<synchronous>, transform_indices = @transform_6, window_bounds = array<i64: 1, 128>}, {pipeline_mode = #tpu.pipeline_mode<synchronous>, transform_indices = @transform_7, window_bounds = array<i64: 128, 128>}, {pipeline_mode = #tpu.pipeline_mode<synchronous>, transform_indices = @transform_8, window_bounds = array<i64: 1, 128>}, {pipeline_mode = #tpu.pipeline_mode<synchronous>, transform_indices = @transform_9, window_bounds = array<i64: 128, 128>}, {pipeline_mode = #tpu.pipeline_mode<synchronous>, transform_indices = @transform_10, window_bounds = array<i64: 1, 128>}, {transform_indices = @transform_11, window_bounds = array<i64: 16, 128>}]} {
    %c0 = arith.constant 0 : index
    %c0_0 = arith.constant 0 : index
    %c0_1 = arith.constant 0 : index
    %0 = vector.load %arg1[%c0, %c0_0, %c0_1] : memref<32x16x96xbf16, #tpu.memory_space<vmem>>, vector<32x16x96xbf16>
    %1 = vector.shape_cast %0 : vector<32x16x96xbf16> to vector<512x96xbf16>
    %2 = vector.extract_strided_slice %1 {offsets = [0, 0], sizes = [448, 96], strides = [1, 1]} : vector<512x96xbf16> to vector<448x96xbf16>
    %c0_2 = arith.constant 0 : index
    %c0_3 = arith.constant 0 : index
    %c0_4 = arith.constant 0 : index
    %3 = vector.load %arg2[%c0_2, %c0_3, %c0_4] : memref<5x96x256xbf16, #tpu.memory_space<vmem>>, vector<1x96x256xbf16>
    %4 = vector.shape_cast %3 : vector<1x96x256xbf16> to vector<96x256xbf16>
    %cst = arith.constant dense<0.000000e+00> : vector<448x256xf32>
    %5 = tpu.matmul %2, %4, %cst {dimension_numbers = #tpu.dot_dimension_numbers<[1], [0], [0], [1], [0, 0, 1, 1], [], []>} : vector<448x96xbf16>, vector<96x256xbf16>, vector<448x256xf32> -> vector<448x256xf32>
    %6 = vector.extract_strided_slice %1 {offsets = [16, 0], sizes = [448, 96], strides = [1, 1]} : vector<512x96xbf16> to vector<448x96xbf16>
    %c1 = arith.constant 1 : index
    %c0_5 = arith.constant 0 : index
    %c0_6 = arith.constant 0 : index
    %7 = vector.load %arg2[%c1, %c0_5, %c0_6] : memref<5x96x256xbf16, #tpu.memory_space<vmem>>, vector<1x96x256xbf16>
    %8 = vector.shape_cast %7 : vector<1x96x256xbf16> to vector<96x256xbf16>
    %cst_7 = arith.constant dense<0.000000e+00> : vector<448x256xf32>
    %9 = tpu.matmul %6, %8, %cst_7 {dimension_numbers = #tpu.dot_dimension_numbers<[1], [0], [0], [1], [0, 0, 1, 1], [], []>} : vector<448x96xbf16>, vector<96x256xbf16>, vector<448x256xf32> -> vector<448x256xf32>
    %10 = arith.addf %5, %9 : vector<448x256xf32>
    %11 = vector.extract_strided_slice %1 {offsets = [32, 0], sizes = [448, 96], strides = [1, 1]} : vector<512x96xbf16> to vector<448x96xbf16>
    %c2 = arith.constant 2 : index
    %c0_8 = arith.constant 0 : index
    %c0_9 = arith.constant 0 : index
    %12 = vector.load %arg2[%c2, %c0_8, %c0_9] : memref<5x96x256xbf16, #tpu.memory_space<vmem>>, vector<1x96x256xbf16>
    %13 = vector.shape_cast %12 : vector<1x96x256xbf16> to vector<96x256xbf16>
    %cst_10 = arith.constant dense<0.000000e+00> : vector<448x256xf32>
    %14 = tpu.matmul %11, %13, %cst_10 {dimension_numbers = #tpu.dot_dimension_numbers<[1], [0], [0], [1], [0, 0, 1, 1], [], []>} : vector<448x96xbf16>, vector<96x256xbf16>, vector<448x256xf32> -> vector<448x256xf32>
    %15 = arith.addf %10, %14 : vector<448x256xf32>
    %16 = vector.extract_strided_slice %1 {offsets = [48, 0], sizes = [448, 96], strides = [1, 1]} : vector<512x96xbf16> to vector<448x96xbf16>
    %c3 = arith.constant 3 : index
    %c0_11 = arith.constant 0 : index
    %c0_12 = arith.constant 0 : index
    %17 = vector.load %arg2[%c3, %c0_11, %c0_12] : memref<5x96x256xbf16, #tpu.memory_space<vmem>>, vector<1x96x256xbf16>
    %18 = vector.shape_cast %17 : vector<1x96x256xbf16> to vector<96x256xbf16>
    %cst_13 = arith.constant dense<0.000000e+00> : vector<448x256xf32>
    %19 = tpu.matmul %16, %18, %cst_13 {dimension_numbers = #tpu.dot_dimension_numbers<[1], [0], [0], [1], [0, 0, 1, 1], [], []>} : vector<448x96xbf16>, vector<96x256xbf16>, vector<448x256xf32> -> vector<448x256xf32>
    %20 = arith.addf %15, %19 : vector<448x256xf32>
    %21 = vector.extract_strided_slice %1 {offsets = [64, 0], sizes = [448, 96], strides = [1, 1]} : vector<512x96xbf16> to vector<448x96xbf16>
    %c4 = arith.constant 4 : index
    %c0_14 = arith.constant 0 : index
    %c0_15 = arith.constant 0 : index
    %22 = vector.load %arg2[%c4, %c0_14, %c0_15] : memref<5x96x256xbf16, #tpu.memory_space<vmem>>, vector<1x96x256xbf16>
    %23 = vector.shape_cast %22 : vector<1x96x256xbf16> to vector<96x256xbf16>
    %cst_16 = arith.constant dense<0.000000e+00> : vector<448x256xf32>
    %24 = tpu.matmul %21, %23, %cst_16 {dimension_numbers = #tpu.dot_dimension_numbers<[1], [0], [0], [1], [0, 0, 1, 1], [], []>} : vector<448x96xbf16>, vector<96x256xbf16>, vector<448x256xf32> -> vector<448x256xf32>
    %25 = arith.addf %20, %24 : vector<448x256xf32>
    %c0_17 = arith.constant 0 : index
    %c0_18 = arith.constant 0 : index
    %26 = vector.load %arg3[%c0_17, %c0_18] : memref<1x256xf32, #tpu.memory_space<vmem>>, vector<1x256xf32>
    %27 = vector.broadcast %26 : vector<1x256xf32> to vector<448x256xf32>
    %28 = arith.addf %25, %27 : vector<448x256xf32>
    %cst_19 = arith.constant 0.000000e+00 : f32
    %29 = vector.broadcast %cst_19 : f32 to vector<448x256xf32>
    %30 = arith.maximumf %28, %29 : vector<448x256xf32>
    %31 = vector.shape_cast %30 : vector<448x256xf32> to vector<14x2x16x256xf32>
    %32 = vector.extract_strided_slice %31 {offsets = [0, 0, 0, 0], sizes = [14, 1, 16, 256], strides = [1, 1, 1, 1]} : vector<14x2x16x256xf32> to vector<14x1x16x256xf32>
    %33 = vector.shape_cast %32 : vector<14x1x16x256xf32> to vector<14x16x256xf32>
    %34 = vector.extract_strided_slice %31 {offsets = [0, 1, 0, 0], sizes = [14, 1, 16, 256], strides = [1, 1, 1, 1]} : vector<14x2x16x256xf32> to vector<14x1x16x256xf32>
    %35 = vector.shape_cast %34 : vector<14x1x16x256xf32> to vector<14x16x256xf32>
    %36 = arith.maximumf %33, %35 : vector<14x16x256xf32>
    %37 = vector.extract_strided_slice %36 {offsets = [0, 0, 0], sizes = [14, 16, 112], strides = [1, 1, 1]} : vector<14x16x256xf32> to vector<14x16x112xf32>
    %38 = vector.extract_strided_slice %36 {offsets = [0, 0, 128], sizes = [14, 16, 112], strides = [1, 1, 1]} : vector<14x16x256xf32> to vector<14x16x112xf32>
    %39 = arith.maximumf %37, %38 : vector<14x16x112xf32>
    %40 = arith.truncf %39 : vector<14x16x112xf32> to vector<14x16x112xbf16>
    %41 = vector.shape_cast %40 : vector<14x16x112xbf16> to vector<224x112xbf16>
    %42 = vector.extract_strided_slice %41 {offsets = [0, 0], sizes = [160, 112], strides = [1, 1]} : vector<224x112xbf16> to vector<160x112xbf16>
    %c0_20 = arith.constant 0 : index
    %c0_21 = arith.constant 0 : index
    %c0_22 = arith.constant 0 : index
    %43 = vector.load %arg4[%c0_20, %c0_21, %c0_22] : memref<5x112x256xbf16, #tpu.memory_space<vmem>>, vector<1x112x256xbf16>
    %44 = vector.shape_cast %43 : vector<1x112x256xbf16> to vector<112x256xbf16>
    %cst_23 = arith.constant dense<0.000000e+00> : vector<160x256xf32>
    %45 = tpu.matmul %42, %44, %cst_23 {dimension_numbers = #tpu.dot_dimension_numbers<[1], [0], [0], [1], [0, 0, 1, 1], [], []>} : vector<160x112xbf16>, vector<112x256xbf16>, vector<160x256xf32> -> vector<160x256xf32>
    %46 = vector.extract_strided_slice %41 {offsets = [16, 0], sizes = [160, 112], strides = [1, 1]} : vector<224x112xbf16> to vector<160x112xbf16>
    %c1_24 = arith.constant 1 : index
    %c0_25 = arith.constant 0 : index
    %c0_26 = arith.constant 0 : index
    %47 = vector.load %arg4[%c1_24, %c0_25, %c0_26] : memref<5x112x256xbf16, #tpu.memory_space<vmem>>, vector<1x112x256xbf16>
    %48 = vector.shape_cast %47 : vector<1x112x256xbf16> to vector<112x256xbf16>
    %cst_27 = arith.constant dense<0.000000e+00> : vector<160x256xf32>
    %49 = tpu.matmul %46, %48, %cst_27 {dimension_numbers = #tpu.dot_dimension_numbers<[1], [0], [0], [1], [0, 0, 1, 1], [], []>} : vector<160x112xbf16>, vector<112x256xbf16>, vector<160x256xf32> -> vector<160x256xf32>
    %50 = arith.addf %45, %49 : vector<160x256xf32>
    %51 = vector.extract_strided_slice %41 {offsets = [32, 0], sizes = [160, 112], strides = [1, 1]} : vector<224x112xbf16> to vector<160x112xbf16>
    %c2_28 = arith.constant 2 : index
    %c0_29 = arith.constant 0 : index
    %c0_30 = arith.constant 0 : index
    %52 = vector.load %arg4[%c2_28, %c0_29, %c0_30] : memref<5x112x256xbf16, #tpu.memory_space<vmem>>, vector<1x112x256xbf16>
    %53 = vector.shape_cast %52 : vector<1x112x256xbf16> to vector<112x256xbf16>
    %cst_31 = arith.constant dense<0.000000e+00> : vector<160x256xf32>
    %54 = tpu.matmul %51, %53, %cst_31 {dimension_numbers = #tpu.dot_dimension_numbers<[1], [0], [0], [1], [0, 0, 1, 1], [], []>} : vector<160x112xbf16>, vector<112x256xbf16>, vector<160x256xf32> -> vector<160x256xf32>
    %55 = arith.addf %50, %54 : vector<160x256xf32>
    %56 = vector.extract_strided_slice %41 {offsets = [48, 0], sizes = [160, 112], strides = [1, 1]} : vector<224x112xbf16> to vector<160x112xbf16>
    %c3_32 = arith.constant 3 : index
    %c0_33 = arith.constant 0 : index
    %c0_34 = arith.constant 0 : index
    %57 = vector.load %arg4[%c3_32, %c0_33, %c0_34] : memref<5x112x256xbf16, #tpu.memory_space<vmem>>, vector<1x112x256xbf16>
    %58 = vector.shape_cast %57 : vector<1x112x256xbf16> to vector<112x256xbf16>
    %cst_35 = arith.constant dense<0.000000e+00> : vector<160x256xf32>
    %59 = tpu.matmul %56, %58, %cst_35 {dimension_numbers = #tpu.dot_dimension_numbers<[1], [0], [0], [1], [0, 0, 1, 1], [], []>} : vector<160x112xbf16>, vector<112x256xbf16>, vector<160x256xf32> -> vector<160x256xf32>
    %60 = arith.addf %55, %59 : vector<160x256xf32>
    %61 = vector.extract_strided_slice %41 {offsets = [64, 0], sizes = [160, 112], strides = [1, 1]} : vector<224x112xbf16> to vector<160x112xbf16>
    %c4_36 = arith.constant 4 : index
    %c0_37 = arith.constant 0 : index
    %c0_38 = arith.constant 0 : index
    %62 = vector.load %arg4[%c4_36, %c0_37, %c0_38] : memref<5x112x256xbf16, #tpu.memory_space<vmem>>, vector<1x112x256xbf16>
    %63 = vector.shape_cast %62 : vector<1x112x256xbf16> to vector<112x256xbf16>
    %cst_39 = arith.constant dense<0.000000e+00> : vector<160x256xf32>
    %64 = tpu.matmul %61, %63, %cst_39 {dimension_numbers = #tpu.dot_dimension_numbers<[1], [0], [0], [1], [0, 0, 1, 1], [], []>} : vector<160x112xbf16>, vector<112x256xbf16>, vector<160x256xf32> -> vector<160x256xf32>
    %65 = arith.addf %60, %64 : vector<160x256xf32>
    %c0_40 = arith.constant 0 : index
    %c0_41 = arith.constant 0 : index
    %66 = vector.load %arg5[%c0_40, %c0_41] : memref<1x256xf32, #tpu.memory_space<vmem>>, vector<1x256xf32>
    %67 = vector.broadcast %66 : vector<1x256xf32> to vector<160x256xf32>
    %68 = arith.addf %65, %67 : vector<160x256xf32>
    %cst_42 = arith.constant 0.000000e+00 : f32
    %69 = vector.broadcast %cst_42 : f32 to vector<160x256xf32>
    %70 = arith.maximumf %68, %69 : vector<160x256xf32>
    %71 = vector.shape_cast %70 : vector<160x256xf32> to vector<5x2x16x256xf32>
    %72 = vector.extract_strided_slice %71 {offsets = [0, 0, 0, 0], sizes = [5, 1, 16, 256], strides = [1, 1, 1, 1]} : vector<5x2x16x256xf32> to vector<5x1x16x256xf32>
    %73 = vector.shape_cast %72 : vector<5x1x16x256xf32> to vector<5x16x256xf32>
    %74 = vector.extract_strided_slice %71 {offsets = [0, 1, 0, 0], sizes = [5, 1, 16, 256], strides = [1, 1, 1, 1]} : vector<5x2x16x256xf32> to vector<5x1x16x256xf32>
    %75 = vector.shape_cast %74 : vector<5x1x16x256xf32> to vector<5x16x256xf32>
    %76 = arith.maximumf %73, %75 : vector<5x16x256xf32>
    %77 = vector.extract_strided_slice %76 {offsets = [0, 0, 0], sizes = [5, 16, 80], strides = [1, 1, 1]} : vector<5x16x256xf32> to vector<5x16x80xf32>
    %78 = vector.extract_strided_slice %76 {offsets = [0, 0, 128], sizes = [5, 16, 80], strides = [1, 1, 1]} : vector<5x16x256xf32> to vector<5x16x80xf32>
    %79 = arith.maximumf %77, %78 : vector<5x16x80xf32>
    %80 = arith.truncf %79 : vector<5x16x80xf32> to vector<5x16x80xbf16>
    %81 = vector.extract_strided_slice %80 {offsets = [0, 0, 0], sizes = [1, 16, 80], strides = [1, 1, 1]} : vector<5x16x80xbf16> to vector<1x16x80xbf16>
    %82 = vector.shape_cast %81 : vector<1x16x80xbf16> to vector<16x80xbf16>
    %c0_43 = arith.constant 0 : index
    %c0_44 = arith.constant 0 : index
    %c0_45 = arith.constant 0 : index
    %83 = vector.load %arg6[%c0_43, %c0_44, %c0_45] : memref<5x80x128xbf16, #tpu.memory_space<vmem>>, vector<1x80x128xbf16>
    %84 = vector.shape_cast %83 : vector<1x80x128xbf16> to vector<80x128xbf16>
    %cst_46 = arith.constant dense<0.000000e+00> : vector<16x128xf32>
    %85 = tpu.matmul %82, %84, %cst_46 {dimension_numbers = #tpu.dot_dimension_numbers<[1], [0], [0], [1], [0, 0, 1, 1], [], []>} : vector<16x80xbf16>, vector<80x128xbf16>, vector<16x128xf32> -> vector<16x128xf32>
    %86 = vector.extract_strided_slice %80 {offsets = [1, 0, 0], sizes = [1, 16, 80], strides = [1, 1, 1]} : vector<5x16x80xbf16> to vector<1x16x80xbf16>
    %87 = vector.shape_cast %86 : vector<1x16x80xbf16> to vector<16x80xbf16>
    %c1_47 = arith.constant 1 : index
    %c0_48 = arith.constant 0 : index
    %c0_49 = arith.constant 0 : index
    %88 = vector.load %arg6[%c1_47, %c0_48, %c0_49] : memref<5x80x128xbf16, #tpu.memory_space<vmem>>, vector<1x80x128xbf16>
    %89 = vector.shape_cast %88 : vector<1x80x128xbf16> to vector<80x128xbf16>
    %cst_50 = arith.constant dense<0.000000e+00> : vector<16x128xf32>
    %90 = tpu.matmul %87, %89, %cst_50 {dimension_numbers = #tpu.dot_dimension_numbers<[1], [0], [0], [1], [0, 0, 1, 1], [], []>} : vector<16x80xbf16>, vector<80x128xbf16>, vector<16x128xf32> -> vector<16x128xf32>
    %91 = arith.addf %85, %90 : vector<16x128xf32>
    %92 = vector.extract_strided_slice %80 {offsets = [2, 0, 0], sizes = [1, 16, 80], strides = [1, 1, 1]} : vector<5x16x80xbf16> to vector<1x16x80xbf16>
    %93 = vector.shape_cast %92 : vector<1x16x80xbf16> to vector<16x80xbf16>
    %c2_51 = arith.constant 2 : index
    %c0_52 = arith.constant 0 : index
    %c0_53 = arith.constant 0 : index
    %94 = vector.load %arg6[%c2_51, %c0_52, %c0_53] : memref<5x80x128xbf16, #tpu.memory_space<vmem>>, vector<1x80x128xbf16>
    %95 = vector.shape_cast %94 : vector<1x80x128xbf16> to vector<80x128xbf16>
    %cst_54 = arith.constant dense<0.000000e+00> : vector<16x128xf32>
    %96 = tpu.matmul %93, %95, %cst_54 {dimension_numbers = #tpu.dot_dimension_numbers<[1], [0], [0], [1], [0, 0, 1, 1], [], []>} : vector<16x80xbf16>, vector<80x128xbf16>, vector<16x128xf32> -> vector<16x128xf32>
    %97 = arith.addf %91, %96 : vector<16x128xf32>
    %98 = vector.extract_strided_slice %80 {offsets = [3, 0, 0], sizes = [1, 16, 80], strides = [1, 1, 1]} : vector<5x16x80xbf16> to vector<1x16x80xbf16>
    %99 = vector.shape_cast %98 : vector<1x16x80xbf16> to vector<16x80xbf16>
    %c3_55 = arith.constant 3 : index
    %c0_56 = arith.constant 0 : index
    %c0_57 = arith.constant 0 : index
    %100 = vector.load %arg6[%c3_55, %c0_56, %c0_57] : memref<5x80x128xbf16, #tpu.memory_space<vmem>>, vector<1x80x128xbf16>
    %101 = vector.shape_cast %100 : vector<1x80x128xbf16> to vector<80x128xbf16>
    %cst_58 = arith.constant dense<0.000000e+00> : vector<16x128xf32>
    %102 = tpu.matmul %99, %101, %cst_58 {dimension_numbers = #tpu.dot_dimension_numbers<[1], [0], [0], [1], [0, 0, 1, 1], [], []>} : vector<16x80xbf16>, vector<80x128xbf16>, vector<16x128xf32> -> vector<16x128xf32>
    %103 = arith.addf %97, %102 : vector<16x128xf32>
    %104 = vector.extract_strided_slice %80 {offsets = [4, 0, 0], sizes = [1, 16, 80], strides = [1, 1, 1]} : vector<5x16x80xbf16> to vector<1x16x80xbf16>
    %105 = vector.shape_cast %104 : vector<1x16x80xbf16> to vector<16x80xbf16>
    %c4_59 = arith.constant 4 : index
    %c0_60 = arith.constant 0 : index
    %c0_61 = arith.constant 0 : index
    %106 = vector.load %arg6[%c4_59, %c0_60, %c0_61] : memref<5x80x128xbf16, #tpu.memory_space<vmem>>, vector<1x80x128xbf16>
    %107 = vector.shape_cast %106 : vector<1x80x128xbf16> to vector<80x128xbf16>
    %cst_62 = arith.constant dense<0.000000e+00> : vector<16x128xf32>
    %108 = tpu.matmul %105, %107, %cst_62 {dimension_numbers = #tpu.dot_dimension_numbers<[1], [0], [0], [1], [0, 0, 1, 1], [], []>} : vector<16x80xbf16>, vector<80x128xbf16>, vector<16x128xf32> -> vector<16x128xf32>
    %109 = arith.addf %103, %108 : vector<16x128xf32>
    %c0_63 = arith.constant 0 : index
    %c0_64 = arith.constant 0 : index
    %110 = vector.load %arg7[%c0_63, %c0_64] : memref<1x128xf32, #tpu.memory_space<vmem>>, vector<1x128xf32>
    %111 = vector.broadcast %110 : vector<1x128xf32> to vector<16x128xf32>
    %112 = arith.addf %109, %111 : vector<16x128xf32>
    %cst_65 = arith.constant 0.000000e+00 : f32
    %113 = vector.broadcast %cst_65 : f32 to vector<16x128xf32>
    %114 = arith.maximumf %112, %113 : vector<16x128xf32>
    %115 = arith.truncf %114 : vector<16x128xf32> to vector<16x128xbf16>
    %c0_66 = arith.constant 0 : index
    %c0_67 = arith.constant 0 : index
    %116 = vector.load %arg8[%c0_66, %c0_67] : memref<128x128xbf16, #tpu.memory_space<vmem>>, vector<128x128xbf16>
    %cst_68 = arith.constant dense<0.000000e+00> : vector<16x128xf32>
    %117 = tpu.matmul %115, %116, %cst_68 {dimension_numbers = #tpu.dot_dimension_numbers<[1], [0], [0], [1], [0, 0, 1, 1], [], []>} : vector<16x128xbf16>, vector<128x128xbf16>, vector<16x128xf32> -> vector<16x128xf32>
    %c0_69 = arith.constant 0 : index
    %c0_70 = arith.constant 0 : index
    %118 = vector.load %arg9[%c0_69, %c0_70] : memref<1x128xf32, #tpu.memory_space<vmem>>, vector<1x128xf32>
    %119 = vector.broadcast %118 : vector<1x128xf32> to vector<16x128xf32>
    %120 = arith.addf %117, %119 : vector<16x128xf32>
    %cst_71 = arith.constant 0.000000e+00 : f32
    %121 = vector.broadcast %cst_71 : f32 to vector<16x128xf32>
    %122 = arith.maximumf %120, %121 : vector<16x128xf32>
    %123 = arith.truncf %122 : vector<16x128xf32> to vector<16x128xbf16>
    %c0_72 = arith.constant 0 : index
    %c0_73 = arith.constant 0 : index
    %124 = vector.load %arg10[%c0_72, %c0_73] : memref<128x128xbf16, #tpu.memory_space<vmem>>, vector<128x128xbf16>
    %cst_74 = arith.constant dense<0.000000e+00> : vector<16x128xf32>
    %125 = tpu.matmul %123, %124, %cst_74 {dimension_numbers = #tpu.dot_dimension_numbers<[1], [0], [0], [1], [0, 0, 1, 1], [], []>} : vector<16x128xbf16>, vector<128x128xbf16>, vector<16x128xf32> -> vector<16x128xf32>
    %c0_75 = arith.constant 0 : index
    %c0_76 = arith.constant 0 : index
    %126 = vector.load %arg11[%c0_75, %c0_76] : memref<1x128xf32, #tpu.memory_space<vmem>>, vector<1x128xf32>
    %127 = vector.broadcast %126 : vector<1x128xf32> to vector<16x128xf32>
    %128 = arith.addf %125, %127 : vector<16x128xf32>
    %c0_77 = arith.constant 0 : index
    %c0_78 = arith.constant 0 : index
    %129 = vector.load %arg12[%c0_77, %c0_78] : memref<16x128xf32, #tpu.memory_space<vmem>>, vector<16x128xf32>
    tpu.vector_store %arg12[%c0_77, %c0_78], %128 {strides = array<i32>} : memref<16x128xf32, #tpu.memory_space<vmem>>, vector<16x128xf32>,
    return
  }
  func.func @transform_0(%arg0: i32) -> (i32, i32, i32) {
    %c0_i32 = arith.constant 0 : i32
    %c0_i32_0 = arith.constant 0 : i32
    %c0_i32_1 = arith.constant 0 : i32
    return %c0_i32, %arg0, %c0_i32_0 : i32, i32, i32
  }
  func.func @transform_1(%arg0: i32) -> (i32, i32, i32) {
    %c0_i32 = arith.constant 0 : i32
    %c0_i32_0 = arith.constant 0 : i32
    %c0_i32_1 = arith.constant 0 : i32
    %c0_i32_2 = arith.constant 0 : i32
    return %c0_i32, %c0_i32_0, %c0_i32_1 : i32, i32, i32
  }
  func.func @transform_2(%arg0: i32) -> (i32, i32) {
    %c0_i32 = arith.constant 0 : i32
    %c0_i32_0 = arith.constant 0 : i32
    %c0_i32_1 = arith.constant 0 : i32
    return %c0_i32, %c0_i32_0 : i32, i32
  }
  func.func @transform_3(%arg0: i32) -> (i32, i32, i32) {
    %c0_i32 = arith.constant 0 : i32
    %c0_i32_0 = arith.constant 0 : i32
    %c0_i32_1 = arith.constant 0 : i32
    %c0_i32_2 = arith.constant 0 : i32
    return %c0_i32, %c0_i32_0, %c0_i32_1 : i32, i32, i32
  }
  func.func @transform_4(%arg0: i32) -> (i32, i32) {
    %c0_i32 = arith.constant 0 : i32
    %c0_i32_0 = arith.constant 0 : i32
    %c0_i32_1 = arith.constant 0 : i32
    return %c0_i32, %c0_i32_0 : i32, i32
  }
  func.func @transform_5(%arg0: i32) -> (i32, i32, i32) {
    %c0_i32 = arith.constant 0 : i32
    %c0_i32_0 = arith.constant 0 : i32
    %c0_i32_1 = arith.constant 0 : i32
    %c0_i32_2 = arith.constant 0 : i32
    return %c0_i32, %c0_i32_0, %c0_i32_1 : i32, i32, i32
  }
  func.func @transform_6(%arg0: i32) -> (i32, i32) {
    %c0_i32 = arith.constant 0 : i32
    %c0_i32_0 = arith.constant 0 : i32
    %c0_i32_1 = arith.constant 0 : i32
    return %c0_i32, %c0_i32_0 : i32, i32
  }
  func.func @transform_7(%arg0: i32) -> (i32, i32) {
    %c0_i32 = arith.constant 0 : i32
    %c0_i32_0 = arith.constant 0 : i32
    %c0_i32_1 = arith.constant 0 : i32
    return %c0_i32, %c0_i32_0 : i32, i32
  }
  func.func @transform_8(%arg0: i32) -> (i32, i32) {
    %c0_i32 = arith.constant 0 : i32
    %c0_i32_0 = arith.constant 0 : i32
    %c0_i32_1 = arith.constant 0 : i32
    return %c0_i32, %c0_i32_0 : i32, i32
  }
  func.func @transform_9(%arg0: i32) -> (i32, i32) {
    %c0_i32 = arith.constant 0 : i32
    %c0_i32_0 = arith.constant 0 : i32
    %c0_i32_1 = arith.constant 0 : i32
    return %c0_i32, %c0_i32_0 : i32, i32
  }
  func.func @transform_10(%arg0: i32) -> (i32, i32) {
    %c0_i32 = arith.constant 0 : i32
    %c0_i32_0 = arith.constant 0 : i32
    %c0_i32_1 = arith.constant 0 : i32
    return %c0_i32, %c0_i32_0 : i32, i32
  }
  func.func @transform_11(%arg0: i32) -> (i32, i32) {
    %c0_i32 = arith.constant 0 : i32
    %c0_i32_0 = arith.constant 0 : i32
    return %arg0, %c0_i32 : i32, i32
  }
}

</mosaic_0001>

<llo_original>
// kernel: cnn_forward.1
$region0: #{cnn_forward.1}
  #allocation0 [shape = 'u32[]', space=smem, size = 0x4, offset = 0x4, fixed_abs, tag = 'smem constant byte address 0x4 - core index']
  #allocation1 [shape = 'u32[144,128]{1,0:T(1,128)}', space=vmem, size = 0x12000, scoped, tag = 'internal scratch']
  %s0 = inlined_call_operand.vmem [shape: bf16[32,32,96], index: 0, kind: input, shape index: {}]
  %s1 = inlined_call_operand.vmem [shape: bf16[5,96,256], index: 1, kind: input, shape index: {}]
  %s2 = inlined_call_operand.vmem [shape: f32[1,256], index: 2, kind: input, shape index: {}]
  %s3 = inlined_call_operand.vmem [shape: bf16[5,112,256], index: 3, kind: input, shape index: {}]
  %s4 = inlined_call_operand.hbm [shape: f32[1,256], index: 4, kind: input, shape index: {}]
  %s5 = inlined_call_operand.hbm [shape: bf16[5,80,128], index: 5, kind: input, shape index: {}]
  %s6 = inlined_call_operand.vmem [shape: f32[1,128], index: 6, kind: input, shape index: {}]
  %s7 = inlined_call_operand.vmem [shape: bf16[128,128], index: 7, kind: input, shape index: {}]
  %s8 = inlined_call_operand.hbm [shape: f32[1,128], index: 8, kind: input, shape index: {}]
  %s9 = inlined_call_operand.vmem [shape: bf16[128,128], index: 9, kind: input, shape index: {}]
  %s10 = inlined_call_operand.hbm [shape: f32[1,128], index: 10, kind: input, shape index: {}]
  %s11 = inlined_call_operand.vmem [shape: f32[32,128], index: 11, kind: output, shape index: {}]
  %s12 = sld [smem:[#allocation0]]
  $region134: #{cnn_forward.1} parent=0
    _
  %s14 = ssub.s32 1, %s12
  %s15 = scalar_select 0, %s14, %s12
  $region1: #{cnn_forward.1} parent=0
    #allocation2 [shape = 'u8[262144]{0}', space=vmem, size = 0x40000, scoped, tag = 'input window, operand 0']
    #allocation3 [shape = 'u8[1024]{0}', space=vmem, size = 0x400, scoped, tag = 'input window, operand 4, single buffered']
    #allocation4 [shape = 's32[2]{0}', space=sflag, size = 0x8, scoped, tag = 'scoped memory for cnn_forward.1']
    #allocation5 [shape = 'u8[102400]{0}', space=vmem, size = 0x19000, scoped, tag = 'input window, operand 5, single buffered']
    #allocation6 [shape = 's32[1]{0}', space=sflag, size = 0x4, scoped, tag = 'scoped memory for cnn_forward.1']
    #allocation7 [shape = 'u8[512]{0}', space=vmem, size = 0x400, scoped, tag = 'input window, operand 8, single buffered']
    #allocation8 [shape = 'u8[512]{0}', space=vmem, size = 0x400, scoped, tag = 'input window, operand 10, single buffered']
    #allocation9 [shape = 's32[1]{0}', space=sflag, size = 0x4, scoped, tag = 'scoped memory for cnn_forward.1']
    %16 = vsyncpa [#allocation4], 0
    %17 = vsyncpa [#allocation6], 0
    %18 = vsyncpa [#allocation9], 0
    loop: start=0, step=1, limit=4
    $region2: #{cnn_forward.1} parent=1 // loop_pre_header
      _
    $region3: #{cnn_forward.1} parent=1 // loop_header
      %s20 = sphi 0, %s24
      %p21 = scmp.ge.s32.totalorder %s20, 4
      %s30 = sphi 0, %s32
      %s33 = sphi 0, %s30
      %s34 = sphi 0, %s33
      %s50 = sphi 0, %s34
      %s54 = sphi 0, %s54
      %s56 = sphi 0, %s54
      %s57 = sphi 0, %s56
      %s71 = sphi 0, %s57
      %s75 = sphi 0, %s75
      %s77 = sphi 0, %s75
      %s78 = sphi 0, %s77
      %s92 = sphi 0, %s78
      %s96 = sphi 0, %s96
      %s98 = sphi 0, %s96
      %s99 = sphi 0, %s98
      %s113 = sphi 0, %s99
      %s117 = sphi 0, %s117
      %s119 = sphi 0, %s117
      %s120 = sphi 0, %s119
      %s134 = sphi 0, %s120
      %s138 = sphi 0, %s138
      %s140 = sphi 0, %s138
      %s141 = sphi 0, %s140
      %s155 = sphi 0, %s141
      %s159 = sphi 0, %s159
      %s161 = sphi 0, %s159
      %s162 = sphi 0, %s161
      %s176 = sphi 0, %s162
      %s180 = sphi 0, %s180
      %s182 = sphi 0, %s180
      %s183 = sphi 0, %s182
      %s197 = sphi 0, %s183
      %s201 = sphi 0, %s201
      %s203 = sphi 0, %s201
      %s204 = sphi 0, %s203
      %s218 = sphi 0, %s204
      %s222 = sphi 0, %s222
      %s224 = sphi 0, %s222
      %s225 = sphi 0, %s224
      %s239 = sphi 0, %s225
      %s243 = sphi 0, %s243
      %s245 = sphi 0, %s243
      %s246 = sphi 0, %s245
      %s260 = sphi 0, %s246
      %s266 = sphi 0, %s268
      %s269 = sphi 0, %s266
      %s270 = sphi 0, %s269
      %s286 = sphi 0, %s270
    $region4: #{cnn_forward.1} parent=1 // loop_header_branch
      %23 = sbr.rel (%p21) target = $region8
    $region5: #{cnn_forward.1} parent=1 // loop_body
      %s25 = ssub.s32 %s20, 1
      %s26 = ssub.s32 %s20, 2
      %s27 = sadd.s32 %s20, 1
      %s28 = ssub.s32 %s20, %s27
      %p29 = scmp.eq.s32.totalorder %s28, 0
      %s31 = sadd.s32 %s30, 1
      %s32 = scalar_select %p29, %s30, %s31
      %p35 = pneg %p29
      %p36 = scmp.eq.s32.totalorder %s20, 1
      %p37 = por %p35, %p36
      %p38 = scmp.ne.s32.totalorder %s30, %s33
      %p39 = scmp.eq.s32.totalorder %s20, 0
      %p40 = por %p38, %p39
      %p41 = scmp.ne.s32.totalorder %s30, %s33
      %p42 = scmp.eq.s32.totalorder %s25, 1
      %p43 = por %p41, %p42
      %p44 = scmp.ne.s32.totalorder %s33, %s34
      %p45 = scmp.eq.s32.totalorder %s25, 0
      %p46 = por %p44, %p45
      %p47 = scmp.ne.s32.totalorder %s33, %s34
      %p48 = scmp.eq.s32.totalorder %s26, 1
      %p49 = por %p47, %p48
      %p51 = scmp.ne.s32.totalorder %s34, %s50
      %p52 = scmp.eq.s32.totalorder %s26, 0
      %p53 = por %p51, %p52
      %s55 = sadd.s32 %s54, 1
      %p58 = scmp.eq.s32.totalorder %s20, 1
      %p59 = scmp.ne.s32.totalorder %s54, %s56
      %p60 = scmp.eq.s32.totalorder %s20, 0
      %p61 = por %p59, %p60
      %p62 = scmp.ne.s32.totalorder %s54, %s56
      %p63 = scmp.eq.s32.totalorder %s25, 1
      %p64 = por %p62, %p63
      %p65 = scmp.ne.s32.totalorder %s56, %s57
      %p66 = scmp.eq.s32.totalorder %s25, 0
      %p67 = por %p65, %p66
      %p68 = scmp.ne.s32.totalorder %s56, %s57
      %p69 = scmp.eq.s32.totalorder %s26, 1
      %p70 = por %p68, %p69
      %p72 = scmp.ne.s32.totalorder %s57, %s71
      %p73 = scmp.eq.s32.totalorder %s26, 0
      %p74 = por %p72, %p73
      %s76 = sadd.s32 %s75, 1
      %p79 = scmp.eq.s32.totalorder %s20, 1
      %p80 = scmp.ne.s32.totalorder %s75, %s77
      %p81 = scmp.eq.s32.totalorder %s20, 0
      %p82 = por %p80, %p81
      %p83 = scmp.ne.s32.totalorder %s75, %s77
      %p84 = scmp.eq.s32.totalorder %s25, 1
      %p85 = por %p83, %p84
      %p86 = scmp.ne.s32.totalorder %s77, %s78
      %p87 = scmp.eq.s32.totalorder %s25, 0
      %p88 = por %p86, %p87
      %p89 = scmp.ne.s32.totalorder %s77, %s78
      %p90 = scmp.eq.s32.totalorder %s26, 1
      %p91 = por %p89, %p90
      %p93 = scmp.ne.s32.totalorder %s78, %s92
      %p94 = scmp.eq.s32.totalorder %s26, 0
      %p95 = por %p93, %p94
      %s97 = sadd.s32 %s96, 1
      %p100 = scmp.eq.s32.totalorder %s20, 1
      %p101 = scmp.ne.s32.totalorder %s96, %s98
      %p102 = scmp.eq.s32.totalorder %s20, 0
      %p103 = por %p101, %p102
      %p104 = scmp.ne.s32.totalorder %s96, %s98
      %p105 = scmp.eq.s32.totalorder %s25, 1
      %p106 = por %p104, %p105
      %p107 = scmp.ne.s32.totalorder %s98, %s99
      %p108 = scmp.eq.s32.totalorder %s25, 0
      %p109 = por %p107, %p108
      %p110 = scmp.ne.s32.totalorder %s98, %s99
      %p111 = scmp.eq.s32.totalorder %s26, 1
      %p112 = por %p110, %p111
      %p114 = scmp.ne.s32.totalorder %s99, %s113
      %p115 = scmp.eq.s32.totalorder %s26, 0
      %p116 = por %p114, %p115
      %s118 = sadd.s32 %s117, 1
      %p121 = scmp.eq.s32.totalorder %s20, 1
      %p122 = scmp.ne.s32.totalorder %s117, %s119
      %p123 = scmp.eq.s32.totalorder %s20, 0
      %p124 = por %p122, %p123
      %p125 = scmp.ne.s32.totalorder %s117, %s119
      %p126 = scmp.eq.s32.totalorder %s25, 1
      %p127 = por %p125, %p126
      %p128 = scmp.ne.s32.totalorder %s119, %s120
      %p129 = scmp.eq.s32.totalorder %s25, 0
      %p130 = por %p128, %p129
      %p131 = scmp.ne.s32.totalorder %s119, %s120
      %p132 = scmp.eq.s32.totalorder %s26, 1
      %p133 = por %p131, %p132
      %p135 = scmp.ne.s32.totalorder %s120, %s134
      %p136 = scmp.eq.s32.totalorder %s26, 0
      %p137 = por %p135, %p136
      %s139 = sadd.s32 %s138, 1
      %p142 = scmp.eq.s32.totalorder %s20, 1
      %p143 = scmp.ne.s32.totalorder %s138, %s140
      %p144 = scmp.eq.s32.totalorder %s20, 0
      %p145 = por %p143, %p144
      %p146 = scmp.ne.s32.totalorder %s138, %s140
      %p147 = scmp.eq.s32.totalorder %s25, 1
      %p148 = por %p146, %p147
      %p149 = scmp.ne.s32.totalorder %s140, %s141
      %p150 = scmp.eq.s32.totalorder %s25, 0
      %p151 = por %p149, %p150
      %p152 = scmp.ne.s32.totalorder %s140, %s141
      %p153 = scmp.eq.s32.totalorder %s26, 1
      %p154 = por %p152, %p153
      %p156 = scmp.ne.s32.totalorder %s141, %s155
      %p157 = scmp.eq.s32.totalorder %s26, 0
      %p158 = por %p156, %p157
      %s160 = sadd.s32 %s159, 1
      %p163 = scmp.eq.s32.totalorder %s20, 1
      %p164 = scmp.ne.s32.totalorder %s159, %s161
      %p165 = scmp.eq.s32.totalorder %s20, 0
      %p166 = por %p164, %p165
      %p167 = scmp.ne.s32.totalorder %s159, %s161
      %p168 = scmp.eq.s32.totalorder %s25, 1
      %p169 = por %p167, %p168
      %p170 = scmp.ne.s32.totalorder %s161, %s162
      %p171 = scmp.eq.s32.totalorder %s25, 0
      %p172 = por %p170, %p171
      %p173 = scmp.ne.s32.totalorder %s161, %s162
      %p174 = scmp.eq.s32.totalorder %s26, 1
      %p175 = por %p173, %p174
      %p177 = scmp.ne.s32.totalorder %s162, %s176
      %p178 = scmp.eq.s32.totalorder %s26, 0
      %p179 = por %p177, %p178
      %s181 = sadd.s32 %s180, 1
      %p184 = scmp.eq.s32.totalorder %s20, 1
      %p185 = scmp.ne.s32.totalorder %s180, %s182
      %p186 = scmp.eq.s32.totalorder %s20, 0
      %p187 = por %p185, %p186
      %p188 = scmp.ne.s32.totalorder %s180, %s182
      %p189 = scmp.eq.s32.totalorder %s25, 1
      %p190 = por %p188, %p189
      %p191 = scmp.ne.s32.totalorder %s182, %s183
      %p192 = scmp.eq.s32.totalorder %s25, 0
      %p193 = por %p191, %p192
      %p194 = scmp.ne.s32.totalorder %s182, %s183
      %p195 = scmp.eq.s32.totalorder %s26, 1
      %p196 = por %p194, %p195
      %p198 = scmp.ne.s32.totalorder %s183, %s197
      %p199 = scmp.eq.s32.totalorder %s26, 0
      %p200 = por %p198, %p199
      %s202 = sadd.s32 %s201, 1
      %p205 = scmp.eq.s32.totalorder %s20, 1
      %p206 = scmp.ne.s32.totalorder %s201, %s203
      %p207 = scmp.eq.s32.totalorder %s20, 0
      %p208 = por %p206, %p207
      %p209 = scmp.ne.s32.totalorder %s201, %s203
      %p210 = scmp.eq.s32.totalorder %s25, 1
      %p211 = por %p209, %p210
      %p212 = scmp.ne.s32.totalorder %s203, %s204
      %p213 = scmp.eq.s32.totalorder %s25, 0
      %p214 = por %p212, %p213
      %p215 = scmp.ne.s32.totalorder %s203, %s204
      %p216 = scmp.eq.s32.totalorder %s26, 1
      %p217 = por %p215, %p216
      %p219 = scmp.ne.s32.totalorder %s204, %s218
      %p220 = scmp.eq.s32.totalorder %s26, 0
      %p221 = por %p219, %p220
      %s223 = sadd.s32 %s222, 1
      %p226 = scmp.eq.s32.totalorder %s20, 1
      %p227 = scmp.ne.s32.totalorder %s222, %s224
      %p228 = scmp.eq.s32.totalorder %s20, 0
      %p229 = por %p227, %p228
      %p230 = scmp.ne.s32.totalorder %s222, %s224
      %p231 = scmp.eq.s32.totalorder %s25, 1
      %p232 = por %p230, %p231
      %p233 = scmp.ne.s32.totalorder %s224, %s225
      %p234 = scmp.eq.s32.totalorder %s25, 0
      %p235 = por %p233, %p234
      %p236 = scmp.ne.s32.totalorder %s224, %s225
      %p237 = scmp.eq.s32.totalorder %s26, 1
      %p238 = por %p236, %p237
      %p240 = scmp.ne.s32.totalorder %s225, %s239
      %p241 = scmp.eq.s32.totalorder %s26, 0
      %p242 = por %p240, %p241
      %s244 = sadd.s32 %s243, 1
      %p247 = scmp.eq.s32.totalorder %s20, 1
      %p248 = scmp.ne.s32.totalorder %s243, %s245
      %p249 = scmp.eq.s32.totalorder %s20, 0
      %p250 = por %p248, %p249
      %p251 = scmp.ne.s32.totalorder %s243, %s245
      %p252 = scmp.eq.s32.totalorder %s25, 1
      %p253 = por %p251, %p252
      %p254 = scmp.ne.s32.totalorder %s245, %s246
      %p255 = scmp.eq.s32.totalorder %s25, 0
      %p256 = por %p254, %p255
      %p257 = scmp.ne.s32.totalorder %s245, %s246
      %p258 = scmp.eq.s32.totalorder %s26, 1
      %p259 = por %p257, %p258
      %p261 = scmp.ne.s32.totalorder %s246, %s260
      %p262 = scmp.eq.s32.totalorder %s26, 0
      %p263 = por %p261, %p262
      %s264 = ssub.s32 %s20, %s27
      %p265 = scmp.eq.s32.totalorder %s264, 0
      %s267 = sadd.s32 %s266, 1
      %s268 = scalar_select %p265, %s266, %s267
      %p271 = pneg %p265
      %p272 = scmp.eq.s32.totalorder %s20, 1
      %p273 = por %p271, %p272
      %p274 = scmp.ne.s32.totalorder %s266, %s269
      %p275 = scmp.eq.s32.totalorder %s20, 0
      %p276 = por %p274, %p275
      %p277 = scmp.ne.s32.totalorder %s266, %s269
      %p278 = scmp.eq.s32.totalorder %s25, 1
      %p279 = por %p277, %p278
      %p280 = scmp.ne.s32.totalorder %s269, %s270
      %p281 = scmp.eq.s32.totalorder %s25, 0
      %p282 = por %p280, %p281
      %p283 = scmp.ne.s32.totalorder %s269, %s270
      %p284 = scmp.eq.s32.totalorder %s26, 1
      %p285 = por %p283, %p284
      %p287 = scmp.ne.s32.totalorder %s270, %s286
      %p288 = scmp.eq.s32.totalorder %s26, 0
      %p289 = por %p287, %p288
      %p290 = scmp.le.s32.totalorder 1, %s20
      %p291 = scmp.lt.s32.totalorder %s20, 3
      %p292 = pnand %p290, %p291
      %p293 = pneg %p292
      // Predicated region
      $region9: #{cnn_forward.1} parent=5 // pred_check
        _
      $region10: #{cnn_forward.1} parent=5 // pred_check_branch
        %295 = sbr.rel (%p292) target = $region12
      $region11: #{cnn_forward.1} parent=5 // pred_region
        %s296 = ssub.s32 %s20, 1
        // Predicated region
        $region13: #{cnn_forward.1} parent=11 // pred_check
          %p297 = pneg %p67
        $region14: #{cnn_forward.1} parent=11 // pred_check_branch
          %299 = sbr.rel (%p297) target = $region16
        $region15: #{cnn_forward.1} parent=11 // pred_region
          _
        $region16: #{cnn_forward.1} parent=11 // pred_fallthru
          _
        // Predicated region
        $region17: #{cnn_forward.1} parent=11 // pred_check
          %p300 = pneg %p88
        $region18: #{cnn_forward.1} parent=11 // pred_check_branch
          %302 = sbr.rel (%p300) target = $region20
        $region19: #{cnn_forward.1} parent=11 // pred_region
          _
        $region20: #{cnn_forward.1} parent=11 // pred_fallthru
          _
        // Predicated region
        $region21: #{cnn_forward.1} parent=11 // pred_check
          %p303 = pneg %p109
        $region22: #{cnn_forward.1} parent=11 // pred_check_branch
          %305 = sbr.rel (%p303) target = $region24
        $region23: #{cnn_forward.1} parent=11 // pred_region
          _
        $region24: #{cnn_forward.1} parent=11 // pred_fallthru
          _
        // Predicated region
        $region25: #{cnn_forward.1} parent=11 // pred_check
          %p306 = pneg %p130
        $region26: #{cnn_forward.1} parent=11 // pred_check_branch
          %308 = sbr.rel (%p306) target = $region28
        $region27: #{cnn_forward.1} parent=11 // pred_region
          %s310 = ssub.s32 32, 32
          %311 = vsyncadd [#allocation4], %s310
          %s313 = sshll.u32 [#allocation3], 4
          %s314 = int_to_ptr.vmem [resolvable:$true] %s313
          %316 = dma.hbm_to_vmem [thread:$0]  %s4, 32, %s314, [#allocation4]
        $region28: #{cnn_forward.1} parent=11 // pred_fallthru
          _
        // Predicated region
        $region29: #{cnn_forward.1} parent=11 // pred_check
          %p317 = pneg %p151
        $region30: #{cnn_forward.1} parent=11 // pred_check_branch
          %319 = sbr.rel (%p317) target = $region32
        $region31: #{cnn_forward.1} parent=11 // pred_region
          %s321 = ssub.s32 3200, 3200
          %322 = vsyncadd [#allocation6], %s321
          %s323 = sshll.u32 [#allocation5], 4
          %s324 = int_to_ptr.vmem [resolvable:$true] %s323
          %329 = dma.hbm_to_vmem [thread:$0]  %s5, 3200, %s324, [#allocation6], 64, 64, 4
        $region32: #{cnn_forward.1} parent=11 // pred_fallthru
          _
        // Predicated region
        $region33: #{cnn_forward.1} parent=11 // pred_check
          %p330 = pneg %p172
        $region34: #{cnn_forward.1} parent=11 // pred_check_branch
          %332 = sbr.rel (%p330) target = $region36
        $region35: #{cnn_forward.1} parent=11 // pred_region
          _
        $region36: #{cnn_forward.1} parent=11 // pred_fallthru
          _
        // Predicated region
        $region37: #{cnn_forward.1} parent=11 // pred_check
          %p333 = pneg %p193
        $region38: #{cnn_forward.1} parent=11 // pred_check_branch
          %335 = sbr.rel (%p333) target = $region40
        $region39: #{cnn_forward.1} parent=11 // pred_region
          _
        $region40: #{cnn_forward.1} parent=11 // pred_fallthru
          _
        // Predicated region
        $region41: #{cnn_forward.1} parent=11 // pred_check
          %p336 = pneg %p214
        $region42: #{cnn_forward.1} parent=11 // pred_check_branch
          %338 = sbr.rel (%p336) target = $region44
        $region43: #{cnn_forward.1} parent=11 // pred_region
          %s340 = ssub.s32 16, 16
          %341 = vsyncadd [#allocation6], %s340
          %s343 = sshll.u32 [#allocation7], 4
          %s344 = int_to_ptr.vmem [resolvable:$true] %s343
          %346 = dma.hbm_to_vmem [thread:$0]  %s8, 16, %s344, [#allocation6]
        $region44: #{cnn_forward.1} parent=11 // pred_fallthru
          _
        // Predicated region
        $region45: #{cnn_forward.1} parent=11 // pred_check
          %p347 = pneg %p235
        $region46: #{cnn_forward.1} parent=11 // pred_check_branch
          %349 = sbr.rel (%p347) target = $region48
        $region47: #{cnn_forward.1} parent=11 // pred_region
          _
        $region48: #{cnn_forward.1} parent=11 // pred_fallthru
          _
        // Predicated region
        $region49: #{cnn_forward.1} parent=11 // pred_check
          %p350 = pneg %p256
        $region50: #{cnn_forward.1} parent=11 // pred_check_branch
          %352 = sbr.rel (%p350) target = $region52
        $region51: #{cnn_forward.1} parent=11 // pred_region
          %s354 = ssub.s32 16, 16
          %355 = vsyncadd [#allocation9], %s354
          %s357 = sshll.u32 [#allocation8], 4
          %s358 = int_to_ptr.vmem [resolvable:$true] %s357
          %360 = dma.hbm_to_vmem [thread:$0]  %s10, 16, %s358, [#allocation9]
        $region52: #{cnn_forward.1} parent=11 // pred_fallthru
          _
      $region12: #{cnn_forward.1} parent=5 // pred_fallthru
        _
      %p361 = scmp.lt.s32.totalorder %s20, 2
      // Predicated region
      $region53: #{cnn_forward.1} parent=5 // pred_check
        %p362 = pneg %p361
      $region54: #{cnn_forward.1} parent=5 // pred_check_branch
        %364 = sbr.rel (%p362) target = $region56
      $region55: #{cnn_forward.1} parent=5 // pred_region
        // Predicated region
        $region57: #{cnn_forward.1} parent=55 // pred_check
          %p365 = pneg %p40
        $region58: #{cnn_forward.1} parent=55 // pred_check_branch
          %367 = sbr.rel (%p365) target = $region60
        $region59: #{cnn_forward.1} parent=55 // pred_region
          %s368 = sand.u32 %s30, 1
          %s369 = sand.u32 %s30, 1
          %s370 = smul.addr %s369, 256
          %s371 = scalar_lea.vmem [#allocation2], %s370
          %s372 = smul.u32 2, %s20
          %s373 = smul.addr %s372, 4
          %s374 = scalar_lea.vmem %s0, %s373
          // Predicated region
          $region61: #{cnn_forward.1} parent=59 // pred_check
            _
          $region62: #{cnn_forward.1} parent=59 // pred_check_branch
            %376 = sbr.rel (0) target = $region64
          $region63: #{cnn_forward.1} parent=59 // pred_region
            // Predicated region
            $region65: #{cnn_forward.1} parent=63 // pred_check
              _
            $region66: #{cnn_forward.1} parent=63 // pred_check_branch
              %378 = sbr.rel target = $region68
            $region67: #{cnn_forward.1} parent=63 // pred_region
              // Predicated region
              $region80: #{cnn_forward.1} parent=67 // pred_check
                _
              $region81: #{cnn_forward.1} parent=67 // pred_check_branch
                %519 = sbr.rel (0) target = $region83
              $region82: #{cnn_forward.1} parent=67 // pred_region
                loop: start=0, step=1, limit=1
                $region84: #{cnn_forward.1} parent=82 // loop_pre_header
                  _
                $region85: #{cnn_forward.1} parent=82 // loop_header
                  %s521 = sphi 0, %s525
                  %p522 = scmp.ge.s32.totalorder %s521, 1
                  %s526 = sphi %s374, %s374
                  %s527 = sphi %s371, %s371
                $region86: #{cnn_forward.1} parent=82 // loop_header_branch
                  %524 = sbr.rel (%p522) target = $region90
                $region87: #{cnn_forward.1} parent=82 // loop_body
                  _
                $region88: #{cnn_forward.1} parent=82 // loop_footer
                  %s525 = sadd.s32 1, %s521
                $region89: #{cnn_forward.1} parent=82 // loop_footer_branch
                  %520 = sbr.rel target = $region85
                $region90: #{cnn_forward.1} parent=82 // loop_exit
                  _
                loop: start=0, step=1, limit=1
                $region91: #{cnn_forward.1} parent=82 // loop_pre_header
                  _
                $region92: #{cnn_forward.1} parent=82 // loop_header
                  %s530 = sphi 0, %s534
                  %p531 = scmp.ge.s32.totalorder %s530, 1
                  %s535 = sphi %s374, %s374
                  %s536 = sphi %s371, %s371
                $region93: #{cnn_forward.1} parent=82 // loop_header_branch
                  %533 = sbr.rel (%p531) target = $region97
                $region94: #{cnn_forward.1} parent=82 // loop_body
                  %v537 = vld [vmem:[%s535] sm:$0xf]
                  %538 = vst [vmem:[%s536] sm:$0xf] %v537
                  %v539 = vld [vmem:[%s535 + $0x4] sm:$0xf]
                  %540 = vst [vmem:[%s536 + $0x4] sm:$0xf] %v539
                  %v541 = vld [vmem:[%s535 + $0x10] sm:$0xf]
                  %542 = vst [vmem:[%s536 + $0x8] sm:$0xf] %v541
                  %v543 = vld [vmem:[%s535 + $0x14] sm:$0xf]
                  %544 = vst [vmem:[%s536 + $0xc] sm:$0xf] %v543
                  %v545 = vld [vmem:[%s535 + $0x20] sm:$0xf]
                  %546 = vst [vmem:[%s536 + $0x10] sm:$0xf] %v545
                  %v547 = vld [vmem:[%s535 + $0x24] sm:$0xf]
                  %548 = vst [vmem:[%s536 + $0x14] sm:$0xf] %v547
                  %v549 = vld [vmem:[%s535 + $0x30] sm:$0xf]
                  %550 = vst [vmem:[%s536 + $0x18] sm:$0xf] %v549
                  %v551 = vld [vmem:[%s535 + $0x34] sm:$0xf]
                  %552 = vst [vmem:[%s536 + $0x1c] sm:$0xf] %v551
                  %v553 = vld [vmem:[%s535 + $0x40] sm:$0xf]
                  %554 = vst [vmem:[%s536 + $0x20] sm:$0xf] %v553
                  %v555 = vld [vmem:[%s535 + $0x44] sm:$0xf]
                  %556 = vst [vmem:[%s536 + $0x24] sm:$0xf] %v555
                  %v557 = vld [vmem:[%s535 + $0x50] sm:$0xf]
                  %558 = vst [vmem:[%s536 + $0x28] sm:$0xf] %v557
                  %v559 = vld [vmem:[%s535 + $0x54] sm:$0xf]
                  %560 = vst [vmem:[%s536 + $0x2c] sm:$0xf] %v559
                  %v561 = vld [vmem:[%s535 + $0x60] sm:$0xf]
                  %562 = vst [vmem:[%s536 + $0x30] sm:$0xf] %v561
                  %v563 = vld [vmem:[%s535 + $0x64] sm:$0xf]
                  %564 = vst [vmem:[%s536 + $0x34] sm:$0xf] %v563
                  %v565 = vld [vmem:[%s535 + $0x70] sm:$0xf]
                  %566 = vst [vmem:[%s536 + $0x38] sm:$0xf] %v565
                  %v567 = vld [vmem:[%s535 + $0x74] sm:$0xf]
                  %568 = vst [vmem:[%s536 + $0x3c] sm:$0xf] %v567
                  %v569 = vld [vmem:[%s535 + $0x80] sm:$0xf]
                  %570 = vst [vmem:[%s536 + $0x40] sm:$0xf] %v569
                  %v571 = vld [vmem:[%s535 + $0x84] sm:$0xf]
                  %572 = vst [vmem:[%s536 + $0x44] sm:$0xf] %v571
                  %v573 = vld [vmem:[%s535 + $0x90] sm:$0xf]
                  %574 = vst [vmem:[%s536 + $0x48] sm:$0xf] %v573
                  %v575 = vld [vmem:[%s535 + $0x94] sm:$0xf]
                  %576 = vst [vmem:[%s536 + $0x4c] sm:$0xf] %v575
                  %v577 = vld [vmem:[%s535 + $0xa0] sm:$0xf]
                  %578 = vst [vmem:[%s536 + $0x50] sm:$0xf] %v577
                  %v579 = vld [vmem:[%s535 + $0xa4] sm:$0xf]
                  %580 = vst [vmem:[%s536 + $0x54] sm:$0xf] %v579
                  %v581 = vld [vmem:[%s535 + $0xb0] sm:$0xf]
                  %582 = vst [vmem:[%s536 + $0x58] sm:$0xf] %v581
                  %v583 = vld [vmem:[%s535 + $0xb4] sm:$0xf]
                  %584 = vst [vmem:[%s536 + $0x5c] sm:$0xf] %v583
                  %v585 = vld [vmem:[%s535 + $0xc0] sm:$0xf]
                  %586 = vst [vmem:[%s536 + $0x60] sm:$0xf] %v585
                  %v587 = vld [vmem:[%s535 + $0xc4] sm:$0xf]
                  %588 = vst [vmem:[%s536 + $0x64] sm:$0xf] %v587
                  %v589 = vld [vmem:[%s535 + $0xd0] sm:$0xf]
                  %590 = vst [vmem:[%s536 + $0x68] sm:$0xf] %v589
                  %v591 = vld [vmem:[%s535 + $0xd4] sm:$0xf]
                  %592 = vst [vmem:[%s536 + $0x6c] sm:$0xf] %v591
                  %v593 = vld [vmem:[%s535 + $0xe0] sm:$0xf]
                  %594 = vst [vmem:[%s536 + $0x70] sm:$0xf] %v593
                  %v595 = vld [vmem:[%s535 + $0xe4] sm:$0xf]
                  %596 = vst [vmem:[%s536 + $0x74] sm:$0xf] %v595
                  %v597 = vld [vmem:[%s535 + $0xf0] sm:$0xf]
                  %598 = vst [vmem:[%s536 + $0x78] sm:$0xf] %v597
                  %v599 = vld [vmem:[%s535 + $0xf4] sm:$0xf]
                  %600 = vst [vmem:[%s536 + $0x7c] sm:$0xf] %v599
                  %v601 = vld [vmem:[%s535 + $0x100] sm:$0xf]
                  %602 = vst [vmem:[%s536 + $0x80] sm:$0xf] %v601
                  %v603 = vld [vmem:[%s535 + $0x104] sm:$0xf]
                  %604 = vst [vmem:[%s536 + $0x84] sm:$0xf] %v603
                  %v605 = vld [vmem:[%s535 + $0x110] sm:$0xf]
                  %606 = vst [vmem:[%s536 + $0x88] sm:$0xf] %v605
                  %v607 = vld [vmem:[%s535 + $0x114] sm:$0xf]
                  %608 = vst [vmem:[%s536 + $0x8c] sm:$0xf] %v607
                  %v609 = vld [vmem:[%s535 + $0x120] sm:$0xf]
                  %610 = vst [vmem:[%s536 + $0x90] sm:$0xf] %v609
                  %v611 = vld [vmem:[%s535 + $0x124] sm:$0xf]
                  %612 = vst [vmem:[%s536 + $0x94] sm:$0xf] %v611
                  %v613 = vld [vmem:[%s535 + $0x130] sm:$0xf]
                  %614 = vst [vmem:[%s536 + $0x98] sm:$0xf] %v613
                  %v615 = vld [vmem:[%s535 + $0x134] sm:$0xf]
                  %616 = vst [vmem:[%s536 + $0x9c] sm:$0xf] %v615
                  %v617 = vld [vmem:[%s535 + $0x140] sm:$0xf]
                  %618 = vst [vmem:[%s536 + $0xa0] sm:$0xf] %v617
                  %v619 = vld [vmem:[%s535 + $0x144] sm:$0xf]
                  %620 = vst [vmem:[%s536 + $0xa4] sm:$0xf] %v619
                  %v621 = vld [vmem:[%s535 + $0x150] sm:$0xf]
                  %622 = vst [vmem:[%s536 + $0xa8] sm:$0xf] %v621
                  %v623 = vld [vmem:[%s535 + $0x154] sm:$0xf]
                  %624 = vst [vmem:[%s536 + $0xac] sm:$0xf] %v623
                  %v625 = vld [vmem:[%s535 + $0x160] sm:$0xf]
                  %626 = vst [vmem:[%s536 + $0xb0] sm:$0xf] %v625
                  %v627 = vld [vmem:[%s535 + $0x164] sm:$0xf]
                  %628 = vst [vmem:[%s536 + $0xb4] sm:$0xf] %v627
                  %v629 = vld [vmem:[%s535 + $0x170] sm:$0xf]
                  %630 = vst [vmem:[%s536 + $0xb8] sm:$0xf] %v629
                  %v631 = vld [vmem:[%s535 + $0x174] sm:$0xf]
                  %632 = vst [vmem:[%s536 + $0xbc] sm:$0xf] %v631
                  %v633 = vld [vmem:[%s535 + $0x180] sm:$0xf]
                  %634 = vst [vmem:[%s536 + $0xc0] sm:$0xf] %v633
                  %v635 = vld [vmem:[%s535 + $0x184] sm:$0xf]
                  %636 = vst [vmem:[%s536 + $0xc4] sm:$0xf] %v635
                  %v637 = vld [vmem:[%s535 + $0x190] sm:$0xf]
                  %638 = vst [vmem:[%s536 + $0xc8] sm:$0xf] %v637
                  %v639 = vld [vmem:[%s535 + $0x194] sm:$0xf]
                  %640 = vst [vmem:[%s536 + $0xcc] sm:$0xf] %v639
                  %v641 = vld [vmem:[%s535 + $0x1a0] sm:$0xf]
                  %642 = vst [vmem:[%s536 + $0xd0] sm:$0xf] %v641
                  %v643 = vld [vmem:[%s535 + $0x1a4] sm:$0xf]
                  %644 = vst [vmem:[%s536 + $0xd4] sm:$0xf] %v643
                  %v645 = vld [vmem:[%s535 + $0x1b0] sm:$0xf]
                  %646 = vst [vmem:[%s536 + $0xd8] sm:$0xf] %v645
                  %v647 = vld [vmem:[%s535 + $0x1b4] sm:$0xf]
                  %648 = vst [vmem:[%s536 + $0xdc] sm:$0xf] %v647
                  %v649 = vld [vmem:[%s535 + $0x1c0] sm:$0xf]
                  %650 = vst [vmem:[%s536 + $0xe0] sm:$0xf] %v649
                  %v651 = vld [vmem:[%s535 + $0x1c4] sm:$0xf]
                  %652 = vst [vmem:[%s536 + $0xe4] sm:$0xf] %v651
                  %v653 = vld [vmem:[%s535 + $0x1d0] sm:$0xf]
                  %654 = vst [vmem:[%s536 + $0xe8] sm:$0xf] %v653
                  %v655 = vld [vmem:[%s535 + $0x1d4] sm:$0xf]
                  %656 = vst [vmem:[%s536 + $0xec] sm:$0xf] %v655
                  %v657 = vld [vmem:[%s535 + $0x1e0] sm:$0xf]
                  %658 = vst [vmem:[%s536 + $0xf0] sm:$0xf] %v657
                  %v659 = vld [vmem:[%s535 + $0x1e4] sm:$0xf]
                  %660 = vst [vmem:[%s536 + $0xf4] sm:$0xf] %v659
                  %v661 = vld [vmem:[%s535 + $0x1f0] sm:$0xf]
                  %662 = vst [vmem:[%s536 + $0xf8] sm:$0xf] %v661
                  %v663 = vld [vmem:[%s535 + $0x1f4] sm:$0xf]
                  %664 = vst [vmem:[%s536 + $0xfc] sm:$0xf] %v663
                $region95: #{cnn_forward.1} parent=82 // loop_footer
                  %s534 = sadd.s32 1, %s530
                $region96: #{cnn_forward.1} parent=82 // loop_footer_branch
                  %529 = sbr.rel target = $region92
                $region97: #{cnn_forward.1} parent=82 // loop_exit
                  _
              $region83: #{cnn_forward.1} parent=67 // pred_fallthru
                _
            $region68: #{cnn_forward.1} parent=63 // pred_fallthru
              _
            // Predicated region
            $region69: #{cnn_forward.1} parent=63 // pred_check
              _
            $region70: #{cnn_forward.1} parent=63 // pred_check_branch
              %380 = sbr.rel (0) target = $region72
            $region71: #{cnn_forward.1} parent=63 // pred_region
              loop: start=0, step=1, limit=1
              $region73: #{cnn_forward.1} parent=71 // loop_pre_header
                _
              $region74: #{cnn_forward.1} parent=71 // loop_header
                %s383 = sphi 0, %s387
                %p384 = scmp.ge.s32.totalorder %s383, 1
                %s388 = sphi %s374, %s374
                %s389 = sphi %s371, %s371
              $region75: #{cnn_forward.1} parent=71 // loop_header_branch
                %386 = sbr.rel (%p384) target = $region79
              $region76: #{cnn_forward.1} parent=71 // loop_body
                %v390 = vld [vmem:[%s388] sm:$0xf]
                %391 = vst [vmem:[%s389] sm:$0xf] %v390
                %v392 = vld [vmem:[%s388 + $0x4] sm:$0xf]
                %393 = vst [vmem:[%s389 + $0x4] sm:$0xf] %v392
                %v394 = vld [vmem:[%s388 + $0x10] sm:$0xf]
                %395 = vst [vmem:[%s389 + $0x8] sm:$0xf] %v394
                %v396 = vld [vmem:[%s388 + $0x14] sm:$0xf]
                %397 = vst [vmem:[%s389 + $0xc] sm:$0xf] %v396
                %v398 = vld [vmem:[%s388 + $0x20] sm:$0xf]
                %399 = vst [vmem:[%s389 + $0x10] sm:$0xf] %v398
                %v400 = vld [vmem:[%s388 + $0x24] sm:$0xf]
                %401 = vst [vmem:[%s389 + $0x14] sm:$0xf] %v400
                %v402 = vld [vmem:[%s388 + $0x30] sm:$0xf]
                %403 = vst [vmem:[%s389 + $0x18] sm:$0xf] %v402
                %v404 = vld [vmem:[%s388 + $0x34] sm:$0xf]
                %405 = vst [vmem:[%s389 + $0x1c] sm:$0xf] %v404
                %v406 = vld [vmem:[%s388 + $0x40] sm:$0xf]
                %407 = vst [vmem:[%s389 + $0x20] sm:$0xf] %v406
                %v408 = vld [vmem:[%s388 + $0x44] sm:$0xf]
                %409 = vst [vmem:[%s389 + $0x24] sm:$0xf] %v408
                %v410 = vld [vmem:[%s388 + $0x50] sm:$0xf]
                %411 = vst [vmem:[%s389 + $0x28] sm:$0xf] %v410
                %v412 = vld [vmem:[%s388 + $0x54] sm:$0xf]
                %413 = vst [vmem:[%s389 + $0x2c] sm:$0xf] %v412
                %v414 = vld [vmem:[%s388 + $0x60] sm:$0xf]
                %415 = vst [vmem:[%s389 + $0x30] sm:$0xf] %v414
                %v416 = vld [vmem:[%s388 + $0x64] sm:$0xf]
                %417 = vst [vmem:[%s389 + $0x34] sm:$0xf] %v416
                %v418 = vld [vmem:[%s388 + $0x70] sm:$0xf]
                %419 = vst [vmem:[%s389 + $0x38] sm:$0xf] %v418
                %v420 = vld [vmem:[%s388 + $0x74] sm:$0xf]
                %421 = vst [vmem:[%s389 + $0x3c] sm:$0xf] %v420
                %v422 = vld [vmem:[%s388 + $0x80] sm:$0xf]
                %423 = vst [vmem:[%s389 + $0x40] sm:$0xf] %v422
                %v424 = vld [vmem:[%s388 + $0x84] sm:$0xf]
                %425 = vst [vmem:[%s389 + $0x44] sm:$0xf] %v424
                %v426 = vld [vmem:[%s388 + $0x90] sm:$0xf]
                %427 = vst [vmem:[%s389 + $0x48] sm:$0xf] %v426
                %v428 = vld [vmem:[%s388 + $0x94] sm:$0xf]
                %429 = vst [vmem:[%s389 + $0x4c] sm:$0xf] %v428
                %v430 = vld [vmem:[%s388 + $0xa0] sm:$0xf]
                %431 = vst [vmem:[%s389 + $0x50] sm:$0xf] %v430
                %v432 = vld [vmem:[%s388 + $0xa4] sm:$0xf]
                %433 = vst [vmem:[%s389 + $0x54] sm:$0xf] %v432
                %v434 = vld [vmem:[%s388 + $0xb0] sm:$0xf]
                %435 = vst [vmem:[%s389 + $0x58] sm:$0xf] %v434
                %v436 = vld [vmem:[%s388 + $0xb4] sm:$0xf]
                %437 = vst [vmem:[%s389 + $0x5c] sm:$0xf] %v436
                %v438 = vld [vmem:[%s388 + $0xc0] sm:$0xf]
                %439 = vst [vmem:[%s389 + $0x60] sm:$0xf] %v438
                %v440 = vld [vmem:[%s388 + $0xc4] sm:$0xf]
                %441 = vst [vmem:[%s389 + $0x64] sm:$0xf] %v440
                %v442 = vld [vmem:[%s388 + $0xd0] sm:$0xf]
                %443 = vst [vmem:[%s389 + $0x68] sm:$0xf] %v442
                %v444 = vld [vmem:[%s388 + $0xd4] sm:$0xf]
                %445 = vst [vmem:[%s389 + $0x6c] sm:$0xf] %v444
                %v446 = vld [vmem:[%s388 + $0xe0] sm:$0xf]
                %447 = vst [vmem:[%s389 + $0x70] sm:$0xf] %v446
                %v448 = vld [vmem:[%s388 + $0xe4] sm:$0xf]
                %449 = vst [vmem:[%s389 + $0x74] sm:$0xf] %v448
                %v450 = vld [vmem:[%s388 + $0xf0] sm:$0xf]
                %451 = vst [vmem:[%s389 + $0x78] sm:$0xf] %v450
                %v452 = vld [vmem:[%s388 + $0xf4] sm:$0xf]
                %453 = vst [vmem:[%s389 + $0x7c] sm:$0xf] %v452
                %v454 = vld [vmem:[%s388 + $0x100] sm:$0xf]
                %455 = vst [vmem:[%s389 + $0x80] sm:$0xf] %v454
                %v456 = vld [vmem:[%s388 + $0x104] sm:$0xf]
                %457 = vst [vmem:[%s389 + $0x84] sm:$0xf] %v456
                %v458 = vld [vmem:[%s388 + $0x110] sm:$0xf]
                %459 = vst [vmem:[%s389 + $0x88] sm:$0xf] %v458
                %v460 = vld [vmem:[%s388 + $0x114] sm:$0xf]
                %461 = vst [vmem:[%s389 + $0x8c] sm:$0xf] %v460
                %v462 = vld [vmem:[%s388 + $0x120] sm:$0xf]
                %463 = vst [vmem:[%s389 + $0x90] sm:$0xf] %v462
                %v464 = vld [vmem:[%s388 + $0x124] sm:$0xf]
                %465 = vst [vmem:[%s389 + $0x94] sm:$0xf] %v464
                %v466 = vld [vmem:[%s388 + $0x130] sm:$0xf]
                %467 = vst [vmem:[%s389 + $0x98] sm:$0xf] %v466
                %v468 = vld [vmem:[%s388 + $0x134] sm:$0xf]
                %469 = vst [vmem:[%s389 + $0x9c] sm:$0xf] %v468
                %v470 = vld [vmem:[%s388 + $0x140] sm:$0xf]
                %471 = vst [vmem:[%s389 + $0xa0] sm:$0xf] %v470
                %v472 = vld [vmem:[%s388 + $0x144] sm:$0xf]
                %473 = vst [vmem:[%s389 + $0xa4] sm:$0xf] %v472
                %v474 = vld [vmem:[%s388 + $0x150] sm:$0xf]
                %475 = vst [vmem:[%s389 + $0xa8] sm:$0xf] %v474
                %v476 = vld [vmem:[%s388 + $0x154] sm:$0xf]
                %477 = vst [vmem:[%s389 + $0xac] sm:$0xf] %v476
                %v478 = vld [vmem:[%s388 + $0x160] sm:$0xf]
                %479 = vst [vmem:[%s389 + $0xb0] sm:$0xf] %v478
                %v480 = vld [vmem:[%s388 + $0x164] sm:$0xf]
                %481 = vst [vmem:[%s389 + $0xb4] sm:$0xf] %v480
                %v482 = vld [vmem:[%s388 + $0x170] sm:$0xf]
                %483 = vst [vmem:[%s389 + $0xb8] sm:$0xf] %v482
                %v484 = vld [vmem:[%s388 + $0x174] sm:$0xf]
                %485 = vst [vmem:[%s389 + $0xbc] sm:$0xf] %v484
                %v486 = vld [vmem:[%s388 + $0x180] sm:$0xf]
                %487 = vst [vmem:[%s389 + $0xc0] sm:$0xf] %v486
                %v488 = vld [vmem:[%s388 + $0x184] sm:$0xf]
                %489 = vst [vmem:[%s389 + $0xc4] sm:$0xf] %v488
                %v490 = vld [vmem:[%s388 + $0x190] sm:$0xf]
                %491 = vst [vmem:[%s389 + $0xc8] sm:$0xf] %v490
                %v492 = vld [vmem:[%s388 + $0x194] sm:$0xf]
                %493 = vst [vmem:[%s389 + $0xcc] sm:$0xf] %v492
                %v494 = vld [vmem:[%s388 + $0x1a0] sm:$0xf]
                %495 = vst [vmem:[%s389 + $0xd0] sm:$0xf] %v494
                %v496 = vld [vmem:[%s388 + $0x1a4] sm:$0xf]
                %497 = vst [vmem:[%s389 + $0xd4] sm:$0xf] %v496
                %v498 = vld [vmem:[%s388 + $0x1b0] sm:$0xf]
                %499 = vst [vmem:[%s389 + $0xd8] sm:$0xf] %v498
                %v500 = vld [vmem:[%s388 + $0x1b4] sm:$0xf]
                %501 = vst [vmem:[%s389 + $0xdc] sm:$0xf] %v500
                %v502 = vld [vmem:[%s388 + $0x1c0] sm:$0xf]
                %503 = vst [vmem:[%s389 + $0xe0] sm:$0xf] %v502
                %v504 = vld [vmem:[%s388 + $0x1c4] sm:$0xf]
                %505 = vst [vmem:[%s389 + $0xe4] sm:$0xf] %v504
                %v506 = vld [vmem:[%s388 + $0x1d0] sm:$0xf]
                %507 = vst [vmem:[%s389 + $0xe8] sm:$0xf] %v506
                %v508 = vld [vmem:[%s388 + $0x1d4] sm:$0xf]
                %509 = vst [vmem:[%s389 + $0xec] sm:$0xf] %v508
                %v510 = vld [vmem:[%s388 + $0x1e0] sm:$0xf]
                %511 = vst [vmem:[%s389 + $0xf0] sm:$0xf] %v510
                %v512 = vld [vmem:[%s388 + $0x1e4] sm:$0xf]
                %513 = vst [vmem:[%s389 + $0xf4] sm:$0xf] %v512
                %v514 = vld [vmem:[%s388 + $0x1f0] sm:$0xf]
                %515 = vst [vmem:[%s389 + $0xf8] sm:$0xf] %v514
                %v516 = vld [vmem:[%s388 + $0x1f4] sm:$0xf]
                %517 = vst [vmem:[%s389 + $0xfc] sm:$0xf] %v516
              $region77: #{cnn_forward.1} parent=71 // loop_footer
                %s387 = sadd.s32 1, %s383
              $region78: #{cnn_forward.1} parent=71 // loop_footer_branch
                %382 = sbr.rel target = $region74
              $region79: #{cnn_forward.1} parent=71 // loop_exit
                _
            $region72: #{cnn_forward.1} parent=63 // pred_fallthru
              _
          $region64: #{cnn_forward.1} parent=59 // pred_fallthru
            _
          %665 = vnop
        $region60: #{cnn_forward.1} parent=55 // pred_fallthru
          _
      $region56: #{cnn_forward.1} parent=5 // pred_fallthru
        _
      %p666 = scmp.le.s32.totalorder 1, %s20
      %p667 = scmp.lt.s32.totalorder %s20, 3
      %p668 = pnand %p666, %p667
      %p669 = pneg %p668
      // Predicated region
      $region98: #{cnn_forward.1} parent=5 // pred_check
        _
      $region99: #{cnn_forward.1} parent=5 // pred_check_branch
        %671 = sbr.rel (%p668) target = $region101
      $region100: #{cnn_forward.1} parent=5 // pred_region
        %s672 = ssub.s32 %s20, 1
        %s673 = sand.u32 %s33, 1
        %s674 = sand.u32 %s33, 1
        %s675 = smul.addr %s674, 256
        %s676 = scalar_lea.vmem [#allocation2], %s675
        // Predicated region
        $region102: #{cnn_forward.1} parent=100 // pred_check
          %p677 = pneg %p46
        $region103: #{cnn_forward.1} parent=100 // pred_check_branch
          %679 = sbr.rel (%p677) target = $region105
        $region104: #{cnn_forward.1} parent=100 // pred_region
          _
        $region105: #{cnn_forward.1} parent=100 // pred_fallthru
          _
        // Predicated region
        $region106: #{cnn_forward.1} parent=100 // pred_check
          %p680 = pneg %p130
        $region107: #{cnn_forward.1} parent=100 // pred_check_branch
          %682 = sbr.rel (%p680) target = $region109
        $region108: #{cnn_forward.1} parent=100 // pred_region
          %683 = dma.done [#allocation4], 32
        $region109: #{cnn_forward.1} parent=100 // pred_fallthru
          _
        // Predicated region
        $region110: #{cnn_forward.1} parent=100 // pred_check
          %p684 = pneg %p151
        $region111: #{cnn_forward.1} parent=100 // pred_check_branch
          %686 = sbr.rel (%p684) target = $region113
        $region112: #{cnn_forward.1} parent=100 // pred_region
          %687 = dma.done [#allocation6], 3200
        $region113: #{cnn_forward.1} parent=100 // pred_fallthru
          _
        // Predicated region
        $region114: #{cnn_forward.1} parent=100 // pred_check
          %p688 = pneg %p214
        $region115: #{cnn_forward.1} parent=100 // pred_check_branch
          %690 = sbr.rel (%p688) target = $region117
        $region116: #{cnn_forward.1} parent=100 // pred_region
          %691 = dma.done [#allocation6], 16
        $region117: #{cnn_forward.1} parent=100 // pred_fallthru
          _
        // Predicated region
        $region118: #{cnn_forward.1} parent=100 // pred_check
          %p692 = pneg %p256
        $region119: #{cnn_forward.1} parent=100 // pred_check_branch
          %694 = sbr.rel (%p692) target = $region121
        $region120: #{cnn_forward.1} parent=100 // pred_region
          %695 = dma.done [#allocation9], 16
        $region121: #{cnn_forward.1} parent=100 // pred_fallthru
          _
        %s696 = sand.u32 %s33, 1
        %s697 = sand.u32 %s33, 1
        %s698 = smul.addr %s697, 256
        %s699 = scalar_lea.vmem [#allocation2], %s698
        %p700 = pneg %p46
        %p701 = pneg %p43
        %p702 = pneg %p67
        %p703 = pneg %p64
        %p704 = pneg %p88
        %p705 = pneg %p85
        %p706 = pneg %p109
        %p707 = pneg %p106
        %p708 = pneg %p130
        %p709 = pneg %p127
        %p710 = pneg %p151
        %p711 = pneg %p148
        %p712 = pneg %p172
        %p713 = pneg %p169
        %p714 = pneg %p193
        %p715 = pneg %p190
        %p716 = pneg %p214
        %p717 = pneg %p211
        %p718 = pneg %p235
        %p719 = pneg %p232
        %p720 = pneg %p256
        %p721 = pneg %p253
        %p722 = pneg %p282
        %p723 = pneg %p279
        %s724 = smul.u32 2, %s25
        %p725 = scmp.lt.s32.totalorder %s724, 3
        %s726 = scalar_select %p725, %s724, 3
        %s727 = smul.addr %s726, 8
        %s728 = scalar_lea.vmem %s11, %s727
        %s729 = smul.u32 2, %s25
        %s730 = smul.u32 2, %s25
        %p731 = scmp.lt.s32.totalorder %s730, 3
        %s732 = scalar_select %p731, %s730, 3
        %s733 = smul.addr %s732, 8
        %s734 = scalar_lea.vmem %s11, %s733
        %s735 = smul.u32 2, %s25
        %v737 = vld [vmem:[%s676] sm:$0xf]
        %v738 = vld [vmem:[%s676 + $0x4] sm:$0xf]
        %v739 = vld [vmem:[%s676 + $0x8] sm:$0xf]
        %v740 = vld [vmem:[%s676 + $0xc] sm:$0xf]
        %v741 = vld [vmem:[%s676 + $0x10] sm:$0xf]
        %v742 = vld [vmem:[%s676 + $0x14] sm:$0xf]
        %v743 = vld [vmem:[%s676 + $0x18] sm:$0xf]
        %v744 = vld [vmem:[%s676 + $0x1c] sm:$0xf]
        %v745 = vld [vmem:[%s676 + $0x20] sm:$0xf]
        %v746 = vld [vmem:[%s676 + $0x24] sm:$0xf]
        %v747 = vld [vmem:[%s676 + $0x28] sm:$0xf]
        %v748 = vld [vmem:[%s676 + $0x2c] sm:$0xf]
        %v749 = vld [vmem:[%s676 + $0x30] sm:$0xf]
        %v750 = vld [vmem:[%s676 + $0x34] sm:$0xf]
        %v751 = vld [vmem:[%s676 + $0x38] sm:$0xf]
        %v752 = vld [vmem:[%s676 + $0x3c] sm:$0xf]
        %v753 = vld [vmem:[%s676 + $0x40] sm:$0xf]
        %v754 = vld [vmem:[%s676 + $0x44] sm:$0xf]
        %v755 = vld [vmem:[%s676 + $0x48] sm:$0xf]
        %v756 = vld [vmem:[%s676 + $0x4c] sm:$0xf]
        %v757 = vld [vmem:[%s676 + $0x50] sm:$0xf]
        %v758 = vld [vmem:[%s676 + $0x54] sm:$0xf]
        %v759 = vld [vmem:[%s676 + $0x58] sm:$0xf]
        %v760 = vld [vmem:[%s676 + $0x5c] sm:$0xf]
        %v761 = vld [vmem:[%s676 + $0x60] sm:$0xf]
        %v762 = vld [vmem:[%s676 + $0x64] sm:$0xf]
        %v763 = vld [vmem:[%s676 + $0x68] sm:$0xf]
        %v764 = vld [vmem:[%s676 + $0x6c] sm:$0xf]
        %v765 = vld [vmem:[%s676 + $0x70] sm:$0xf]
        %v766 = vld [vmem:[%s676 + $0x74] sm:$0xf]
        %v767 = vld [vmem:[%s676 + $0x78] sm:$0xf]
        %v768 = vld [vmem:[%s676 + $0x7c] sm:$0xf]
        %v769 = vld [vmem:[%s676 + $0x80] sm:$0xf]
        %v770 = vld [vmem:[%s676 + $0x84] sm:$0xf]
        %v771 = vld [vmem:[%s676 + $0x88] sm:$0xf]
        %v772 = vld [vmem:[%s676 + $0x8c] sm:$0xf]
        %v773 = vld [vmem:[%s676 + $0x90] sm:$0xf]
        %v774 = vld [vmem:[%s676 + $0x94] sm:$0xf]
        %v775 = vld [vmem:[%s676 + $0x98] sm:$0xf]
        %v776 = vld [vmem:[%s676 + $0x9c] sm:$0xf]
        %v777 = vld [vmem:[%s676 + $0xa0] sm:$0xf]
        %v778 = vld [vmem:[%s676 + $0xa4] sm:$0xf]
        %v779 = vld [vmem:[%s676 + $0xa8] sm:$0xf]
        %v780 = vld [vmem:[%s676 + $0xac] sm:$0xf]
        %v781 = vld [vmem:[%s676 + $0xb0] sm:$0xf]
        %v782 = vld [vmem:[%s676 + $0xb4] sm:$0xf]
        %v783 = vld [vmem:[%s676 + $0xb8] sm:$0xf]
        %v784 = vld [vmem:[%s676 + $0xbc] sm:$0xf]
        %v785 = vld [vmem:[%s676 + $0xc0] sm:$0xf]
        %v786 = vld [vmem:[%s676 + $0xc4] sm:$0xf]
        %v787 = vld [vmem:[%s676 + $0xc8] sm:$0xf]
        %v788 = vld [vmem:[%s676 + $0xcc] sm:$0xf]
        %v789 = vld [vmem:[%s676 + $0xd0] sm:$0xf]
        %v790 = vld [vmem:[%s676 + $0xd4] sm:$0xf]
        %v791 = vld [vmem:[%s676 + $0xd8] sm:$0xf]
        %v792 = vld [vmem:[%s676 + $0xdc] sm:$0xf]
        %v793 = vld [vmem:[%s676 + $0xe0] sm:$0xf]
        %v794 = vld [vmem:[%s676 + $0xe4] sm:$0xf]
        %v795 = vld [vmem:[%s676 + $0xe8] sm:$0xf]
        %v796 = vld [vmem:[%s676 + $0xec] sm:$0xf]
        %v797 = vld [vmem:[%s676 + $0xf0] sm:$0xf]
        %v798 = vld [vmem:[%s676 + $0xf4] sm:$0xf]
        %v799 = vld [vmem:[%s676 + $0xf8] sm:$0xf]
        %v800 = vld [vmem:[%s676 + $0xfc] sm:$0xf]
        %v801 = vld [vmem:[%s1] sm:$0xff]
        %v802 = vld [vmem:[%s1 + $0x8] sm:$0xff]
        %v803 = vld [vmem:[%s1 + $0x10] sm:$0xff]
        %v804 = vld [vmem:[%s1 + $0x18] sm:$0xff]
        %v805 = vld [vmem:[%s1 + $0x20] sm:$0xff]
        %v806 = vld [vmem:[%s1 + $0x28] sm:$0xff]
        %v807 = vld [vmem:[%s1 + $0x30] sm:$0xff]
        %v808 = vld [vmem:[%s1 + $0x38] sm:$0xff]
        %v809 = vld [vmem:[%s1 + $0x40] sm:$0xff]
        %v810 = vld [vmem:[%s1 + $0x48] sm:$0xff]
        %v811 = vld [vmem:[%s1 + $0x50] sm:$0xff]
        %v812 = vld [vmem:[%s1 + $0x58] sm:$0xff]
        %s813 = scalar_lea.vmem %s1, 96
        %v814 = vld [vmem:[%s813] sm:$0xff]
        %v815 = vld [vmem:[%s813 + $0x8] sm:$0xff]
        %v816 = vld [vmem:[%s813 + $0x10] sm:$0xff]
        %v817 = vld [vmem:[%s813 + $0x18] sm:$0xff]
        %v818 = vld [vmem:[%s813 + $0x20] sm:$0xff]
        %v819 = vld [vmem:[%s813 + $0x28] sm:$0xff]
        %v820 = vld [vmem:[%s813 + $0x30] sm:$0xff]
        %v821 = vld [vmem:[%s813 + $0x38] sm:$0xff]
        %v822 = vld [vmem:[%s813 + $0x40] sm:$0xff]
        %v823 = vld [vmem:[%s813 + $0x48] sm:$0xff]
        %v824 = vld [vmem:[%s813 + $0x50] sm:$0xff]
        %v825 = vld [vmem:[%s813 + $0x58] sm:$0xff]
        %v882 = vunpack.c.l.b16 %v739
        %v883 = vunpack.c.l.b16 %v740
        %v884 = vunpack.c.l.b16 %v741
        %v885 = vunpack.c.l.b16 %v742
        %v886 = vunpack.c.l.b16 %v743
        %v887 = vunpack.c.l.b16 %v744
        %v888 = vunpack.c.l.b16 %v745
        %v889 = vunpack.c.l.b16 %v746
        %v890 = vunpack.c.l.b16 %v747
        %v891 = vunpack.c.l.b16 %v748
        %v892 = vunpack.c.l.b16 %v749
        %v893 = vunpack.c.l.b16 %v750
        %v894 = vunpack.c.l.b16 %v751
        %v895 = vunpack.c.l.b16 %v752
        %v896 = vunpack.c.l.b16 %v753
        %v897 = vunpack.c.l.b16 %v754
        %v898 = vunpack.c.l.b16 %v755
        %v899 = vunpack.c.l.b16 %v756
        %v900 = vunpack.c.l.b16 %v757
        %v901 = vunpack.c.l.b16 %v758
        %v902 = vunpack.c.l.b16 %v759
        %v903 = vunpack.c.l.b16 %v760
        %v904 = vunpack.c.l.b16 %v761
        %v905 = vunpack.c.l.b16 %v762
        %v906 = vunpack.c.l.b16 %v763
        %v907 = vunpack.c.l.b16 %v764
        %v908 = vunpack.c.l.b16 %v765
        %v909 = vunpack.c.l.b16 %v766
        %v910 = vunpack.c.l.b16 %v767
        %v911 = vunpack.c.l.b16 %v768
        %v912 = vunpack.c.l.b16 %v769
        %v913 = vunpack.c.l.b16 %v770
        %v914 = vunpack.c.l.b16 %v771
        %v915 = vunpack.c.l.b16 %v772
        %v916 = vunpack.c.l.b16 %v773
        %v917 = vunpack.c.l.b16 %v774
        %v918 = vunpack.c.l.b16 %v775
        %v919 = vunpack.c.l.b16 %v776
        %v920 = vunpack.c.l.b16 %v777
        %v921 = vunpack.c.l.b16 %v778
        %v922 = vunpack.c.l.b16 %v779
        %v923 = vunpack.c.l.b16 %v780
        %v924 = vunpack.c.l.b16 %v781
        %v925 = vunpack.c.l.b16 %v782
        %v926 = vunpack.c.l.b16 %v783
        %v927 = vunpack.c.l.b16 %v784
        %v928 = vunpack.c.l.b16 %v785
        %v929 = vunpack.c.l.b16 %v786
        %v930 = vunpack.c.l.b16 %v787
        %v931 = vunpack.c.l.b16 %v788
        %v932 = vunpack.c.l.b16 %v789
        %v933 = vunpack.c.l.b16 %v790
        %v934 = vunpack.c.l.b16 %v791
        %v935 = vunpack.c.l.b16 %v792
        %v936 = vunpack.c.l.b16 %v793
        %v937 = vunpack.c.l.b16 %v794
        %v938 = vpack.c.b16 %v883, %v882
        %v939 = vpack.c.b16 %v885, %v884
        %v940 = vpack.c.b16 %v887, %v886
        %v941 = vpack.c.b16 %v889, %v888
        %v942 = vpack.c.b16 %v891, %v890
        %v943 = vpack.c.b16 %v893, %v892
        %v944 = vpack.c.b16 %v895, %v894
        %v945 = vpack.c.b16 %v897, %v896
        %v946 = vpack.c.b16 %v899, %v898
        %v947 = vpack.c.b16 %v901, %v900
        %v948 = vpack.c.b16 %v903, %v902
        %v949 = vpack.c.b16 %v905, %v904
        %v950 = vpack.c.b16 %v907, %v906
        %v951 = vpack.c.b16 %v909, %v908
        %v952 = vpack.c.b16 %v911, %v910
        %v953 = vpack.c.b16 %v913, %v912
        %v954 = vpack.c.b16 %v915, %v914
        %v955 = vpack.c.b16 %v917, %v916
        %v956 = vpack.c.b16 %v919, %v918
        %v957 = vpack.c.b16 %v921, %v920
        %v958 = vpack.c.b16 %v923, %v922
        %v959 = vpack.c.b16 %v925, %v924
        %v960 = vpack.c.b16 %v927, %v926
        %v961 = vpack.c.b16 %v929, %v928
        %v962 = vpack.c.b16 %v931, %v930
        %v963 = vpack.c.b16 %v933, %v932
        %v964 = vpack.c.b16 %v935, %v934
        %v965 = vpack.c.b16 %v937, %v936
        %v978 = vunpack.c.l.b16 %v814
        %v979 = vunpack.c.h.b16 %v814
        %v980 = vunpack.c.l.b16 %v815
        %v981 = vunpack.c.h.b16 %v815
        %v982 = vunpack.c.l.b16 %v816
        %v983 = vunpack.c.h.b16 %v816
        %v984 = vunpack.c.l.b16 %v817
        %v985 = vunpack.c.h.b16 %v817
        %v986 = vunpack.c.l.b16 %v818
        %v987 = vunpack.c.h.b16 %v818
        %v988 = vunpack.c.l.b16 %v819
        %v989 = vunpack.c.h.b16 %v819
        %v990 = vunpack.c.l.b16 %v820
        %v991 = vunpack.c.h.b16 %v820
        %v992 = vunpack.c.l.b16 %v821
        %v993 = vunpack.c.h.b16 %v821
        %v994 = vunpack.c.l.b16 %v822
        %v995 = vunpack.c.h.b16 %v822
        %v996 = vunpack.c.l.b16 %v823
        %v997 = vunpack.c.h.b16 %v823
        %v998 = vunpack.c.l.b16 %v824
        %v999 = vunpack.c.h.b16 %v824
        %v1000 = vunpack.c.l.b16 %v825
        %v1001 = vunpack.c.h.b16 %v825
        %v1002 = vpack.c.b16 %v980, %v978
        %v1003 = vpack.c.b16 %v981, %v979
        %v1004 = vpack.c.b16 %v984, %v982
        %v1005 = vpack.c.b16 %v985, %v983
        %v1006 = vpack.c.b16 %v988, %v986
        %v1007 = vpack.c.b16 %v989, %v987
        %v1008 = vpack.c.b16 %v992, %v990
        %v1009 = vpack.c.b16 %v993, %v991
        %v1010 = vpack.c.b16 %v996, %v994
        %v1011 = vpack.c.b16 %v997, %v995
        %v1012 = vpack.c.b16 %v1000, %v998
        %v1013 = vpack.c.b16 %v1001, %v999
        %vm1026 = vcmask 785408
        %v1028 = vsel %vm1026, %v938, 0
        %v1031 = vsel %vm1026, %v939, 0
        %v1034 = vsel %vm1026, %v940, 0
        %v1037 = vsel %vm1026, %v941, 0
        %v1040 = vsel %vm1026, %v942, 0
        %v1043 = vsel %vm1026, %v943, 0
        %v1046 = vsel %vm1026, %v944, 0
        %v1049 = vsel %vm1026, %v945, 0
        %v1052 = vsel %vm1026, %v946, 0
        %v1055 = vsel %vm1026, %v947, 0
        %v1058 = vsel %vm1026, %v948, 0
        %v1061 = vsel %vm1026, %v949, 0
        %v1064 = vsel %vm1026, %v950, 0
        %v1067 = vsel %vm1026, %v951, 0
        %v1070 = vsel %vm1026, %v952, 0
        %v1073 = vsel %vm1026, %v953, 0
        %v1076 = vsel %vm1026, %v954, 0
        %v1079 = vsel %vm1026, %v955, 0
        %v1082 = vsel %vm1026, %v956, 0
        %v1085 = vsel %vm1026, %v957, 0
        %v1088 = vsel %vm1026, %v958, 0
        %v1091 = vsel %vm1026, %v959, 0
        %v1094 = vsel %vm1026, %v960, 0
        %v1097 = vsel %vm1026, %v961, 0
        %v1100 = vsel %vm1026, %v962, 0
        %v1103 = vsel %vm1026, %v963, 0
        %v1106 = vsel %vm1026, %v964, 0
        %v1109 = vsel %vm1026, %v965, 0
        %1111 = vmatprep.subr.bf16.mxu0 %v1003
        %1112 = vmatpush1.bf16.msra.mxu0 %v1002
        %1113 = vmatprep.subr.bf16.mxu0 %v1005
        %1114 = vmatpush1.bf16.msra.mxu0 %v1004
        %1115 = vmatprep.subr.bf16.mxu0 %v1007
        %1116 = vmatpush1.bf16.msra.mxu0 %v1006
        %1117 = vmatprep.subr.bf16.mxu0 %v1009
        %1118 = vmatpush1.bf16.msra.mxu0 %v1008
        %1119 = vmatprep.subr.bf16.mxu0 %v1011
        %1120 = vmatpush1.bf16.msra.mxu0 %v1010
        %1121 = vmatprep.subr.bf16.mxu0 %v1013
        %1122 = vmatpush1.bf16.msra.mxu0 %v1012
        %1123 = vmatprep.subr.bf16.mxu0 0
        %1124 = vmatpush1.bf16.msra.mxu0 0
        %1125 = vmatprep.subr.bf16.mxu0 0
        %1126 = vmatpush1.bf16.msra.mxu0 0
        %1127 = vmatprep.subr.bf16.mxu0 0
        %1128 = vmatpush1.bf16.msra.mxu0 0
        %1129 = vmatprep.subr.bf16.mxu0 0
        %1130 = vmatpush1.bf16.msra.mxu0 0
        %1131 = vmatprep.subr.bf16.mxu0 0
        %1132 = vmatpush1.bf16.msra.mxu0 0
        %1133 = vmatprep.subr.bf16.mxu0 0
        %1134 = vmatpush1.bf16.msra.mxu0 0
        %1135 = vmatprep.subr.bf16.mxu0 0
        %1136 = vmatpush1.bf16.msra.mxu0 0
        %1137 = vmatprep.subr.bf16.mxu0 0
        %1138 = vmatpush1.bf16.msra.mxu0 0
        %1139 = vmatprep.subr.bf16.mxu0 0
        %1140 = vmatpush1.bf16.msra.mxu0 0
        %1141 = vmatprep.subr.bf16.mxu0 0
        %1142 = vmatpush1.bf16.msra.mxu0 0
        %1143 = vmatprep.mubr.bf16.mxu0 0
        %1144 = vmatmul.mubr.bf16.gmra.mrb[0].mxu0 %v1028
        %v1145 = vpop.f32.mrb[0].mxu0
        %v1146 = vadd.f32 0.0, %v1145
        %v1147 = vpop.f32.mrb[0].mxu0
        %v1148 = vadd.f32 0.0, %v1147
        %v1149 = vpop.f32.mrb[0].mxu0
        %v1150 = vadd.f32 0.0, %v1149
        %v1151 = vpop.f32.mrb[0].mxu0
        %v1152 = vadd.f32 0.0, %v1151
        %1153 = vmatprep.mubr.bf16.mxu0 0
        %1154 = vmatmul.mubr.bf16.gmra.mrb[0].mxu0 %v1031
        %v1155 = vpop.f32.mrb[0].mxu0
        %v1156 = vadd.f32 0.0, %v1155
        %v1157 = vpop.f32.mrb[0].mxu0
        %v1158 = vadd.f32 0.0, %v1157
        %v1159 = vpop.f32.mrb[0].mxu0
        %v1160 = vadd.f32 0.0, %v1159
        %v1161 = vpop.f32.mrb[0].mxu0
        %v1162 = vadd.f32 0.0, %v1161
        %1163 = vmatprep.mubr.bf16.mxu0 0
        %1164 = vmatmul.mubr.bf16.gmra.mrb[0].mxu0 %v1034
        %v1165 = vpop.f32.mrb[0].mxu0
        %v1166 = vadd.f32 0.0, %v1165
        %v1167 = vpop.f32.mrb[0].mxu0
        %v1168 = vadd.f32 0.0, %v1167
        %v1169 = vpop.f32.mrb[0].mxu0
        %v1170 = vadd.f32 0.0, %v1169
        %v1171 = vpop.f32.mrb[0].mxu0
        %v1172 = vadd.f32 0.0, %v1171
        %1173 = vmatprep.mubr.bf16.mxu0 0
        %1174 = vmatmul.mubr.bf16.gmra.mrb[0].mxu0 %v1037
        %v1175 = vpop.f32.mrb[0].mxu0
        %v1176 = vadd.f32 0.0, %v1175
        %v1177 = vpop.f32.mrb[0].mxu0
        %v1178 = vadd.f32 0.0, %v1177
        %v1179 = vpop.f32.mrb[0].mxu0
        %v1180 = vadd.f32 0.0, %v1179
        %v1181 = vpop.f32.mrb[0].mxu0
        %v1182 = vadd.f32 0.0, %v1181
        %1183 = vmatprep.mubr.bf16.mxu0 0
        %1184 = vmatmul.mubr.bf16.gmra.mrb[0].mxu0 %v1040
        %v1185 = vpop.f32.mrb[0].mxu0
        %v1186 = vadd.f32 0.0, %v1185
        %v1187 = vpop.f32.mrb[0].mxu0
        %v1188 = vadd.f32 0.0, %v1187
        %v1189 = vpop.f32.mrb[0].mxu0
        %v1190 = vadd.f32 0.0, %v1189
        %v1191 = vpop.f32.mrb[0].mxu0
        %v1192 = vadd.f32 0.0, %v1191
        %1193 = vmatprep.mubr.bf16.mxu0 0
        %1194 = vmatmul.mubr.bf16.gmra.mrb[0].mxu0 %v1043
        %v1195 = vpop.f32.mrb[0].mxu0
        %v1196 = vadd.f32 0.0, %v1195
        %v1197 = vpop.f32.mrb[0].mxu0
        %v1198 = vadd.f32 0.0, %v1197
        %v1199 = vpop.f32.mrb[0].mxu0
        %v1200 = vadd.f32 0.0, %v1199
        %v1201 = vpop.f32.mrb[0].mxu0
        %v1202 = vadd.f32 0.0, %v1201
        %1203 = vmatprep.mubr.bf16.mxu0 0
        %1204 = vmatmul.mubr.bf16.gmra.mrb[0].mxu0 %v1046
        %v1205 = vpop.f32.mrb[0].mxu0
        %v1206 = vadd.f32 0.0, %v1205
        %v1207 = vpop.f32.mrb[0].mxu0
        %v1208 = vadd.f32 0.0, %v1207
        %v1209 = vpop.f32.mrb[0].mxu0
        %v1210 = vadd.f32 0.0, %v1209
        %v1211 = vpop.f32.mrb[0].mxu0
        %v1212 = vadd.f32 0.0, %v1211
        %1213 = vmatprep.mubr.bf16.mxu0 0
        %1214 = vmatmul.mubr.bf16.gmra.mrb[0].mxu0 %v1049
        %v1215 = vpop.f32.mrb[0].mxu0
        %v1216 = vadd.f32 0.0, %v1215
        %v1217 = vpop.f32.mrb[0].mxu0
        %v1218 = vadd.f32 0.0, %v1217
        %v1219 = vpop.f32.mrb[0].mxu0
        %v1220 = vadd.f32 0.0, %v1219
        %v1221 = vpop.f32.mrb[0].mxu0
        %v1222 = vadd.f32 0.0, %v1221
        %1223 = vmatprep.mubr.bf16.mxu0 0
        %1224 = vmatmul.mubr.bf16.gmra.mrb[0].mxu0 %v1052
        %v1225 = vpop.f32.mrb[0].mxu0
        %v1226 = vadd.f32 0.0, %v1225
        %v1227 = vpop.f32.mrb[0].mxu0
        %v1228 = vadd.f32 0.0, %v1227
        %v1229 = vpop.f32.mrb[0].mxu0
        %v1230 = vadd.f32 0.0, %v1229
        %v1231 = vpop.f32.mrb[0].mxu0
        %v1232 = vadd.f32 0.0, %v1231
        %1233 = vmatprep.mubr.bf16.mxu0 0
        %1234 = vmatmul.mubr.bf16.gmra.mrb[0].mxu0 %v1055
        %v1235 = vpop.f32.mrb[0].mxu0
        %v1236 = vadd.f32 0.0, %v1235
        %v1237 = vpop.f32.mrb[0].mxu0
        %v1238 = vadd.f32 0.0, %v1237
        %v1239 = vpop.f32.mrb[0].mxu0
        %v1240 = vadd.f32 0.0, %v1239
        %v1241 = vpop.f32.mrb[0].mxu0
        %v1242 = vadd.f32 0.0, %v1241
        %1243 = vmatprep.mubr.bf16.mxu0 0
        %1244 = vmatmul.mubr.bf16.gmra.mrb[0].mxu0 %v1058
        %v1245 = vpop.f32.mrb[0].mxu0
        %v1246 = vadd.f32 0.0, %v1245
        %v1247 = vpop.f32.mrb[0].mxu0
        %v1248 = vadd.f32 0.0, %v1247
        %v1249 = vpop.f32.mrb[0].mxu0
        %v1250 = vadd.f32 0.0, %v1249
        %v1251 = vpop.f32.mrb[0].mxu0
        %v1252 = vadd.f32 0.0, %v1251
        %1253 = vmatprep.mubr.bf16.mxu0 0
        %1254 = vmatmul.mubr.bf16.gmra.mrb[0].mxu0 %v1061
        %v1255 = vpop.f32.mrb[0].mxu0
        %v1256 = vadd.f32 0.0, %v1255
        %v1257 = vpop.f32.mrb[0].mxu0
        %v1258 = vadd.f32 0.0, %v1257
        %v1259 = vpop.f32.mrb[0].mxu0
        %v1260 = vadd.f32 0.0, %v1259
        %v1261 = vpop.f32.mrb[0].mxu0
        %v1262 = vadd.f32 0.0, %v1261
        %1263 = vmatprep.mubr.bf16.mxu0 0
        %1264 = vmatmul.mubr.bf16.gmra.mrb[0].mxu0 %v1064
        %v1265 = vpop.f32.mrb[0].mxu0
        %v1266 = vadd.f32 0.0, %v1265
        %v1267 = vpop.f32.mrb[0].mxu0
        %v1268 = vadd.f32 0.0, %v1267
        %v1269 = vpop.f32.mrb[0].mxu0
        %v1270 = vadd.f32 0.0, %v1269
        %v1271 = vpop.f32.mrb[0].mxu0
        %v1272 = vadd.f32 0.0, %v1271
        %1273 = vmatprep.mubr.bf16.mxu0 0
        %1274 = vmatmul.mubr.bf16.gmra.mrb[0].mxu0 %v1067
        %v1275 = vpop.f32.mrb[0].mxu0
        %v1276 = vadd.f32 0.0, %v1275
        %v1277 = vpop.f32.mrb[0].mxu0
        %v1278 = vadd.f32 0.0, %v1277
        %v1279 = vpop.f32.mrb[0].mxu0
        %v1280 = vadd.f32 0.0, %v1279
        %v1281 = vpop.f32.mrb[0].mxu0
        %v1282 = vadd.f32 0.0, %v1281
        %1283 = vmatprep.mubr.bf16.mxu0 0
        %1284 = vmatmul.mubr.bf16.gmra.mrb[0].mxu0 %v1070
        %v1285 = vpop.f32.mrb[0].mxu0
        %v1286 = vadd.f32 0.0, %v1285
        %v1287 = vpop.f32.mrb[0].mxu0
        %v1288 = vadd.f32 0.0, %v1287
        %v1289 = vpop.f32.mrb[0].mxu0
        %v1290 = vadd.f32 0.0, %v1289
        %v1291 = vpop.f32.mrb[0].mxu0
        %v1292 = vadd.f32 0.0, %v1291
        %1293 = vmatprep.mubr.bf16.mxu0 0
        %1294 = vmatmul.mubr.bf16.gmra.mrb[0].mxu0 %v1073
        %v1295 = vpop.f32.mrb[0].mxu0
        %v1296 = vadd.f32 0.0, %v1295
        %v1297 = vpop.f32.mrb[0].mxu0
        %v1298 = vadd.f32 0.0, %v1297
        %v1299 = vpop.f32.mrb[0].mxu0
        %v1300 = vadd.f32 0.0, %v1299
        %v1301 = vpop.f32.mrb[0].mxu0
        %v1302 = vadd.f32 0.0, %v1301
        %1303 = vmatprep.mubr.bf16.mxu0 0
        %1304 = vmatmul.mubr.bf16.gmra.mrb[0].mxu0 %v1076
        %v1305 = vpop.f32.mrb[0].mxu0
        %v1306 = vadd.f32 0.0, %v1305
        %v1307 = vpop.f32.mrb[0].mxu0
        %v1308 = vadd.f32 0.0, %v1307
        %v1309 = vpop.f32.mrb[0].mxu0
        %v1310 = vadd.f32 0.0, %v1309
        %v1311 = vpop.f32.mrb[0].mxu0
        %v1312 = vadd.f32 0.0, %v1311
        %1313 = vmatprep.mubr.bf16.mxu0 0
        %1314 = vmatmul.mubr.bf16.gmra.mrb[0].mxu0 %v1079
        %v1315 = vpop.f32.mrb[0].mxu0
        %v1316 = vadd.f32 0.0, %v1315
        %v1317 = vpop.f32.mrb[0].mxu0
        %v1318 = vadd.f32 0.0, %v1317
        %v1319 = vpop.f32.mrb[0].mxu0
        %v1320 = vadd.f32 0.0, %v1319
        %v1321 = vpop.f32.mrb[0].mxu0
        %v1322 = vadd.f32 0.0, %v1321
        %1323 = vmatprep.mubr.bf16.mxu0 0
        %1324 = vmatmul.mubr.bf16.gmra.mrb[0].mxu0 %v1082
        %v1325 = vpop.f32.mrb[0].mxu0
        %v1326 = vadd.f32 0.0, %v1325
        %v1327 = vpop.f32.mrb[0].mxu0
        %v1328 = vadd.f32 0.0, %v1327
        %v1329 = vpop.f32.mrb[0].mxu0
        %v1330 = vadd.f32 0.0, %v1329
        %v1331 = vpop.f32.mrb[0].mxu0
        %v1332 = vadd.f32 0.0, %v1331
        %1333 = vmatprep.mubr.bf16.mxu0 0
        %1334 = vmatmul.mubr.bf16.gmra.mrb[0].mxu0 %v1085
        %v1335 = vpop.f32.mrb[0].mxu0
        %v1336 = vadd.f32 0.0, %v1335
        %v1337 = vpop.f32.mrb[0].mxu0
        %v1338 = vadd.f32 0.0, %v1337
        %v1339 = vpop.f32.mrb[0].mxu0
        %v1340 = vadd.f32 0.0, %v1339
        %v1341 = vpop.f32.mrb[0].mxu0
        %v1342 = vadd.f32 0.0, %v1341
        %1343 = vmatprep.mubr.bf16.mxu0 0
        %1344 = vmatmul.mubr.bf16.gmra.mrb[0].mxu0 %v1088
        %v1345 = vpop.f32.mrb[0].mxu0
        %v1346 = vadd.f32 0.0, %v1345
        %v1347 = vpop.f32.mrb[0].mxu0
        %v1348 = vadd.f32 0.0, %v1347
        %v1349 = vpop.f32.mrb[0].mxu0
        %v1350 = vadd.f32 0.0, %v1349
        %v1351 = vpop.f32.mrb[0].mxu0
        %v1352 = vadd.f32 0.0, %v1351
        %1353 = vmatprep.mubr.bf16.mxu0 0
        %1354 = vmatmul.mubr.bf16.gmra.mrb[0].mxu0 %v1091
        %v1355 = vpop.f32.mrb[0].mxu0
        %v1356 = vadd.f32 0.0, %v1355
        %v1357 = vpop.f32.mrb[0].mxu0
        %v1358 = vadd.f32 0.0, %v1357
        %v1359 = vpop.f32.mrb[0].mxu0
        %v1360 = vadd.f32 0.0, %v1359
        %v1361 = vpop.f32.mrb[0].mxu0
        %v1362 = vadd.f32 0.0, %v1361
        %1363 = vmatprep.mubr.bf16.mxu0 0
        %1364 = vmatmul.mubr.bf16.gmra.mrb[0].mxu0 %v1094
        %v1365 = vpop.f32.mrb[0].mxu0
        %v1366 = vadd.f32 0.0, %v1365
        %v1367 = vpop.f32.mrb[0].mxu0
        %v1368 = vadd.f32 0.0, %v1367
        %v1369 = vpop.f32.mrb[0].mxu0
        %v1370 = vadd.f32 0.0, %v1369
        %v1371 = vpop.f32.mrb[0].mxu0
        %v1372 = vadd.f32 0.0, %v1371
        %1373 = vmatprep.mubr.bf16.mxu0 0
        %1374 = vmatmul.mubr.bf16.gmra.mrb[0].mxu0 %v1097
        %v1375 = vpop.f32.mrb[0].mxu0
        %v1376 = vadd.f32 0.0, %v1375
        %v1377 = vpop.f32.mrb[0].mxu0
        %v1378 = vadd.f32 0.0, %v1377
        %v1379 = vpop.f32.mrb[0].mxu0
        %v1380 = vadd.f32 0.0, %v1379
        %v1381 = vpop.f32.mrb[0].mxu0
        %v1382 = vadd.f32 0.0, %v1381
        %1383 = vmatprep.mubr.bf16.mxu0 0
        %1384 = vmatmul.mubr.bf16.gmra.mrb[0].mxu0 %v1100
        %v1385 = vpop.f32.mrb[0].mxu0
        %v1386 = vadd.f32 0.0, %v1385
        %v1387 = vpop.f32.mrb[0].mxu0
        %v1388 = vadd.f32 0.0, %v1387
        %v1389 = vpop.f32.mrb[0].mxu0
        %v1390 = vadd.f32 0.0, %v1389
        %v1391 = vpop.f32.mrb[0].mxu0
        %v1392 = vadd.f32 0.0, %v1391
        %1393 = vmatprep.mubr.bf16.mxu0 0
        %1394 = vmatmul.mubr.bf16.gmra.mrb[0].mxu0 %v1103
        %v1395 = vpop.f32.mrb[0].mxu0
        %v1396 = vadd.f32 0.0, %v1395
        %v1397 = vpop.f32.mrb[0].mxu0
        %v1398 = vadd.f32 0.0, %v1397
        %v1399 = vpop.f32.mrb[0].mxu0
        %v1400 = vadd.f32 0.0, %v1399
        %v1401 = vpop.f32.mrb[0].mxu0
        %v1402 = vadd.f32 0.0, %v1401
        %1403 = vmatprep.mubr.bf16.mxu0 0
        %1404 = vmatmul.mubr.bf16.gmra.mrb[0].mxu0 %v1106
        %v1405 = vpop.f32.mrb[0].mxu0
        %v1406 = vadd.f32 0.0, %v1405
        %v1407 = vpop.f32.mrb[0].mxu0
        %v1408 = vadd.f32 0.0, %v1407
        %v1409 = vpop.f32.mrb[0].mxu0
        %v1410 = vadd.f32 0.0, %v1409
        %v1411 = vpop.f32.mrb[0].mxu0
        %v1412 = vadd.f32 0.0, %v1411
        %1413 = vmatprep.mubr.bf16.mxu0 0
        %1414 = vmatmul.mubr.bf16.gmra.mrb[0].mxu0 %v1109
        %v1415 = vpop.f32.mrb[0].mxu0
        %v1416 = vadd.f32 0.0, %v1415
        %v1417 = vpop.f32.mrb[0].mxu0
        %v1418 = vadd.f32 0.0, %v1417
        %v1419 = vpop.f32.mrb[0].mxu0
        %v1420 = vadd.f32 0.0, %v1419
        %v1421 = vpop.f32.mrb[0].mxu0
        %v1422 = vadd.f32 0.0, %v1421
        %1423 = vdwg.mxu0
        %v1426 = vunpack.c.l.b16 %v737
        %v1427 = vunpack.c.l.b16 %v738
        %v1428 = vpack.c.b16 %v1427, %v1426
        %v1441 = vunpack.c.l.b16 %v801
        %v1442 = vunpack.c.h.b16 %v801
        %v1443 = vunpack.c.l.b16 %v802
        %v1444 = vunpack.c.h.b16 %v802
        %v1445 = vunpack.c.l.b16 %v803
        %v1446 = vunpack.c.h.b16 %v803
        %v1447 = vunpack.c.l.b16 %v804
        %v1448 = vunpack.c.h.b16 %v804
        %v1449 = vunpack.c.l.b16 %v805
        %v1450 = vunpack.c.h.b16 %v805
        %v1451 = vunpack.c.l.b16 %v806
        %v1452 = vunpack.c.h.b16 %v806
        %v1453 = vunpack.c.l.b16 %v807
        %v1454 = vunpack.c.h.b16 %v807
        %v1455 = vunpack.c.l.b16 %v808
        %v1456 = vunpack.c.h.b16 %v808
        %v1457 = vunpack.c.l.b16 %v809
        %v1458 = vunpack.c.h.b16 %v809
        %v1459 = vunpack.c.l.b16 %v810
        %v1460 = vunpack.c.h.b16 %v810
        %v1461 = vunpack.c.l.b16 %v811
        %v1462 = vunpack.c.h.b16 %v811
        %v1463 = vunpack.c.l.b16 %v812
        %v1464 = vunpack.c.h.b16 %v812
        %v1465 = vpack.c.b16 %v1443, %v1441
        %v1466 = vpack.c.b16 %v1444, %v1442
        %v1467 = vpack.c.b16 %v1447, %v1445
        %v1468 = vpack.c.b16 %v1448, %v1446
        %v1469 = vpack.c.b16 %v1451, %v1449
        %v1470 = vpack.c.b16 %v1452, %v1450
        %v1471 = vpack.c.b16 %v1455, %v1453
        %v1472 = vpack.c.b16 %v1456, %v1454
        %v1473 = vpack.c.b16 %v1459, %v1457
        %v1474 = vpack.c.b16 %v1460, %v1458
        %v1475 = vpack.c.b16 %v1463, %v1461
        %v1476 = vpack.c.b16 %v1464, %v1462
        %v1490 = vsel %vm1026, %v1428, 0
        %1492 = vmatprep.subr.bf16.mxu0 %v1466
        %1493 = vmatpush1.bf16.msra.mxu0 %v1465
        %1494 = vmatprep.subr.bf16.mxu0 %v1468
        %1495 = vmatpush1.bf16.msra.mxu0 %v1467
        %1496 = vmatprep.subr.bf16.mxu0 %v1470
        %1497 = vmatpush1.bf16.msra.mxu0 %v1469
        %1498 = vmatprep.subr.bf16.mxu0 %v1472
        %1499 = vmatpush1.bf16.msra.mxu0 %v1471
        %1500 = vmatprep.subr.bf16.mxu0 %v1474
        %1501 = vmatpush1.bf16.msra.mxu0 %v1473
        %1502 = vmatprep.subr.bf16.mxu0 %v1476
        %1503 = vmatpush1.bf16.msra.mxu0 %v1475
        %1504 = vmatprep.subr.bf16.mxu0 0
        %1505 = vmatpush1.bf16.msra.mxu0 0
        %1506 = vmatprep.subr.bf16.mxu0 0
        %1507 = vmatpush1.bf16.msra.mxu0 0
        %1508 = vmatprep.subr.bf16.mxu0 0
        %1509 = vmatpush1.bf16.msra.mxu0 0
        %1510 = vmatprep.subr.bf16.mxu0 0
        %1511 = vmatpush1.bf16.msra.mxu0 0
        %1512 = vmatprep.subr.bf16.mxu0 0
        %1513 = vmatpush1.bf16.msra.mxu0 0
        %1514 = vmatprep.subr.bf16.mxu0 0
        %1515 = vmatpush1.bf16.msra.mxu0 0
        %1516 = vmatprep.subr.bf16.mxu0 0
        %1517 = vmatpush1.bf16.msra.mxu0 0
        %1518 = vmatprep.subr.bf16.mxu0 0
        %1519 = vmatpush1.bf16.msra.mxu0 0
        %1520 = vmatprep.subr.bf16.mxu0 0
        %1521 = vmatpush1.bf16.msra.mxu0 0
        %1522 = vmatprep.subr.bf16.mxu0 0
        %1523 = vmatpush1.bf16.msra.mxu0 0
        %1524 = vmatprep.mubr.bf16.mxu0 0
        %1525 = vmatmul.mubr.bf16.gmra.mrb[0].mxu0 %v1490
        %v1526 = vpop.f32.mrb[0].mxu0
        %v1527 = vadd.f32 %v1146, %v1526
        %v1528 = vpop.f32.mrb[0].mxu0
        %v1529 = vadd.f32 %v1148, %v1528
        %v1530 = vpop.f32.mrb[0].mxu0
        %v1531 = vadd.f32 %v1150, %v1530
        %v1532 = vpop.f32.mrb[0].mxu0
        %v1533 = vadd.f32 %v1152, %v1532
        %1534 = vmatprep.mubr.bf16.mxu0 0
        %1535 = vmatmul.mubr.bf16.gmra.mrb[0].mxu0 %v1028
        %v1536 = vpop.f32.mrb[0].mxu0
        %v1537 = vadd.f32 %v1156, %v1536
        %v1538 = vpop.f32.mrb[0].mxu0
        %v1539 = vadd.f32 %v1158, %v1538
        %v1540 = vpop.f32.mrb[0].mxu0
        %v1541 = vadd.f32 %v1160, %v1540
        %v1542 = vpop.f32.mrb[0].mxu0
        %v1543 = vadd.f32 %v1162, %v1542
        %1544 = vmatprep.mubr.bf16.mxu0 0
        %1545 = vmatmul.mubr.bf16.gmra.mrb[0].mxu0 %v1031
        %v1546 = vpop.f32.mrb[0].mxu0
        %v1547 = vadd.f32 %v1166, %v1546
        %v1548 = vpop.f32.mrb[0].mxu0
        %v1549 = vadd.f32 %v1168, %v1548
        %v1550 = vpop.f32.mrb[0].mxu0
        %v1551 = vadd.f32 %v1170, %v1550
        %v1552 = vpop.f32.mrb[0].mxu0
        %v1553 = vadd.f32 %v1172, %v1552
        %1554 = vmatprep.mubr.bf16.mxu0 0
        %1555 = vmatmul.mubr.bf16.gmra.mrb[0].mxu0 %v1034
        %v1556 = vpop.f32.mrb[0].mxu0
        %v1557 = vadd.f32 %v1176, %v1556
        %v1558 = vpop.f32.mrb[0].mxu0
        %v1559 = vadd.f32 %v1178, %v1558
        %v1560 = vpop.f32.mrb[0].mxu0
        %v1561 = vadd.f32 %v1180, %v1560
        %v1562 = vpop.f32.mrb[0].mxu0
        %v1563 = vadd.f32 %v1182, %v1562
        %1564 = vmatprep.mubr.bf16.mxu0 0
        %1565 = vmatmul.mubr.bf16.gmra.mrb[0].mxu0 %v1037
        %v1566 = vpop.f32.mrb[0].mxu0
        %v1567 = vadd.f32 %v1186, %v1566
        %v1568 = vpop.f32.mrb[0].mxu0
        %v1569 = vadd.f32 %v1188, %v1568
        %v1570 = vpop.f32.mrb[0].mxu0
        %v1571 = vadd.f32 %v1190, %v1570
        %v1572 = vpop.f32.mrb[0].mxu0
        %v1573 = vadd.f32 %v1192, %v1572
        %1574 = vmatprep.mubr.bf16.mxu0 0
        %1575 = vmatmul.mubr.bf16.gmra.mrb[0].mxu0 %v1040
        %v1576 = vpop.f32.mrb[0].mxu0
        %v1577 = vadd.f32 %v1196, %v1576
        %v1578 = vpop.f32.mrb[0].mxu0
        %v1579 = vadd.f32 %v1198, %v1578
        %v1580 = vpop.f32.mrb[0].mxu0
        %v1581 = vadd.f32 %v1200, %v1580
        %v1582 = vpop.f32.mrb[0].mxu0
        %v1583 = vadd.f32 %v1202, %v1582
        %1584 = vmatprep.mubr.bf16.mxu0 0
        %1585 = vmatmul.mubr.bf16.gmra.mrb[0].mxu0 %v1043
        %v1586 = vpop.f32.mrb[0].mxu0
        %v1587 = vadd.f32 %v1206, %v1586
        %v1588 = vpop.f32.mrb[0].mxu0
        %v1589 = vadd.f32 %v1208, %v1588
        %v1590 = vpop.f32.mrb[0].mxu0
        %v1591 = vadd.f32 %v1210, %v1590
        %v1592 = vpop.f32.mrb[0].mxu0
        %v1593 = vadd.f32 %v1212, %v1592
        %1594 = vmatprep.mubr.bf16.mxu0 0
        %1595 = vmatmul.mubr.bf16.gmra.mrb[0].mxu0 %v1046
        %v1596 = vpop.f32.mrb[0].mxu0
        %v1597 = vadd.f32 %v1216, %v1596
        %v1598 = vpop.f32.mrb[0].mxu0
        %v1599 = vadd.f32 %v1218, %v1598
        %v1600 = vpop.f32.mrb[0].mxu0
        %v1601 = vadd.f32 %v1220, %v1600
        %v1602 = vpop.f32.mrb[0].mxu0
        %v1603 = vadd.f32 %v1222, %v1602
        %1604 = vmatprep.mubr.bf16.mxu0 0
        %1605 = vmatmul.mubr.bf16.gmra.mrb[0].mxu0 %v1049
        %v1606 = vpop.f32.mrb[0].mxu0
        %v1607 = vadd.f32 %v1226, %v1606
        %v1608 = vpop.f32.mrb[0].mxu0
        %v1609 = vadd.f32 %v1228, %v1608
        %v1610 = vpop.f32.mrb[0].mxu0
        %v1611 = vadd.f32 %v1230, %v1610
        %v1612 = vpop.f32.mrb[0].mxu0
        %v1613 = vadd.f32 %v1232, %v1612
        %1614 = vmatprep.mubr.bf16.mxu0 0
        %1615 = vmatmul.mubr.bf16.gmra.mrb[0].mxu0 %v1052
        %v1616 = vpop.f32.mrb[0].mxu0
        %v1617 = vadd.f32 %v1236, %v1616
        %v1618 = vpop.f32.mrb[0].mxu0
        %v1619 = vadd.f32 %v1238, %v1618
        %v1620 = vpop.f32.mrb[0].mxu0
        %v1621 = vadd.f32 %v1240, %v1620
        %v1622 = vpop.f32.mrb[0].mxu0
        %v1623 = vadd.f32 %v1242, %v1622
        %1624 = vmatprep.mubr.bf16.mxu0 0
        %1625 = vmatmul.mubr.bf16.gmra.mrb[0].mxu0 %v1055
        %v1626 = vpop.f32.mrb[0].mxu0
        %v1627 = vadd.f32 %v1246, %v1626
        %v1628 = vpop.f32.mrb[0].mxu0
        %v1629 = vadd.f32 %v1248, %v1628
        %v1630 = vpop.f32.mrb[0].mxu0
        %v1631 = vadd.f32 %v1250, %v1630
        %v1632 = vpop.f32.mrb[0].mxu0
        %v1633 = vadd.f32 %v1252, %v1632
        %1634 = vmatprep.mubr.bf16.mxu0 0
        %1635 = vmatmul.mubr.bf16.gmra.mrb[0].mxu0 %v1058
        %v1636 = vpop.f32.mrb[0].mxu0
        %v1637 = vadd.f32 %v1256, %v1636
        %v1638 = vpop.f32.mrb[0].mxu0
        %v1639 = vadd.f32 %v1258, %v1638
        %v1640 = vpop.f32.mrb[0].mxu0
        %v1641 = vadd.f32 %v1260, %v1640
        %v1642 = vpop.f32.mrb[0].mxu0
        %v1643 = vadd.f32 %v1262, %v1642
        %1644 = vmatprep.mubr.bf16.mxu0 0
        %1645 = vmatmul.mubr.bf16.gmra.mrb[0].mxu0 %v1061
        %v1646 = vpop.f32.mrb[0].mxu0
        %v1647 = vadd.f32 %v1266, %v1646
        %v1648 = vpop.f32.mrb[0].mxu0
        %v1649 = vadd.f32 %v1268, %v1648
        %v1650 = vpop.f32.mrb[0].mxu0
        %v1651 = vadd.f32 %v1270, %v1650
        %v1652 = vpop.f32.mrb[0].mxu0
        %v1653 = vadd.f32 %v1272, %v1652
        %1654 = vmatprep.mubr.bf16.mxu0 0
        %1655 = vmatmul.mubr.bf16.gmra.mrb[0].mxu0 %v1064
        %v1656 = vpop.f32.mrb[0].mxu0
        %v1657 = vadd.f32 %v1276, %v1656
        %v1658 = vpop.f32.mrb[0].mxu0
        %v1659 = vadd.f32 %v1278, %v1658
        %v1660 = vpop.f32.mrb[0].mxu0
        %v1661 = vadd.f32 %v1280, %v1660
        %v1662 = vpop.f32.mrb[0].mxu0
        %v1663 = vadd.f32 %v1282, %v1662
        %1664 = vmatprep.mubr.bf16.mxu0 0
        %1665 = vmatmul.mubr.bf16.gmra.mrb[0].mxu0 %v1067
        %v1666 = vpop.f32.mrb[0].mxu0
        %v1667 = vadd.f32 %v1286, %v1666
        %v1668 = vpop.f32.mrb[0].mxu0
        %v1669 = vadd.f32 %v1288, %v1668
        %v1670 = vpop.f32.mrb[0].mxu0
        %v1671 = vadd.f32 %v1290, %v1670
        %v1672 = vpop.f32.mrb[0].mxu0
        %v1673 = vadd.f32 %v1292, %v1672
        %1674 = vmatprep.mubr.bf16.mxu0 0
        %1675 = vmatmul.mubr.bf16.gmra.mrb[0].mxu0 %v1070
        %v1676 = vpop.f32.mrb[0].mxu0
        %v1677 = vadd.f32 %v1296, %v1676
        %v1678 = vpop.f32.mrb[0].mxu0
        %v1679 = vadd.f32 %v1298, %v1678
        %v1680 = vpop.f32.mrb[0].mxu0
        %v1681 = vadd.f32 %v1300, %v1680
        %v1682 = vpop.f32.mrb[0].mxu0
        %v1683 = vadd.f32 %v1302, %v1682
        %1684 = vmatprep.mubr.bf16.mxu0 0
        %1685 = vmatmul.mubr.bf16.gmra.mrb[0].mxu0 %v1073
        %v1686 = vpop.f32.mrb[0].mxu0
        %v1687 = vadd.f32 %v1306, %v1686
        %v1688 = vpop.f32.mrb[0].mxu0
        %v1689 = vadd.f32 %v1308, %v1688
        %v1690 = vpop.f32.mrb[0].mxu0
        %v1691 = vadd.f32 %v1310, %v1690
        %v1692 = vpop.f32.mrb[0].mxu0
        %v1693 = vadd.f32 %v1312, %v1692
        %1694 = vmatprep.mubr.bf16.mxu0 0
        %1695 = vmatmul.mubr.bf16.gmra.mrb[0].mxu0 %v1076
        %v1696 = vpop.f32.mrb[0].mxu0
        %v1697 = vadd.f32 %v1316, %v1696
        %v1698 = vpop.f32.mrb[0].mxu0
        %v1699 = vadd.f32 %v1318, %v1698
        %v1700 = vpop.f32.mrb[0].mxu0
        %v1701 = vadd.f32 %v1320, %v1700
        %v1702 = vpop.f32.mrb[0].mxu0
        %v1703 = vadd.f32 %v1322, %v1702
        %1704 = vmatprep.mubr.bf16.mxu0 0
        %1705 = vmatmul.mubr.bf16.gmra.mrb[0].mxu0 %v1079
        %v1706 = vpop.f32.mrb[0].mxu0
        %v1707 = vadd.f32 %v1326, %v1706
        %v1708 = vpop.f32.mrb[0].mxu0
        %v1709 = vadd.f32 %v1328, %v1708
        %v1710 = vpop.f32.mrb[0].mxu0
        %v1711 = vadd.f32 %v1330, %v1710
        %v1712 = vpop.f32.mrb[0].mxu0
        %v1713 = vadd.f32 %v1332, %v1712
        %1714 = vmatprep.mubr.bf16.mxu0 0
        %1715 = vmatmul.mubr.bf16.gmra.mrb[0].mxu0 %v1082
        %v1716 = vpop.f32.mrb[0].mxu0
        %v1717 = vadd.f32 %v1336, %v1716
        %v1718 = vpop.f32.mrb[0].mxu0
        %v1719 = vadd.f32 %v1338, %v1718
        %v1720 = vpop.f32.mrb[0].mxu0
        %v1721 = vadd.f32 %v1340, %v1720
        %v1722 = vpop.f32.mrb[0].mxu0
        %v1723 = vadd.f32 %v1342, %v1722
        %1724 = vmatprep.mubr.bf16.mxu0 0
        %1725 = vmatmul.mubr.bf16.gmra.mrb[0].mxu0 %v1085
        %v1726 = vpop.f32.mrb[0].mxu0
        %v1727 = vadd.f32 %v1346, %v1726
        %v1728 = vpop.f32.mrb[0].mxu0
        %v1729 = vadd.f32 %v1348, %v1728
        %v1730 = vpop.f32.mrb[0].mxu0
        %v1731 = vadd.f32 %v1350, %v1730
        %v1732 = vpop.f32.mrb[0].mxu0
        %v1733 = vadd.f32 %v1352, %v1732
        %1734 = vmatprep.mubr.bf16.mxu0 0
        %1735 = vmatmul.mubr.bf16.gmra.mrb[0].mxu0 %v1088
        %v1736 = vpop.f32.mrb[0].mxu0
        %v1737 = vadd.f32 %v1356, %v1736
        %v1738 = vpop.f32.mrb[0].mxu0
        %v1739 = vadd.f32 %v1358, %v1738
        %v1740 = vpop.f32.mrb[0].mxu0
        %v1741 = vadd.f32 %v1360, %v1740
        %v1742 = vpop.f32.mrb[0].mxu0
        %v1743 = vadd.f32 %v1362, %v1742
        %1744 = vmatprep.mubr.bf16.mxu0 0
        %1745 = vmatmul.mubr.bf16.gmra.mrb[0].mxu0 %v1091
        %v1746 = vpop.f32.mrb[0].mxu0
        %v1747 = vadd.f32 %v1366, %v1746
        %v1748 = vpop.f32.mrb[0].mxu0
        %v1749 = vadd.f32 %v1368, %v1748
        %v1750 = vpop.f32.mrb[0].mxu0
        %v1751 = vadd.f32 %v1370, %v1750
        %v1752 = vpop.f32.mrb[0].mxu0
        %v1753 = vadd.f32 %v1372, %v1752
        %1754 = vmatprep.mubr.bf16.mxu0 0
        %1755 = vmatmul.mubr.bf16.gmra.mrb[0].mxu0 %v1094
        %v1756 = vpop.f32.mrb[0].mxu0
        %v1757 = vadd.f32 %v1376, %v1756
        %v1758 = vpop.f32.mrb[0].mxu0
        %v1759 = vadd.f32 %v1378, %v1758
        %v1760 = vpop.f32.mrb[0].mxu0
        %v1761 = vadd.f32 %v1380, %v1760
        %v1762 = vpop.f32.mrb[0].mxu0
        %v1763 = vadd.f32 %v1382, %v1762
        %1764 = vmatprep.mubr.bf16.mxu0 0
        %1765 = vmatmul.mubr.bf16.gmra.mrb[0].mxu0 %v1097
        %v1766 = vpop.f32.mrb[0].mxu0
        %v1767 = vadd.f32 %v1386, %v1766
        %v1768 = vpop.f32.mrb[0].mxu0
        %v1769 = vadd.f32 %v1388, %v1768
        %v1770 = vpop.f32.mrb[0].mxu0
        %v1771 = vadd.f32 %v1390, %v1770
        %v1772 = vpop.f32.mrb[0].mxu0
        %v1773 = vadd.f32 %v1392, %v1772
        %1774 = vmatprep.mubr.bf16.mxu0 0
        %1775 = vmatmul.mubr.bf16.gmra.mrb[0].mxu0 %v1100
        %v1776 = vpop.f32.mrb[0].mxu0
        %v1777 = vadd.f32 %v1396, %v1776
        %v1778 = vpop.f32.mrb[0].mxu0
        %v1779 = vadd.f32 %v1398, %v1778
        %v1780 = vpop.f32.mrb[0].mxu0
        %v1781 = vadd.f32 %v1400, %v1780
        %v1782 = vpop.f32.mrb[0].mxu0
        %v1783 = vadd.f32 %v1402, %v1782
        %1784 = vmatprep.mubr.bf16.mxu0 0
        %1785 = vmatmul.mubr.bf16.gmra.mrb[0].mxu0 %v1103
        %v1786 = vpop.f32.mrb[0].mxu0
        %v1787 = vadd.f32 %v1406, %v1786
        %v1788 = vpop.f32.mrb[0].mxu0
        %v1789 = vadd.f32 %v1408, %v1788
        %v1790 = vpop.f32.mrb[0].mxu0
        %v1791 = vadd.f32 %v1410, %v1790
        %v1792 = vpop.f32.mrb[0].mxu0
        %v1793 = vadd.f32 %v1412, %v1792
        %1794 = vmatprep.mubr.bf16.mxu0 0
        %1795 = vmatmul.mubr.bf16.gmra.mrb[0].mxu0 %v1106
        %v1796 = vpop.f32.mrb[0].mxu0
        %v1797 = vadd.f32 %v1416, %v1796
        %v1798 = vpop.f32.mrb[0].mxu0
        %v1799 = vadd.f32 %v1418, %v1798
        %v1800 = vpop.f32.mrb[0].mxu0
        %v1801 = vadd.f32 %v1420, %v1800
        %v1802 = vpop.f32.mrb[0].mxu0
        %v1803 = vadd.f32 %v1422, %v1802
        %1804 = vdwg.mxu0
        %s1805 = scalar_lea.vmem %s1, 192
        %v1806 = vld [vmem:[%s1805] sm:$0xff]
        %v1807 = vld [vmem:[%s1805 + $0x8] sm:$0xff]
        %v1808 = vld [vmem:[%s1805 + $0x10] sm:$0xff]
        %v1809 = vld [vmem:[%s1805 + $0x18] sm:$0xff]
        %v1810 = vld [vmem:[%s1805 + $0x20] sm:$0xff]
        %v1811 = vld [vmem:[%s1805 + $0x28] sm:$0xff]
        %v1812 = vld [vmem:[%s1805 + $0x30] sm:$0xff]
        %v1813 = vld [vmem:[%s1805 + $0x38] sm:$0xff]
        %v1814 = vld [vmem:[%s1805 + $0x40] sm:$0xff]
        %v1815 = vld [vmem:[%s1805 + $0x48] sm:$0xff]
        %v1816 = vld [vmem:[%s1805 + $0x50] sm:$0xff]
        %v1817 = vld [vmem:[%s1805 + $0x58] sm:$0xff]
        %v1820 = vunpack.c.l.b16 %v795
        %v1821 = vunpack.c.l.b16 %v796
        %v1822 = vpack.c.b16 %v1821, %v1820
        %v1835 = vunpack.c.l.b16 %v1806
        %v1836 = vunpack.c.h.b16 %v1806
        %v1837 = vunpack.c.l.b16 %v1807
        %v1838 = vunpack.c.h.b16 %v1807
        %v1839 = vunpack.c.l.b16 %v1808
        %v1840 = vunpack.c.h.b16 %v1808
        %v1841 = vunpack.c.l.b16 %v1809
        %v1842 = vunpack.c.h.b16 %v1809
        %v1843 = vunpack.c.l.b16 %v1810
        %v1844 = vunpack.c.h.b16 %v1810
        %v1845 = vunpack.c.l.b16 %v1811
        %v1846 = vunpack.c.h.b16 %v1811
        %v1847 = vunpack.c.l.b16 %v1812
        %v1848 = vunpack.c.h.b16 %v1812
        %v1849 = vunpack.c.l.b16 %v1813
        %v1850 = vunpack.c.h.b16 %v1813
        %v1851 = vunpack.c.l.b16 %v1814
        %v1852 = vunpack.c.h.b16 %v1814
        %v1853 = vunpack.c.l.b16 %v1815
        %v1854 = vunpack.c.h.b16 %v1815
        %v1855 = vunpack.c.l.b16 %v1816
        %v1856 = vunpack.c.h.b16 %v1816
        %v1857 = vunpack.c.l.b16 %v1817
        %v1858 = vunpack.c.h.b16 %v1817
        %v1859 = vpack.c.b16 %v1837, %v1835
        %v1860 = vpack.c.b16 %v1838, %v1836
        %v1861 = vpack.c.b16 %v1841, %v1839
        %v1862 = vpack.c.b16 %v1842, %v1840
        %v1863 = vpack.c.b16 %v1845, %v1843
        %v1864 = vpack.c.b16 %v1846, %v1844
        %v1865 = vpack.c.b16 %v1849, %v1847
        %v1866 = vpack.c.b16 %v1850, %v1848
        %v1867 = vpack.c.b16 %v1853, %v1851
        %v1868 = vpack.c.b16 %v1854, %v1852
        %v1869 = vpack.c.b16 %v1857, %v1855
        %v1870 = vpack.c.b16 %v1858, %v1856
        %v1884 = vsel %vm1026, %v1822, 0
        %1886 = vmatprep.subr.bf16.mxu0 %v1860
        %1887 = vmatpush1.bf16.msra.mxu0 %v1859
        %1888 = vmatprep.subr.bf16.mxu0 %v1862
        %1889 = vmatpush1.bf16.msra.mxu0 %v1861
        %1890 = vmatprep.subr.bf16.mxu0 %v1864
        %1891 = vmatpush1.bf16.msra.mxu0 %v1863
        %1892 = vmatprep.subr.bf16.mxu0 %v1866
        %1893 = vmatpush1.bf16.msra.mxu0 %v1865
        %1894 = vmatprep.subr.bf16.mxu0 %v1868
        %1895 = vmatpush1.bf16.msra.mxu0 %v1867
        %1896 = vmatprep.subr.bf16.mxu0 %v1870
        %1897 = vmatpush1.bf16.msra.mxu0 %v1869
        %1898 = vmatprep.subr.bf16.mxu0 0
        %1899 = vmatpush1.bf16.msra.mxu0 0
        %1900 = vmatprep.subr.bf16.mxu0 0
        %1901 = vmatpush1.bf16.msra.mxu0 0
        %1902 = vmatprep.subr.bf16.mxu0 0
        %1903 = vmatpush1.bf16.msra.mxu0 0
        %1904 = vmatprep.subr.bf16.mxu0 0
        %1905 = vmatpush1.bf16.msra.mxu0 0
        %1906 = vmatprep.subr.bf16.mxu0 0
        %1907 = vmatpush1.bf16.msra.mxu0 0
        %1908 = vmatprep.subr.bf16.mxu0 0
        %1909 = vmatpush1.bf16.msra.mxu0 0
        %1910 = vmatprep.subr.bf16.mxu0 0
        %1911 = vmatpush1.bf16.msra.mxu0 0
        %1912 = vmatprep.subr.bf16.mxu0 0
        %1913 = vmatpush1.bf16.msra.mxu0 0
        %1914 = vmatprep.subr.bf16.mxu0 0
        %1915 = vmatpush1.bf16.msra.mxu0 0
        %1916 = vmatprep.subr.bf16.mxu0 0
        %1917 = vmatpush1.bf16.msra.mxu0 0
        %1918 = vmatprep.mubr.bf16.mxu0 0
        %1919 = vmatmul.mubr.bf16.gmra.mrb[0].mxu0 %v1031
        %v1920 = vpop.f32.mrb[0].mxu0
        %v1921 = vadd.f32 0.0, %v1920
        %v1922 = vpop.f32.mrb[0].mxu0
        %v1923 = vadd.f32 0.0, %v1922
        %v1924 = vpop.f32.mrb[0].mxu0
        %v1925 = vadd.f32 0.0, %v1924
        %v1926 = vpop.f32.mrb[0].mxu0
        %v1927 = vadd.f32 0.0, %v1926
        %1928 = vmatprep.mubr.bf16.mxu0 0
        %1929 = vmatmul.mubr.bf16.gmra.mrb[0].mxu0 %v1034
        %v1930 = vpop.f32.mrb[0].mxu0
        %v1931 = vadd.f32 0.0, %v1930
        %v1932 = vpop.f32.mrb[0].mxu0
        %v1933 = vadd.f32 0.0, %v1932
        %v1934 = vpop.f32.mrb[0].mxu0
        %v1935 = vadd.f32 0.0, %v1934
        %v1936 = vpop.f32.mrb[0].mxu0
        %v1937 = vadd.f32 0.0, %v1936
        %1938 = vmatprep.mubr.bf16.mxu0 0
        %1939 = vmatmul.mubr.bf16.gmra.mrb[0].mxu0 %v1037
        %v1940 = vpop.f32.mrb[0].mxu0
        %v1941 = vadd.f32 0.0, %v1940
        %v1942 = vpop.f32.mrb[0].mxu0
        %v1943 = vadd.f32 0.0, %v1942
        %v1944 = vpop.f32.mrb[0].mxu0
        %v1945 = vadd.f32 0.0, %v1944
        %v1946 = vpop.f32.mrb[0].mxu0
        %v1947 = vadd.f32 0.0, %v1946
        %1948 = vmatprep.mubr.bf16.mxu0 0
        %1949 = vmatmul.mubr.bf16.gmra.mrb[0].mxu0 %v1040
        %v1950 = vpop.f32.mrb[0].mxu0
        %v1951 = vadd.f32 0.0, %v1950
        %v1952 = vpop.f32.mrb[0].mxu0
        %v1953 = vadd.f32 0.0, %v1952
        %v1954 = vpop.f32.mrb[0].mxu0
        %v1955 = vadd.f32 0.0, %v1954
        %v1956 = vpop.f32.mrb[0].mxu0
        %v1957 = vadd.f32 0.0, %v1956
        %1958 = vmatprep.mubr.bf16.mxu0 0
        %1959 = vmatmul.mubr.bf16.gmra.mrb[0].mxu0 %v1043
        %v1960 = vpop.f32.mrb[0].mxu0
        %v1961 = vadd.f32 0.0, %v1960
        %v1962 = vpop.f32.mrb[0].mxu0
        %v1963 = vadd.f32 0.0, %v1962
        %v1964 = vpop.f32.mrb[0].mxu0
        %v1965 = vadd.f32 0.0, %v1964
        %v1966 = vpop.f32.mrb[0].mxu0
        %v1967 = vadd.f32 0.0, %v1966
        %1968 = vmatprep.mubr.bf16.mxu0 0
        %1969 = vmatmul.mubr.bf16.gmra.mrb[0].mxu0 %v1046
        %v1970 = vpop.f32.mrb[0].mxu0
        %v1971 = vadd.f32 0.0, %v1970
        %v1972 = vpop.f32.mrb[0].mxu0
        %v1973 = vadd.f32 0.0, %v1972
        %v1974 = vpop.f32.mrb[0].mxu0
        %v1975 = vadd.f32 0.0, %v1974
        %v1976 = vpop.f32.mrb[0].mxu0
        %v1977 = vadd.f32 0.0, %v1976
        %1978 = vmatprep.mubr.bf16.mxu0 0
        %1979 = vmatmul.mubr.bf16.gmra.mrb[0].mxu0 %v1049
        %v1980 = vpop.f32.mrb[0].mxu0
        %v1981 = vadd.f32 0.0, %v1980
        %v1982 = vpop.f32.mrb[0].mxu0
        %v1983 = vadd.f32 0.0, %v1982
        %v1984 = vpop.f32.mrb[0].mxu0
        %v1985 = vadd.f32 0.0, %v1984
        %v1986 = vpop.f32.mrb[0].mxu0
        %v1987 = vadd.f32 0.0, %v1986
        %1988 = vmatprep.mubr.bf16.mxu0 0
        %1989 = vmatmul.mubr.bf16.gmra.mrb[0].mxu0 %v1052
        %v1990 = vpop.f32.mrb[0].mxu0
        %v1991 = vadd.f32 0.0, %v1990
        %v1992 = vpop.f32.mrb[0].mxu0
        %v1993 = vadd.f32 0.0, %v1992
        %v1994 = vpop.f32.mrb[0].mxu0
        %v1995 = vadd.f32 0.0, %v1994
        %v1996 = vpop.f32.mrb[0].mxu0
        %v1997 = vadd.f32 0.0, %v1996
        %1998 = vmatprep.mubr.bf16.mxu0 0
        %1999 = vmatmul.mubr.bf16.gmra.mrb[0].mxu0 %v1055
        %v2000 = vpop.f32.mrb[0].mxu0
        %v2001 = vadd.f32 0.0, %v2000
        %v2002 = vpop.f32.mrb[0].mxu0
        %v2003 = vadd.f32 0.0, %v2002
        %v2004 = vpop.f32.mrb[0].mxu0
        %v2005 = vadd.f32 0.0, %v2004
        %v2006 = vpop.f32.mrb[0].mxu0
        %v2007 = vadd.f32 0.0, %v2006
        %2008 = vmatprep.mubr.bf16.mxu0 0
        %2009 = vmatmul.mubr.bf16.gmra.mrb[0].mxu0 %v1058
        %v2010 = vpop.f32.mrb[0].mxu0
        %v2011 = vadd.f32 0.0, %v2010
        %v2012 = vpop.f32.mrb[0].mxu0
        %v2013 = vadd.f32 0.0, %v2012
        %v2014 = vpop.f32.mrb[0].mxu0
        %v2015 = vadd.f32 0.0, %v2014
        %v2016 = vpop.f32.mrb[0].mxu0
        %v2017 = vadd.f32 0.0, %v2016
        %2018 = vmatprep.mubr.bf16.mxu0 0
        %2019 = vmatmul.mubr.bf16.gmra.mrb[0].mxu0 %v1061
        %v2020 = vpop.f32.mrb[0].mxu0
        %v2021 = vadd.f32 0.0, %v2020
        %v2022 = vpop.f32.mrb[0].mxu0
        %v2023 = vadd.f32 0.0, %v2022
        %v2024 = vpop.f32.mrb[0].mxu0
        %v2025 = vadd.f32 0.0, %v2024
        %v2026 = vpop.f32.mrb[0].mxu0
        %v2027 = vadd.f32 0.0, %v2026
        %2028 = vmatprep.mubr.bf16.mxu0 0
        %2029 = vmatmul.mubr.bf16.gmra.mrb[0].mxu0 %v1064
        %v2030 = vpop.f32.mrb[0].mxu0
        %v2031 = vadd.f32 0.0, %v2030
        %v2032 = vpop.f32.mrb[0].mxu0
        %v2033 = vadd.f32 0.0, %v2032
        %v2034 = vpop.f32.mrb[0].mxu0
        %v2035 = vadd.f32 0.0, %v2034
        %v2036 = vpop.f32.mrb[0].mxu0
        %v2037 = vadd.f32 0.0, %v2036
        %2038 = vmatprep.mubr.bf16.mxu0 0
        %2039 = vmatmul.mubr.bf16.gmra.mrb[0].mxu0 %v1067
        %v2040 = vpop.f32.mrb[0].mxu0
        %v2041 = vadd.f32 0.0, %v2040
        %v2042 = vpop.f32.mrb[0].mxu0
        %v2043 = vadd.f32 0.0, %v2042
        %v2044 = vpop.f32.mrb[0].mxu0
        %v2045 = vadd.f32 0.0, %v2044
        %v2046 = vpop.f32.mrb[0].mxu0
        %v2047 = vadd.f32 0.0, %v2046
        %2048 = vmatprep.mubr.bf16.mxu0 0
        %2049 = vmatmul.mubr.bf16.gmra.mrb[0].mxu0 %v1070
        %v2050 = vpop.f32.mrb[0].mxu0
        %v2051 = vadd.f32 0.0, %v2050
        %v2052 = vpop.f32.mrb[0].mxu0
        %v2053 = vadd.f32 0.0, %v2052
        %v2054 = vpop.f32.mrb[0].mxu0
        %v2055 = vadd.f32 0.0, %v2054
        %v2056 = vpop.f32.mrb[0].mxu0
        %v2057 = vadd.f32 0.0, %v2056
        %2058 = vmatprep.mubr.bf16.mxu0 0
        %2059 = vmatmul.mubr.bf16.gmra.mrb[0].mxu0 %v1073
        %v2060 = vpop.f32.mrb[0].mxu0
        %v2061 = vadd.f32 0.0, %v2060
        %v2062 = vpop.f32.mrb[0].mxu0
        %v2063 = vadd.f32 0.0, %v2062
        %v2064 = vpop.f32.mrb[0].mxu0
        %v2065 = vadd.f32 0.0, %v2064
        %v2066 = vpop.f32.mrb[0].mxu0
        %v2067 = vadd.f32 0.0, %v2066
        %2068 = vmatprep.mubr.bf16.mxu0 0
        %2069 = vmatmul.mubr.bf16.gmra.mrb[0].mxu0 %v1076
        %v2070 = vpop.f32.mrb[0].mxu0
        %v2071 = vadd.f32 0.0, %v2070
        %v2072 = vpop.f32.mrb[0].mxu0
        %v2073 = vadd.f32 0.0, %v2072
        %v2074 = vpop.f32.mrb[0].mxu0
        %v2075 = vadd.f32 0.0, %v2074
        %v2076 = vpop.f32.mrb[0].mxu0
        %v2077 = vadd.f32 0.0, %v2076
        %2078 = vmatprep.mubr.bf16.mxu0 0
        %2079 = vmatmul.mubr.bf16.gmra.mrb[0].mxu0 %v1079
        %v2080 = vpop.f32.mrb[0].mxu0
        %v2081 = vadd.f32 0.0, %v2080
        %v2082 = vpop.f32.mrb[0].mxu0
        %v2083 = vadd.f32 0.0, %v2082
        %v2084 = vpop.f32.mrb[0].mxu0
        %v2085 = vadd.f32 0.0, %v2084
        %v2086 = vpop.f32.mrb[0].mxu0
        %v2087 = vadd.f32 0.0, %v2086
        %2088 = vmatprep.mubr.bf16.mxu0 0
        %2089 = vmatmul.mubr.bf16.gmra.mrb[0].mxu0 %v1082
        %v2090 = vpop.f32.mrb[0].mxu0
        %v2091 = vadd.f32 0.0, %v2090
        %v2092 = vpop.f32.mrb[0].mxu0
        %v2093 = vadd.f32 0.0, %v2092
        %v2094 = vpop.f32.mrb[0].mxu0
        %v2095 = vadd.f32 0.0, %v2094
        %v2096 = vpop.f32.mrb[0].mxu0
        %v2097 = vadd.f32 0.0, %v2096
        %2098 = vmatprep.mubr.bf16.mxu0 0
        %2099 = vmatmul.mubr.bf16.gmra.mrb[0].mxu0 %v1085
        %v2100 = vpop.f32.mrb[0].mxu0
        %v2101 = vadd.f32 0.0, %v2100
        %v2102 = vpop.f32.mrb[0].mxu0
        %v2103 = vadd.f32 0.0, %v2102
        %v2104 = vpop.f32.mrb[0].mxu0
        %v2105 = vadd.f32 0.0, %v2104
        %v2106 = vpop.f32.mrb[0].mxu0
        %v2107 = vadd.f32 0.0, %v2106
        %2108 = vmatprep.mubr.bf16.mxu0 0
        %2109 = vmatmul.mubr.bf16.gmra.mrb[0].mxu0 %v1088
        %v2110 = vpop.f32.mrb[0].mxu0
        %v2111 = vadd.f32 0.0, %v2110
        %v2112 = vpop.f32.mrb[0].mxu0
        %v2113 = vadd.f32 0.0, %v2112
        %v2114 = vpop.f32.mrb[0].mxu0
        %v2115 = vadd.f32 0.0, %v2114
        %v2116 = vpop.f32.mrb[0].mxu0
        %v2117 = vadd.f32 0.0, %v2116
        %2118 = vmatprep.mubr.bf16.mxu0 0
        %2119 = vmatmul.mubr.bf16.gmra.mrb[0].mxu0 %v1091
        %v2120 = vpop.f32.mrb[0].mxu0
        %v2121 = vadd.f32 0.0, %v2120
        %v2122 = vpop.f32.mrb[0].mxu0
        %v2123 = vadd.f32 0.0, %v2122
        %v2124 = vpop.f32.mrb[0].mxu0
        %v2125 = vadd.f32 0.0, %v2124
        %v2126 = vpop.f32.mrb[0].mxu0
        %v2127 = vadd.f32 0.0, %v2126
        %2128 = vmatprep.mubr.bf16.mxu0 0
        %2129 = vmatmul.mubr.bf16.gmra.mrb[0].mxu0 %v1094
        %v2130 = vpop.f32.mrb[0].mxu0
        %v2131 = vadd.f32 0.0, %v2130
        %v2132 = vpop.f32.mrb[0].mxu0
        %v2133 = vadd.f32 0.0, %v2132
        %v2134 = vpop.f32.mrb[0].mxu0
        %v2135 = vadd.f32 0.0, %v2134
        %v2136 = vpop.f32.mrb[0].mxu0
        %v2137 = vadd.f32 0.0, %v2136
        %2138 = vmatprep.mubr.bf16.mxu0 0
        %2139 = vmatmul.mubr.bf16.gmra.mrb[0].mxu0 %v1097
        %v2140 = vpop.f32.mrb[0].mxu0
        %v2141 = vadd.f32 0.0, %v2140
        %v2142 = vpop.f32.mrb[0].mxu0
        %v2143 = vadd.f32 0.0, %v2142
        %v2144 = vpop.f32.mrb[0].mxu0
        %v2145 = vadd.f32 0.0, %v2144
        %v2146 = vpop.f32.mrb[0].mxu0
        %v2147 = vadd.f32 0.0, %v2146
        %2148 = vmatprep.mubr.bf16.mxu0 0
        %2149 = vmatmul.mubr.bf16.gmra.mrb[0].mxu0 %v1100
        %v2150 = vpop.f32.mrb[0].mxu0
        %v2151 = vadd.f32 0.0, %v2150
        %v2152 = vpop.f32.mrb[0].mxu0
        %v2153 = vadd.f32 0.0, %v2152
        %v2154 = vpop.f32.mrb[0].mxu0
        %v2155 = vadd.f32 0.0, %v2154
        %v2156 = vpop.f32.mrb[0].mxu0
        %v2157 = vadd.f32 0.0, %v2156
        %2158 = vmatprep.mubr.bf16.mxu0 0
        %2159 = vmatmul.mubr.bf16.gmra.mrb[0].mxu0 %v1103
        %v2160 = vpop.f32.mrb[0].mxu0
        %v2161 = vadd.f32 0.0, %v2160
        %v2162 = vpop.f32.mrb[0].mxu0
        %v2163 = vadd.f32 0.0, %v2162
        %v2164 = vpop.f32.mrb[0].mxu0
        %v2165 = vadd.f32 0.0, %v2164
        %v2166 = vpop.f32.mrb[0].mxu0
        %v2167 = vadd.f32 0.0, %v2166
        %2168 = vmatprep.mubr.bf16.mxu0 0
        %2169 = vmatmul.mubr.bf16.gmra.mrb[0].mxu0 %v1106
        %v2170 = vpop.f32.mrb[0].mxu0
        %v2171 = vadd.f32 0.0, %v2170
        %v2172 = vpop.f32.mrb[0].mxu0
        %v2173 = vadd.f32 0.0, %v2172
        %v2174 = vpop.f32.mrb[0].mxu0
        %v2175 = vadd.f32 0.0, %v2174
        %v2176 = vpop.f32.mrb[0].mxu0
        %v2177 = vadd.f32 0.0, %v2176
        %2178 = vmatprep.mubr.bf16.mxu0 0
        %2179 = vmatmul.mubr.bf16.gmra.mrb[0].mxu0 %v1109
        %v2180 = vpop.f32.mrb[0].mxu0
        %v2181 = vadd.f32 0.0, %v2180
        %v2182 = vpop.f32.mrb[0].mxu0
        %v2183 = vadd.f32 0.0, %v2182
        %v2184 = vpop.f32.mrb[0].mxu0
        %v2185 = vadd.f32 0.0, %v2184
        %v2186 = vpop.f32.mrb[0].mxu0
        %v2187 = vadd.f32 0.0, %v2186
        %2188 = vmatprep.mubr.bf16.mxu0 0
        %2189 = vmatmul.mubr.bf16.gmra.mrb[0].mxu0 %v1884
        %v2190 = vpop.f32.mrb[0].mxu0
        %v2191 = vadd.f32 0.0, %v2190
        %v2192 = vpop.f32.mrb[0].mxu0
        %v2193 = vadd.f32 0.0, %v2192
        %v2194 = vpop.f32.mrb[0].mxu0
        %v2195 = vadd.f32 0.0, %v2194
        %v2196 = vpop.f32.mrb[0].mxu0
        %v2197 = vadd.f32 0.0, %v2196
        %2198 = vdwg.mxu0
        %v2199 = vadd.f32 %v1527, %v1921
        %v2200 = vadd.f32 %v1529, %v1923
        %v2201 = vadd.f32 %v1531, %v1925
        %v2202 = vadd.f32 %v1533, %v1927
        %v2203 = vadd.f32 %v1537, %v1931
        %v2204 = vadd.f32 %v1539, %v1933
        %v2205 = vadd.f32 %v1541, %v1935
        %v2206 = vadd.f32 %v1543, %v1937
        %v2207 = vadd.f32 %v1547, %v1941
        %v2208 = vadd.f32 %v1549, %v1943
        %v2209 = vadd.f32 %v1551, %v1945
        %v2210 = vadd.f32 %v1553, %v1947
        %v2211 = vadd.f32 %v1557, %v1951
        %v2212 = vadd.f32 %v1559, %v1953
        %v2213 = vadd.f32 %v1561, %v1955
        %v2214 = vadd.f32 %v1563, %v1957
        %v2215 = vadd.f32 %v1567, %v1961
        %v2216 = vadd.f32 %v1569, %v1963
        %v2217 = vadd.f32 %v1571, %v1965
        %v2218 = vadd.f32 %v1573, %v1967
        %v2219 = vadd.f32 %v1577, %v1971
        %v2220 = vadd.f32 %v1579, %v1973
        %v2221 = vadd.f32 %v1581, %v1975
        %v2222 = vadd.f32 %v1583, %v1977
        %v2223 = vadd.f32 %v1587, %v1981
        %v2224 = vadd.f32 %v1589, %v1983
        %v2225 = vadd.f32 %v1591, %v1985
        %v2226 = vadd.f32 %v1593, %v1987
        %v2227 = vadd.f32 %v1597, %v1991
        %v2228 = vadd.f32 %v1599, %v1993
        %v2229 = vadd.f32 %v1601, %v1995
        %v2230 = vadd.f32 %v1603, %v1997
        %v2231 = vadd.f32 %v1607, %v2001
        %v2232 = vadd.f32 %v1609, %v2003
        %v2233 = vadd.f32 %v1611, %v2005
        %v2234 = vadd.f32 %v1613, %v2007
        %v2235 = vadd.f32 %v1617, %v2011
        %v2236 = vadd.f32 %v1619, %v2013
        %v2237 = vadd.f32 %v1621, %v2015
        %v2238 = vadd.f32 %v1623, %v2017
        %v2239 = vadd.f32 %v1627, %v2021
        %v2240 = vadd.f32 %v1629, %v2023
        %v2241 = vadd.f32 %v1631, %v2025
        %v2242 = vadd.f32 %v1633, %v2027
        %v2243 = vadd.f32 %v1637, %v2031
        %v2244 = vadd.f32 %v1639, %v2033
        %v2245 = vadd.f32 %v1641, %v2035
        %v2246 = vadd.f32 %v1643, %v2037
        %v2247 = vadd.f32 %v1647, %v2041
        %v2248 = vadd.f32 %v1649, %v2043
        %v2249 = vadd.f32 %v1651, %v2045
        %v2250 = vadd.f32 %v1653, %v2047
        %v2251 = vadd.f32 %v1657, %v2051
        %v2252 = vadd.f32 %v1659, %v2053
        %v2253 = vadd.f32 %v1661, %v2055
        %v2254 = vadd.f32 %v1663, %v2057
        %v2255 = vadd.f32 %v1667, %v2061
        %v2256 = vadd.f32 %v1669, %v2063
        %v2257 = vadd.f32 %v1671, %v2065
        %v2258 = vadd.f32 %v1673, %v2067
        %v2259 = vadd.f32 %v1677, %v2071
        %v2260 = vadd.f32 %v1679, %v2073
        %v2261 = vadd.f32 %v1681, %v2075
        %v2262 = vadd.f32 %v1683, %v2077
        %v2263 = vadd.f32 %v1687, %v2081
        %v2264 = vadd.f32 %v1689, %v2083
        %v2265 = vadd.f32 %v1691, %v2085
        %v2266 = vadd.f32 %v1693, %v2087
        %v2267 = vadd.f32 %v1697, %v2091
        %v2268 = vadd.f32 %v1699, %v2093
        %v2269 = vadd.f32 %v1701, %v2095
        %v2270 = vadd.f32 %v1703, %v2097
        %v2271 = vadd.f32 %v1707, %v2101
        %v2272 = vadd.f32 %v1709, %v2103
        %v2273 = vadd.f32 %v1711, %v2105
        %v2274 = vadd.f32 %v1713, %v2107
        %v2275 = vadd.f32 %v1717, %v2111
        %v2276 = vadd.f32 %v1719, %v2113
        %v2277 = vadd.f32 %v1721, %v2115
        %v2278 = vadd.f32 %v1723, %v2117
        %v2279 = vadd.f32 %v1727, %v2121
        %v2280 = vadd.f32 %v1729, %v2123
        %v2281 = vadd.f32 %v1731, %v2125
        %v2282 = vadd.f32 %v1733, %v2127
        %v2283 = vadd.f32 %v1737, %v2131
        %v2284 = vadd.f32 %v1739, %v2133
        %v2285 = vadd.f32 %v1741, %v2135
        %v2286 = vadd.f32 %v1743, %v2137
        %v2287 = vadd.f32 %v1747, %v2141
        %v2288 = vadd.f32 %v1749, %v2143
        %v2289 = vadd.f32 %v1751, %v2145
        %v2290 = vadd.f32 %v1753, %v2147
        %v2291 = vadd.f32 %v1757, %v2151
        %v2292 = vadd.f32 %v1759, %v2153
        %v2293 = vadd.f32 %v1761, %v2155
        %v2294 = vadd.f32 %v1763, %v2157
        %v2295 = vadd.f32 %v1767, %v2161
        %v2296 = vadd.f32 %v1769, %v2163
        %v2297 = vadd.f32 %v1771, %v2165
        %v2298 = vadd.f32 %v1773, %v2167
        %v2299 = vadd.f32 %v1777, %v2171
        %v2300 = vadd.f32 %v1779, %v2173
        %v2301 = vadd.f32 %v1781, %v2175
        %v2302 = vadd.f32 %v1783, %v2177
        %v2303 = vadd.f32 %v1787, %v2181
        %v2304 = vadd.f32 %v1789, %v2183
        %v2305 = vadd.f32 %v1791, %v2185
        %v2306 = vadd.f32 %v1793, %v2187
        %v2307 = vadd.f32 %v1797, %v2191
        %v2308 = vadd.f32 %v1799, %v2193
        %v2309 = vadd.f32 %v1801, %v2195
        %v2310 = vadd.f32 %v1803, %v2197
        %s2311 = scalar_lea.vmem %s1, 288
        %v2312 = vld [vmem:[%s2311] sm:$0xff]
        %v2313 = vld [vmem:[%s2311 + $0x8] sm:$0xff]
        %v2314 = vld [vmem:[%s2311 + $0x10] sm:$0xff]
        %v2315 = vld [vmem:[%s2311 + $0x18] sm:$0xff]
        %v2316 = vld [vmem:[%s2311 + $0x20] sm:$0xff]
        %v2317 = vld [vmem:[%s2311 + $0x28] sm:$0xff]
        %v2318 = vld [vmem:[%s2311 + $0x30] sm:$0xff]
        %v2319 = vld [vmem:[%s2311 + $0x38] sm:$0xff]
        %v2320 = vld [vmem:[%s2311 + $0x40] sm:$0xff]
        %v2321 = vld [vmem:[%s2311 + $0x48] sm:$0xff]
        %v2322 = vld [vmem:[%s2311 + $0x50] sm:$0xff]
        %v2323 = vld [vmem:[%s2311 + $0x58] sm:$0xff]
        %v2326 = vunpack.c.l.b16 %v797
        %v2327 = vunpack.c.l.b16 %v798
        %v2328 = vpack.c.b16 %v2327, %v2326
        %v2341 = vunpack.c.l.b16 %v2312
        %v2342 = vunpack.c.h.b16 %v2312
        %v2343 = vunpack.c.l.b16 %v2313
        %v2344 = vunpack.c.h.b16 %v2313
        %v2345 = vunpack.c.l.b16 %v2314
        %v2346 = vunpack.c.h.b16 %v2314
        %v2347 = vunpack.c.l.b16 %v2315
        %v2348 = vunpack.c.h.b16 %v2315
        %v2349 = vunpack.c.l.b16 %v2316
        %v2350 = vunpack.c.h.b16 %v2316
        %v2351 = vunpack.c.l.b16 %v2317
        %v2352 = vunpack.c.h.b16 %v2317
        %v2353 = vunpack.c.l.b16 %v2318
        %v2354 = vunpack.c.h.b16 %v2318
        %v2355 = vunpack.c.l.b16 %v2319
        %v2356 = vunpack.c.h.b16 %v2319
        %v2357 = vunpack.c.l.b16 %v2320
        %v2358 = vunpack.c.h.b16 %v2320
        %v2359 = vunpack.c.l.b16 %v2321
        %v2360 = vunpack.c.h.b16 %v2321
        %v2361 = vunpack.c.l.b16 %v2322
        %v2362 = vunpack.c.h.b16 %v2322
        %v2363 = vunpack.c.l.b16 %v2323
        %v2364 = vunpack.c.h.b16 %v2323
        %v2365 = vpack.c.b16 %v2343, %v2341
        %v2366 = vpack.c.b16 %v2344, %v2342
        %v2367 = vpack.c.b16 %v2347, %v2345
        %v2368 = vpack.c.b16 %v2348, %v2346
        %v2369 = vpack.c.b16 %v2351, %v2349
        %v2370 = vpack.c.b16 %v2352, %v2350
        %v2371 = vpack.c.b16 %v2355, %v2353
        %v2372 = vpack.c.b16 %v2356, %v2354
        %v2373 = vpack.c.b16 %v2359, %v2357
        %v2374 = vpack.c.b16 %v2360, %v2358
        %v2375 = vpack.c.b16 %v2363, %v2361
        %v2376 = vpack.c.b16 %v2364, %v2362
        %v2390 = vsel %vm1026, %v2328, 0
        %2392 = vmatprep.subr.bf16.mxu0 %v2366
        %2393 = vmatpush1.bf16.msra.mxu0 %v2365
        %2394 = vmatprep.subr.bf16.mxu0 %v2368
        %2395 = vmatpush1.bf16.msra.mxu0 %v2367
        %2396 = vmatprep.subr.bf16.mxu0 %v2370
        %2397 = vmatpush1.bf16.msra.mxu0 %v2369
        %2398 = vmatprep.subr.bf16.mxu0 %v2372
        %2399 = vmatpush1.bf16.msra.mxu0 %v2371
        %2400 = vmatprep.subr.bf16.mxu0 %v2374
        %2401 = vmatpush1.bf16.msra.mxu0 %v2373
        %2402 = vmatprep.subr.bf16.mxu0 %v2376
        %2403 = vmatpush1.bf16.msra.mxu0 %v2375
        %2404 = vmatprep.subr.bf16.mxu0 0
        %2405 = vmatpush1.bf16.msra.mxu0 0
        %2406 = vmatprep.subr.bf16.mxu0 0
        %2407 = vmatpush1.bf16.msra.mxu0 0
        %2408 = vmatprep.subr.bf16.mxu0 0
        %2409 = vmatpush1.bf16.msra.mxu0 0
        %2410 = vmatprep.subr.bf16.mxu0 0
        %2411 = vmatpush1.bf16.msra.mxu0 0
        %2412 = vmatprep.subr.bf16.mxu0 0
        %2413 = vmatpush1.bf16.msra.mxu0 0
        %2414 = vmatprep.subr.bf16.mxu0 0
        %2415 = vmatpush1.bf16.msra.mxu0 0
        %2416 = vmatprep.subr.bf16.mxu0 0
        %2417 = vmatpush1.bf16.msra.mxu0 0
        %2418 = vmatprep.subr.bf16.mxu0 0
        %2419 = vmatpush1.bf16.msra.mxu0 0
        %2420 = vmatprep.subr.bf16.mxu0 0
        %2421 = vmatpush1.bf16.msra.mxu0 0
        %2422 = vmatprep.subr.bf16.mxu0 0
        %2423 = vmatpush1.bf16.msra.mxu0 0
        %2424 = vmatprep.mubr.bf16.mxu0 0
        %2425 = vmatmul.mubr.bf16.gmra.mrb[0].mxu0 %v1034
        %v2426 = vpop.f32.mrb[0].mxu0
        %v2427 = vadd.f32 0.0, %v2426
        %v2428 = vpop.f32.mrb[0].mxu0
        %v2429 = vadd.f32 0.0, %v2428
        %v2430 = vpop.f32.mrb[0].mxu0
        %v2431 = vadd.f32 0.0, %v2430
        %v2432 = vpop.f32.mrb[0].mxu0
        %v2433 = vadd.f32 0.0, %v2432
        %2434 = vmatprep.mubr.bf16.mxu0 0
        %2435 = vmatmul.mubr.bf16.gmra.mrb[0].mxu0 %v1037
        %v2436 = vpop.f32.mrb[0].mxu0
        %v2437 = vadd.f32 0.0, %v2436
        %v2438 = vpop.f32.mrb[0].mxu0
        %v2439 = vadd.f32 0.0, %v2438
        %v2440 = vpop.f32.mrb[0].mxu0
        %v2441 = vadd.f32 0.0, %v2440
        %v2442 = vpop.f32.mrb[0].mxu0
        %v2443 = vadd.f32 0.0, %v2442
        %2444 = vmatprep.mubr.bf16.mxu0 0
        %2445 = vmatmul.mubr.bf16.gmra.mrb[0].mxu0 %v1040
        %v2446 = vpop.f32.mrb[0].mxu0
        %v2447 = vadd.f32 0.0, %v2446
        %v2448 = vpop.f32.mrb[0].mxu0
        %v2449 = vadd.f32 0.0, %v2448
        %v2450 = vpop.f32.mrb[0].mxu0
        %v2451 = vadd.f32 0.0, %v2450
        %v2452 = vpop.f32.mrb[0].mxu0
        %v2453 = vadd.f32 0.0, %v2452
        %2454 = vmatprep.mubr.bf16.mxu0 0
        %2455 = vmatmul.mubr.bf16.gmra.mrb[0].mxu0 %v1043
        %v2456 = vpop.f32.mrb[0].mxu0
        %v2457 = vadd.f32 0.0, %v2456
        %v2458 = vpop.f32.mrb[0].mxu0
        %v2459 = vadd.f32 0.0, %v2458
        %v2460 = vpop.f32.mrb[0].mxu0
        %v2461 = vadd.f32 0.0, %v2460
        %v2462 = vpop.f32.mrb[0].mxu0
        %v2463 = vadd.f32 0.0, %v2462
        %2464 = vmatprep.mubr.bf16.mxu0 0
        %2465 = vmatmul.mubr.bf16.gmra.mrb[0].mxu0 %v1046
        %v2466 = vpop.f32.mrb[0].mxu0
        %v2467 = vadd.f32 0.0, %v2466
        %v2468 = vpop.f32.mrb[0].mxu0
        %v2469 = vadd.f32 0.0, %v2468
        %v2470 = vpop.f32.mrb[0].mxu0
        %v2471 = vadd.f32 0.0, %v2470
        %v2472 = vpop.f32.mrb[0].mxu0
        %v2473 = vadd.f32 0.0, %v2472
        %2474 = vmatprep.mubr.bf16.mxu0 0
        %2475 = vmatmul.mubr.bf16.gmra.mrb[0].mxu0 %v1049
        %v2476 = vpop.f32.mrb[0].mxu0
        %v2477 = vadd.f32 0.0, %v2476
        %v2478 = vpop.f32.mrb[0].mxu0
        %v2479 = vadd.f32 0.0, %v2478
        %v2480 = vpop.f32.mrb[0].mxu0
        %v2481 = vadd.f32 0.0, %v2480
        %v2482 = vpop.f32.mrb[0].mxu0
        %v2483 = vadd.f32 0.0, %v2482
        %2484 = vmatprep.mubr.bf16.mxu0 0
        %2485 = vmatmul.mubr.bf16.gmra.mrb[0].mxu0 %v1052
        %v2486 = vpop.f32.mrb[0].mxu0
        %v2487 = vadd.f32 0.0, %v2486
        %v2488 = vpop.f32.mrb[0].mxu0
        %v2489 = vadd.f32 0.0, %v2488
        %v2490 = vpop.f32.mrb[0].mxu0
        %v2491 = vadd.f32 0.0, %v2490
        %v2492 = vpop.f32.mrb[0].mxu0
        %v2493 = vadd.f32 0.0, %v2492
        %2494 = vmatprep.mubr.bf16.mxu0 0
        %2495 = vmatmul.mubr.bf16.gmra.mrb[0].mxu0 %v1055
        %v2496 = vpop.f32.mrb[0].mxu0
        %v2497 = vadd.f32 0.0, %v2496
        %v2498 = vpop.f32.mrb[0].mxu0
        %v2499 = vadd.f32 0.0, %v2498
        %v2500 = vpop.f32.mrb[0].mxu0
        %v2501 = vadd.f32 0.0, %v2500
        %v2502 = vpop.f32.mrb[0].mxu0
        %v2503 = vadd.f32 0.0, %v2502
        %2504 = vmatprep.mubr.bf16.mxu0 0
        %2505 = vmatmul.mubr.bf16.gmra.mrb[0].mxu0 %v1058
        %v2506 = vpop.f32.mrb[0].mxu0
        %v2507 = vadd.f32 0.0, %v2506
        %v2508 = vpop.f32.mrb[0].mxu0
        %v2509 = vadd.f32 0.0, %v2508
        %v2510 = vpop.f32.mrb[0].mxu0
        %v2511 = vadd.f32 0.0, %v2510
        %v2512 = vpop.f32.mrb[0].mxu0
        %v2513 = vadd.f32 0.0, %v2512
        %2514 = vmatprep.mubr.bf16.mxu0 0
        %2515 = vmatmul.mubr.bf16.gmra.mrb[0].mxu0 %v1061
        %v2516 = vpop.f32.mrb[0].mxu0
        %v2517 = vadd.f32 0.0, %v2516
        %v2518 = vpop.f32.mrb[0].mxu0
        %v2519 = vadd.f32 0.0, %v2518
        %v2520 = vpop.f32.mrb[0].mxu0
        %v2521 = vadd.f32 0.0, %v2520
        %v2522 = vpop.f32.mrb[0].mxu0
        %v2523 = vadd.f32 0.0, %v2522
        %2524 = vmatprep.mubr.bf16.mxu0 0
        %2525 = vmatmul.mubr.bf16.gmra.mrb[0].mxu0 %v1064
        %v2526 = vpop.f32.mrb[0].mxu0
        %v2527 = vadd.f32 0.0, %v2526
        %v2528 = vpop.f32.mrb[0].mxu0
        %v2529 = vadd.f32 0.0, %v2528
        %v2530 = vpop.f32.mrb[0].mxu0
        %v2531 = vadd.f32 0.0, %v2530
        %v2532 = vpop.f32.mrb[0].mxu0
        %v2533 = vadd.f32 0.0, %v2532
        %2534 = vmatprep.mubr.bf16.mxu0 0
        %2535 = vmatmul.mubr.bf16.gmra.mrb[0].mxu0 %v1067
        %v2536 = vpop.f32.mrb[0].mxu0
        %v2537 = vadd.f32 0.0, %v2536
        %v2538 = vpop.f32.mrb[0].mxu0
        %v2539 = vadd.f32 0.0, %v2538
        %v2540 = vpop.f32.mrb[0].mxu0
        %v2541 = vadd.f32 0.0, %v2540
        %v2542 = vpop.f32.mrb[0].mxu0
        %v2543 = vadd.f32 0.0, %v2542
        %2544 = vmatprep.mubr.bf16.mxu0 0
        %2545 = vmatmul.mubr.bf16.gmra.mrb[0].mxu0 %v1070
        %v2546 = vpop.f32.mrb[0].mxu0
        %v2547 = vadd.f32 0.0, %v2546
        %v2548 = vpop.f32.mrb[0].mxu0
        %v2549 = vadd.f32 0.0, %v2548
        %v2550 = vpop.f32.mrb[0].mxu0
        %v2551 = vadd.f32 0.0, %v2550
        %v2552 = vpop.f32.mrb[0].mxu0
        %v2553 = vadd.f32 0.0, %v2552
        %2554 = vmatprep.mubr.bf16.mxu0 0
        %2555 = vmatmul.mubr.bf16.gmra.mrb[0].mxu0 %v1073
        %v2556 = vpop.f32.mrb[0].mxu0
        %v2557 = vadd.f32 0.0, %v2556
        %v2558 = vpop.f32.mrb[0].mxu0
        %v2559 = vadd.f32 0.0, %v2558
        %v2560 = vpop.f32.mrb[0].mxu0
        %v2561 = vadd.f32 0.0, %v2560
        %v2562 = vpop.f32.mrb[0].mxu0
        %v2563 = vadd.f32 0.0, %v2562
        %2564 = vmatprep.mubr.bf16.mxu0 0
        %2565 = vmatmul.mubr.bf16.gmra.mrb[0].mxu0 %v1076
        %v2566 = vpop.f32.mrb[0].mxu0
        %v2567 = vadd.f32 0.0, %v2566
        %v2568 = vpop.f32.mrb[0].mxu0
        %v2569 = vadd.f32 0.0, %v2568
        %v2570 = vpop.f32.mrb[0].mxu0
        %v2571 = vadd.f32 0.0, %v2570
        %v2572 = vpop.f32.mrb[0].mxu0
        %v2573 = vadd.f32 0.0, %v2572
        %2574 = vmatprep.mubr.bf16.mxu0 0
        %2575 = vmatmul.mubr.bf16.gmra.mrb[0].mxu0 %v1079
        %v2576 = vpop.f32.mrb[0].mxu0
        %v2577 = vadd.f32 0.0, %v2576
        %v2578 = vpop.f32.mrb[0].mxu0
        %v2579 = vadd.f32 0.0, %v2578
        %v2580 = vpop.f32.mrb[0].mxu0
        %v2581 = vadd.f32 0.0, %v2580
        %v2582 = vpop.f32.mrb[0].mxu0
        %v2583 = vadd.f32 0.0, %v2582
        %2584 = vmatprep.mubr.bf16.mxu0 0
        %2585 = vmatmul.mubr.bf16.gmra.mrb[0].mxu0 %v1082
        %v2586 = vpop.f32.mrb[0].mxu0
        %v2587 = vadd.f32 0.0, %v2586
        %v2588 = vpop.f32.mrb[0].mxu0
        %v2589 = vadd.f32 0.0, %v2588
        %v2590 = vpop.f32.mrb[0].mxu0
        %v2591 = vadd.f32 0.0, %v2590
        %v2592 = vpop.f32.mrb[0].mxu0
        %v2593 = vadd.f32 0.0, %v2592
        %2594 = vmatprep.mubr.bf16.mxu0 0
        %2595 = vmatmul.mubr.bf16.gmra.mrb[0].mxu0 %v1085
        %v2596 = vpop.f32.mrb[0].mxu0
        %v2597 = vadd.f32 0.0, %v2596
        %v2598 = vpop.f32.mrb[0].mxu0
        %v2599 = vadd.f32 0.0, %v2598
        %v2600 = vpop.f32.mrb[0].mxu0
        %v2601 = vadd.f32 0.0, %v2600
        %v2602 = vpop.f32.mrb[0].mxu0
        %v2603 = vadd.f32 0.0, %v2602
        %2604 = vmatprep.mubr.bf16.mxu0 0
        %2605 = vmatmul.mubr.bf16.gmra.mrb[0].mxu0 %v1088
        %v2606 = vpop.f32.mrb[0].mxu0
        %v2607 = vadd.f32 0.0, %v2606
        %v2608 = vpop.f32.mrb[0].mxu0
        %v2609 = vadd.f32 0.0, %v2608
        %v2610 = vpop.f32.mrb[0].mxu0
        %v2611 = vadd.f32 0.0, %v2610
        %v2612 = vpop.f32.mrb[0].mxu0
        %v2613 = vadd.f32 0.0, %v2612
        %2614 = vmatprep.mubr.bf16.mxu0 0
        %2615 = vmatmul.mubr.bf16.gmra.mrb[0].mxu0 %v1091
        %v2616 = vpop.f32.mrb[0].mxu0
        %v2617 = vadd.f32 0.0, %v2616
        %v2618 = vpop.f32.mrb[0].mxu0
        %v2619 = vadd.f32 0.0, %v2618
        %v2620 = vpop.f32.mrb[0].mxu0
        %v2621 = vadd.f32 0.0, %v2620
        %v2622 = vpop.f32.mrb[0].mxu0
        %v2623 = vadd.f32 0.0, %v2622
        %2624 = vmatprep.mubr.bf16.mxu0 0
        %2625 = vmatmul.mubr.bf16.gmra.mrb[0].mxu0 %v1094
        %v2626 = vpop.f32.mrb[0].mxu0
        %v2627 = vadd.f32 0.0, %v2626
        %v2628 = vpop.f32.mrb[0].mxu0
        %v2629 = vadd.f32 0.0, %v2628
        %v2630 = vpop.f32.mrb[0].mxu0
        %v2631 = vadd.f32 0.0, %v2630
        %v2632 = vpop.f32.mrb[0].mxu0
        %v2633 = vadd.f32 0.0, %v2632
        %2634 = vmatprep.mubr.bf16.mxu0 0
        %2635 = vmatmul.mubr.bf16.gmra.mrb[0].mxu0 %v1097
        %v2636 = vpop.f32.mrb[0].mxu0
        %v2637 = vadd.f32 0.0, %v2636
        %v2638 = vpop.f32.mrb[0].mxu0
        %v2639 = vadd.f32 0.0, %v2638
        %v2640 = vpop.f32.mrb[0].mxu0
        %v2641 = vadd.f32 0.0, %v2640
        %v2642 = vpop.f32.mrb[0].mxu0
        %v2643 = vadd.f32 0.0, %v2642
        %2644 = vmatprep.mubr.bf16.mxu0 0
        %2645 = vmatmul.mubr.bf16.gmra.mrb[0].mxu0 %v1100
        %v2646 = vpop.f32.mrb[0].mxu0
        %v2647 = vadd.f32 0.0, %v2646
        %v2648 = vpop.f32.mrb[0].mxu0
        %v2649 = vadd.f32 0.0, %v2648
        %v2650 = vpop.f32.mrb[0].mxu0
        %v2651 = vadd.f32 0.0, %v2650
        %v2652 = vpop.f32.mrb[0].mxu0
        %v2653 = vadd.f32 0.0, %v2652
        %2654 = vmatprep.mubr.bf16.mxu0 0
        %2655 = vmatmul.mubr.bf16.gmra.mrb[0].mxu0 %v1103
        %v2656 = vpop.f32.mrb[0].mxu0
        %v2657 = vadd.f32 0.0, %v2656
        %v2658 = vpop.f32.mrb[0].mxu0
        %v2659 = vadd.f32 0.0, %v2658
        %v2660 = vpop.f32.mrb[0].mxu0
        %v2661 = vadd.f32 0.0, %v2660
        %v2662 = vpop.f32.mrb[0].mxu0
        %v2663 = vadd.f32 0.0, %v2662
        %2664 = vmatprep.mubr.bf16.mxu0 0
        %2665 = vmatmul.mubr.bf16.gmra.mrb[0].mxu0 %v1106
        %v2666 = vpop.f32.mrb[0].mxu0
        %v2667 = vadd.f32 0.0, %v2666
        %v2668 = vpop.f32.mrb[0].mxu0
        %v2669 = vadd.f32 0.0, %v2668
        %v2670 = vpop.f32.mrb[0].mxu0
        %v2671 = vadd.f32 0.0, %v2670
        %v2672 = vpop.f32.mrb[0].mxu0
        %v2673 = vadd.f32 0.0, %v2672
        %2674 = vmatprep.mubr.bf16.mxu0 0
        %2675 = vmatmul.mubr.bf16.gmra.mrb[0].mxu0 %v1109
        %v2676 = vpop.f32.mrb[0].mxu0
        %v2677 = vadd.f32 0.0, %v2676
        %v2678 = vpop.f32.mrb[0].mxu0
        %v2679 = vadd.f32 0.0, %v2678
        %v2680 = vpop.f32.mrb[0].mxu0
        %v2681 = vadd.f32 0.0, %v2680
        %v2682 = vpop.f32.mrb[0].mxu0
        %v2683 = vadd.f32 0.0, %v2682
        %2684 = vmatprep.mubr.bf16.mxu0 0
        %2685 = vmatmul.mubr.bf16.gmra.mrb[0].mxu0 %v1884
        %v2686 = vpop.f32.mrb[0].mxu0
        %v2687 = vadd.f32 0.0, %v2686
        %v2688 = vpop.f32.mrb[0].mxu0
        %v2689 = vadd.f32 0.0, %v2688
        %v2690 = vpop.f32.mrb[0].mxu0
        %v2691 = vadd.f32 0.0, %v2690
        %v2692 = vpop.f32.mrb[0].mxu0
        %v2693 = vadd.f32 0.0, %v2692
        %2694 = vmatprep.mubr.bf16.mxu0 0
        %2695 = vmatmul.mubr.bf16.gmra.mrb[0].mxu0 %v2390
        %v2696 = vpop.f32.mrb[0].mxu0
        %v2697 = vadd.f32 0.0, %v2696
        %v2698 = vpop.f32.mrb[0].mxu0
        %v2699 = vadd.f32 0.0, %v2698
        %v2700 = vpop.f32.mrb[0].mxu0
        %v2701 = vadd.f32 0.0, %v2700
        %v2702 = vpop.f32.mrb[0].mxu0
        %v2703 = vadd.f32 0.0, %v2702
        %2704 = vdwg.mxu0
        %v2705 = vadd.f32 %v2199, %v2427
        %v2706 = vadd.f32 %v2200, %v2429
        %v2707 = vadd.f32 %v2201, %v2431
        %v2708 = vadd.f32 %v2202, %v2433
        %v2709 = vadd.f32 %v2203, %v2437
        %v2710 = vadd.f32 %v2204, %v2439
        %v2711 = vadd.f32 %v2205, %v2441
        %v2712 = vadd.f32 %v2206, %v2443
        %v2713 = vadd.f32 %v2207, %v2447
        %v2714 = vadd.f32 %v2208, %v2449
        %v2715 = vadd.f32 %v2209, %v2451
        %v2716 = vadd.f32 %v2210, %v2453
        %v2717 = vadd.f32 %v2211, %v2457
        %v2718 = vadd.f32 %v2212, %v2459
        %v2719 = vadd.f32 %v2213, %v2461
        %v2720 = vadd.f32 %v2214, %v2463
        %v2721 = vadd.f32 %v2215, %v2467
        %v2722 = vadd.f32 %v2216, %v2469
        %v2723 = vadd.f32 %v2217, %v2471
        %v2724 = vadd.f32 %v2218, %v2473
        %v2725 = vadd.f32 %v2219, %v2477
        %v2726 = vadd.f32 %v2220, %v2479
        %v2727 = vadd.f32 %v2221, %v2481
        %v2728 = vadd.f32 %v2222, %v2483
        %v2729 = vadd.f32 %v2223, %v2487
        %v2730 = vadd.f32 %v2224, %v2489
        %v2731 = vadd.f32 %v2225, %v2491
        %v2732 = vadd.f32 %v2226, %v2493
        %v2733 = vadd.f32 %v2227, %v2497
        %v2734 = vadd.f32 %v2228, %v2499
        %v2735 = vadd.f32 %v2229, %v2501
        %v2736 = vadd.f32 %v2230, %v2503
        %v2737 = vadd.f32 %v2231, %v2507
        %v2738 = vadd.f32 %v2232, %v2509
        %v2739 = vadd.f32 %v2233, %v2511
        %v2740 = vadd.f32 %v2234, %v2513
        %v2741 = vadd.f32 %v2235, %v2517
        %v2742 = vadd.f32 %v2236, %v2519
        %v2743 = vadd.f32 %v2237, %v2521
        %v2744 = vadd.f32 %v2238, %v2523
        %v2745 = vadd.f32 %v2239, %v2527
        %v2746 = vadd.f32 %v2240, %v2529
        %v2747 = vadd.f32 %v2241, %v2531
        %v2748 = vadd.f32 %v2242, %v2533
        %v2749 = vadd.f32 %v2243, %v2537
        %v2750 = vadd.f32 %v2244, %v2539
        %v2751 = vadd.f32 %v2245, %v2541
        %v2752 = vadd.f32 %v2246, %v2543
        %v2753 = vadd.f32 %v2247, %v2547
        %v2754 = vadd.f32 %v2248, %v2549
        %v2755 = vadd.f32 %v2249, %v2551
        %v2756 = vadd.f32 %v2250, %v2553
        %v2757 = vadd.f32 %v2251, %v2557
        %v2758 = vadd.f32 %v2252, %v2559
        %v2759 = vadd.f32 %v2253, %v2561
        %v2760 = vadd.f32 %v2254, %v2563
        %v2761 = vadd.f32 %v2255, %v2567
        %v2762 = vadd.f32 %v2256, %v2569
        %v2763 = vadd.f32 %v2257, %v2571
        %v2764 = vadd.f32 %v2258, %v2573
        %v2765 = vadd.f32 %v2259, %v2577
        %v2766 = vadd.f32 %v2260, %v2579
        %v2767 = vadd.f32 %v2261, %v2581
        %v2768 = vadd.f32 %v2262, %v2583
        %v2769 = vadd.f32 %v2263, %v2587
        %v2770 = vadd.f32 %v2264, %v2589
        %v2771 = vadd.f32 %v2265, %v2591
        %v2772 = vadd.f32 %v2266, %v2593
        %v2773 = vadd.f32 %v2267, %v2597
        %v2774 = vadd.f32 %v2268, %v2599
        %v2775 = vadd.f32 %v2269, %v2601
        %v2776 = vadd.f32 %v2270, %v2603
        %v2777 = vadd.f32 %v2271, %v2607
        %v2778 = vadd.f32 %v2272, %v2609
        %v2779 = vadd.f32 %v2273, %v2611
        %v2780 = vadd.f32 %v2274, %v2613
        %v2781 = vadd.f32 %v2275, %v2617
        %v2782 = vadd.f32 %v2276, %v2619
        %v2783 = vadd.f32 %v2277, %v2621
        %v2784 = vadd.f32 %v2278, %v2623
        %v2785 = vadd.f32 %v2279, %v2627
        %v2786 = vadd.f32 %v2280, %v2629
        %v2787 = vadd.f32 %v2281, %v2631
        %v2788 = vadd.f32 %v2282, %v2633
        %v2789 = vadd.f32 %v2283, %v2637
        %v2790 = vadd.f32 %v2284, %v2639
        %v2791 = vadd.f32 %v2285, %v2641
        %v2792 = vadd.f32 %v2286, %v2643
        %v2793 = vadd.f32 %v2287, %v2647
        %v2794 = vadd.f32 %v2288, %v2649
        %v2795 = vadd.f32 %v2289, %v2651
        %v2796 = vadd.f32 %v2290, %v2653
        %v2797 = vadd.f32 %v2291, %v2657
        %v2798 = vadd.f32 %v2292, %v2659
        %v2799 = vadd.f32 %v2293, %v2661
        %v2800 = vadd.f32 %v2294, %v2663
        %v2801 = vadd.f32 %v2295, %v2667
        %v2802 = vadd.f32 %v2296, %v2669
        %v2803 = vadd.f32 %v2297, %v2671
        %v2804 = vadd.f32 %v2298, %v2673
        %v2805 = vadd.f32 %v2299, %v2677
        %v2806 = vadd.f32 %v2300, %v2679
        %v2807 = vadd.f32 %v2301, %v2681
        %v2808 = vadd.f32 %v2302, %v2683
        %v2809 = vadd.f32 %v2303, %v2687
        %v2810 = vadd.f32 %v2304, %v2689
        %v2811 = vadd.f32 %v2305, %v2691
        %v2812 = vadd.f32 %v2306, %v2693
        %v2813 = vadd.f32 %v2307, %v2697
        %v2814 = vadd.f32 %v2308, %v2699
        %v2815 = vadd.f32 %v2309, %v2701
        %v2816 = vadd.f32 %v2310, %v2703
        %s2817 = scalar_lea.vmem %s1, 384
        %v2818 = vld [vmem:[%s2817] sm:$0xff]
        %v2819 = vld [vmem:[%s2817 + $0x8] sm:$0xff]
        %v2820 = vld [vmem:[%s2817 + $0x10] sm:$0xff]
        %v2821 = vld [vmem:[%s2817 + $0x18] sm:$0xff]
        %v2822 = vld [vmem:[%s2817 + $0x20] sm:$0xff]
        %v2823 = vld [vmem:[%s2817 + $0x28] sm:$0xff]
        %v2824 = vld [vmem:[%s2817 + $0x30] sm:$0xff]
        %v2825 = vld [vmem:[%s2817 + $0x38] sm:$0xff]
        %v2826 = vld [vmem:[%s2817 + $0x40] sm:$0xff]
        %v2827 = vld [vmem:[%s2817 + $0x48] sm:$0xff]
        %v2828 = vld [vmem:[%s2817 + $0x50] sm:$0xff]
        %v2829 = vld [vmem:[%s2817 + $0x58] sm:$0xff]
        %v2832 = vunpack.c.l.b16 %v799
        %v2833 = vunpack.c.l.b16 %v800
        %v2834 = vpack.c.b16 %v2833, %v2832
        %v2847 = vunpack.c.l.b16 %v2818
        %v2848 = vunpack.c.h.b16 %v2818
        %v2849 = vunpack.c.l.b16 %v2819
        %v2850 = vunpack.c.h.b16 %v2819
        %v2851 = vunpack.c.l.b16 %v2820
        %v2852 = vunpack.c.h.b16 %v2820
        %v2853 = vunpack.c.l.b16 %v2821
        %v2854 = vunpack.c.h.b16 %v2821
        %v2855 = vunpack.c.l.b16 %v2822
        %v2856 = vunpack.c.h.b16 %v2822
        %v2857 = vunpack.c.l.b16 %v2823
        %v2858 = vunpack.c.h.b16 %v2823
        %v2859 = vunpack.c.l.b16 %v2824
        %v2860 = vunpack.c.h.b16 %v2824
        %v2861 = vunpack.c.l.b16 %v2825
        %v2862 = vunpack.c.h.b16 %v2825
        %v2863 = vunpack.c.l.b16 %v2826
        %v2864 = vunpack.c.h.b16 %v2826
        %v2865 = vunpack.c.l.b16 %v2827
        %v2866 = vunpack.c.h.b16 %v2827
        %v2867 = vunpack.c.l.b16 %v2828
        %v2868 = vunpack.c.h.b16 %v2828
        %v2869 = vunpack.c.l.b16 %v2829
        %v2870 = vunpack.c.h.b16 %v2829
        %v2871 = vpack.c.b16 %v2849, %v2847
        %v2872 = vpack.c.b16 %v2850, %v2848
        %v2873 = vpack.c.b16 %v2853, %v2851
        %v2874 = vpack.c.b16 %v2854, %v2852
        %v2875 = vpack.c.b16 %v2857, %v2855
        %v2876 = vpack.c.b16 %v2858, %v2856
        %v2877 = vpack.c.b16 %v2861, %v2859
        %v2878 = vpack.c.b16 %v2862, %v2860
        %v2879 = vpack.c.b16 %v2865, %v2863
        %v2880 = vpack.c.b16 %v2866, %v2864
        %v2881 = vpack.c.b16 %v2869, %v2867
        %v2882 = vpack.c.b16 %v2870, %v2868
        %v2896 = vsel %vm1026, %v2834, 0
        %2898 = vmatprep.subr.bf16.mxu0 %v2872
        %2899 = vmatpush1.bf16.msra.mxu0 %v2871
        %2900 = vmatprep.subr.bf16.mxu0 %v2874
        %2901 = vmatpush1.bf16.msra.mxu0 %v2873
        %2902 = vmatprep.subr.bf16.mxu0 %v2876
        %2903 = vmatpush1.bf16.msra.mxu0 %v2875
        %2904 = vmatprep.subr.bf16.mxu0 %v2878
        %2905 = vmatpush1.bf16.msra.mxu0 %v2877
        %2906 = vmatprep.subr.bf16.mxu0 %v2880
        %2907 = vmatpush1.bf16.msra.mxu0 %v2879
        %2908 = vmatprep.subr.bf16.mxu0 %v2882
        %2909 = vmatpush1.bf16.msra.mxu0 %v2881
        %2910 = vmatprep.subr.bf16.mxu0 0
        %2911 = vmatpush1.bf16.msra.mxu0 0
        %2912 = vmatprep.subr.bf16.mxu0 0
        %2913 = vmatpush1.bf16.msra.mxu0 0
        %2914 = vmatprep.subr.bf16.mxu0 0
        %2915 = vmatpush1.bf16.msra.mxu0 0
        %2916 = vmatprep.subr.bf16.mxu0 0
        %2917 = vmatpush1.bf16.msra.mxu0 0
        %2918 = vmatprep.subr.bf16.mxu0 0
        %2919 = vmatpush1.bf16.msra.mxu0 0
        %2920 = vmatprep.subr.bf16.mxu0 0
        %2921 = vmatpush1.bf16.msra.mxu0 0
        %2922 = vmatprep.subr.bf16.mxu0 0
        %2923 = vmatpush1.bf16.msra.mxu0 0
        %2924 = vmatprep.subr.bf16.mxu0 0
        %2925 = vmatpush1.bf16.msra.mxu0 0
        %2926 = vmatprep.subr.bf16.mxu0 0
        %2927 = vmatpush1.bf16.msra.mxu0 0
        %2928 = vmatprep.subr.bf16.mxu0 0
        %2929 = vmatpush1.bf16.msra.mxu0 0
        %2930 = vmatprep.mubr.bf16.mxu0 0
        %2931 = vmatmul.mubr.bf16.gmra.mrb[0].mxu0 %v1037
        %v2932 = vpop.f32.mrb[0].mxu0
        %v2933 = vadd.f32 0.0, %v2932
        %v2934 = vpop.f32.mrb[0].mxu0
        %v2935 = vadd.f32 0.0, %v2934
        %v2936 = vpop.f32.mrb[0].mxu0
        %v2937 = vadd.f32 0.0, %v2936
        %v2938 = vpop.f32.mrb[0].mxu0
        %v2939 = vadd.f32 0.0, %v2938
        %2940 = vmatprep.mubr.bf16.mxu0 0
        %2941 = vmatmul.mubr.bf16.gmra.mrb[0].mxu0 %v1040
        %v2942 = vpop.f32.mrb[0].mxu0
        %v2943 = vadd.f32 0.0, %v2942
        %v2944 = vpop.f32.mrb[0].mxu0
        %v2945 = vadd.f32 0.0, %v2944
        %v2946 = vpop.f32.mrb[0].mxu0
        %v2947 = vadd.f32 0.0, %v2946
        %v2948 = vpop.f32.mrb[0].mxu0
        %v2949 = vadd.f32 0.0, %v2948
        %2950 = vmatprep.mubr.bf16.mxu0 0
        %2951 = vmatmul.mubr.bf16.gmra.mrb[0].mxu0 %v1043
        %v2952 = vpop.f32.mrb[0].mxu0
        %v2953 = vadd.f32 0.0, %v2952
        %v2954 = vpop.f32.mrb[0].mxu0
        %v2955 = vadd.f32 0.0, %v2954
        %v2956 = vpop.f32.mrb[0].mxu0
        %v2957 = vadd.f32 0.0, %v2956
        %v2958 = vpop.f32.mrb[0].mxu0
        %v2959 = vadd.f32 0.0, %v2958
        %2960 = vmatprep.mubr.bf16.mxu0 0
        %2961 = vmatmul.mubr.bf16.gmra.mrb[0].mxu0 %v1046
        %v2962 = vpop.f32.mrb[0].mxu0
        %v2963 = vadd.f32 0.0, %v2962
        %v2964 = vpop.f32.mrb[0].mxu0
        %v2965 = vadd.f32 0.0, %v2964
        %v2966 = vpop.f32.mrb[0].mxu0
        %v2967 = vadd.f32 0.0, %v2966
        %v2968 = vpop.f32.mrb[0].mxu0
        %v2969 = vadd.f32 0.0, %v2968
        %2970 = vmatprep.mubr.bf16.mxu0 0
        %2971 = vmatmul.mubr.bf16.gmra.mrb[0].mxu0 %v1049
        %v2972 = vpop.f32.mrb[0].mxu0
        %v2973 = vadd.f32 0.0, %v2972
        %v2974 = vpop.f32.mrb[0].mxu0
        %v2975 = vadd.f32 0.0, %v2974
        %v2976 = vpop.f32.mrb[0].mxu0
        %v2977 = vadd.f32 0.0, %v2976
        %v2978 = vpop.f32.mrb[0].mxu0
        %v2979 = vadd.f32 0.0, %v2978
        %2980 = vmatprep.mubr.bf16.mxu0 0
        %2981 = vmatmul.mubr.bf16.gmra.mrb[0].mxu0 %v1052
        %v2982 = vpop.f32.mrb[0].mxu0
        %v2983 = vadd.f32 0.0, %v2982
        %v2984 = vpop.f32.mrb[0].mxu0
        %v2985 = vadd.f32 0.0, %v2984
        %v2986 = vpop.f32.mrb[0].mxu0
        %v2987 = vadd.f32 0.0, %v2986
        %v2988 = vpop.f32.mrb[0].mxu0
        %v2989 = vadd.f32 0.0, %v2988
        %2990 = vmatprep.mubr.bf16.mxu0 0
        %2991 = vmatmul.mubr.bf16.gmra.mrb[0].mxu0 %v1055
        %v2992 = vpop.f32.mrb[0].mxu0
        %v2993 = vadd.f32 0.0, %v2992
        %v2994 = vpop.f32.mrb[0].mxu0
        %v2995 = vadd.f32 0.0, %v2994
        %v2996 = vpop.f32.mrb[0].mxu0
        %v2997 = vadd.f32 0.0, %v2996
        %v2998 = vpop.f32.mrb[0].mxu0
        %v2999 = vadd.f32 0.0, %v2998
        %3000 = vmatprep.mubr.bf16.mxu0 0
        %3001 = vmatmul.mubr.bf16.gmra.mrb[0].mxu0 %v1058
        %v3002 = vpop.f32.mrb[0].mxu0
        %v3003 = vadd.f32 0.0, %v3002
        %v3004 = vpop.f32.mrb[0].mxu0
        %v3005 = vadd.f32 0.0, %v3004
        %v3006 = vpop.f32.mrb[0].mxu0
        %v3007 = vadd.f32 0.0, %v3006
        %v3008 = vpop.f32.mrb[0].mxu0
        %v3009 = vadd.f32 0.0, %v3008
        %3010 = vmatprep.mubr.bf16.mxu0 0
        %3011 = vmatmul.mubr.bf16.gmra.mrb[0].mxu0 %v1061
        %v3012 = vpop.f32.mrb[0].mxu0
        %v3013 = vadd.f32 0.0, %v3012
        %v3014 = vpop.f32.mrb[0].mxu0
        %v3015 = vadd.f32 0.0, %v3014
        %v3016 = vpop.f32.mrb[0].mxu0
        %v3017 = vadd.f32 0.0, %v3016
        %v3018 = vpop.f32.mrb[0].mxu0
        %v3019 = vadd.f32 0.0, %v3018
        %3020 = vmatprep.mubr.bf16.mxu0 0
        %3021 = vmatmul.mubr.bf16.gmra.mrb[0].mxu0 %v1064
        %v3022 = vpop.f32.mrb[0].mxu0
        %v3023 = vadd.f32 0.0, %v3022
        %v3024 = vpop.f32.mrb[0].mxu0
        %v3025 = vadd.f32 0.0, %v3024
        %v3026 = vpop.f32.mrb[0].mxu0
        %v3027 = vadd.f32 0.0, %v3026
        %v3028 = vpop.f32.mrb[0].mxu0
        %v3029 = vadd.f32 0.0, %v3028
        %3030 = vmatprep.mubr.bf16.mxu0 0
        %3031 = vmatmul.mubr.bf16.gmra.mrb[0].mxu0 %v1067
        %v3032 = vpop.f32.mrb[0].mxu0
        %v3033 = vadd.f32 0.0, %v3032
        %v3034 = vpop.f32.mrb[0].mxu0
        %v3035 = vadd.f32 0.0, %v3034
        %v3036 = vpop.f32.mrb[0].mxu0
        %v3037 = vadd.f32 0.0, %v3036
        %v3038 = vpop.f32.mrb[0].mxu0
        %v3039 = vadd.f32 0.0, %v3038
        %3040 = vmatprep.mubr.bf16.mxu0 0
        %3041 = vmatmul.mubr.bf16.gmra.mrb[0].mxu0 %v1070
        %v3042 = vpop.f32.mrb[0].mxu0
        %v3043 = vadd.f32 0.0, %v3042
        %v3044 = vpop.f32.mrb[0].mxu0
        %v3045 = vadd.f32 0.0, %v3044
        %v3046 = vpop.f32.mrb[0].mxu0
        %v3047 = vadd.f32 0.0, %v3046
        %v3048 = vpop.f32.mrb[0].mxu0
        %v3049 = vadd.f32 0.0, %v3048
        %3050 = vmatprep.mubr.bf16.mxu0 0
        %3051 = vmatmul.mubr.bf16.gmra.mrb[0].mxu0 %v1073
        %v3052 = vpop.f32.mrb[0].mxu0
        %v3053 = vadd.f32 0.0, %v3052
        %v3054 = vpop.f32.mrb[0].mxu0
        %v3055 = vadd.f32 0.0, %v3054
        %v3056 = vpop.f32.mrb[0].mxu0
        %v3057 = vadd.f32 0.0, %v3056
        %v3058 = vpop.f32.mrb[0].mxu0
        %v3059 = vadd.f32 0.0, %v3058
        %3060 = vmatprep.mubr.bf16.mxu0 0
        %3061 = vmatmul.mubr.bf16.gmra.mrb[0].mxu0 %v1076
        %v3062 = vpop.f32.mrb[0].mxu0
        %v3063 = vadd.f32 0.0, %v3062
        %v3064 = vpop.f32.mrb[0].mxu0
        %v3065 = vadd.f32 0.0, %v3064
        %v3066 = vpop.f32.mrb[0].mxu0
        %v3067 = vadd.f32 0.0, %v3066
        %v3068 = vpop.f32.mrb[0].mxu0
        %v3069 = vadd.f32 0.0, %v3068
        %3070 = vmatprep.mubr.bf16.mxu0 0
        %3071 = vmatmul.mubr.bf16.gmra.mrb[0].mxu0 %v1079
        %v3072 = vpop.f32.mrb[0].mxu0
        %v3073 = vadd.f32 0.0, %v3072
        %v3074 = vpop.f32.mrb[0].mxu0
        %v3075 = vadd.f32 0.0, %v3074
        %v3076 = vpop.f32.mrb[0].mxu0
        %v3077 = vadd.f32 0.0, %v3076
        %v3078 = vpop.f32.mrb[0].mxu0
        %v3079 = vadd.f32 0.0, %v3078
        %3080 = vmatprep.mubr.bf16.mxu0 0
        %3081 = vmatmul.mubr.bf16.gmra.mrb[0].mxu0 %v1082
        %v3082 = vpop.f32.mrb[0].mxu0
        %v3083 = vadd.f32 0.0, %v3082
        %v3084 = vpop.f32.mrb[0].mxu0
        %v3085 = vadd.f32 0.0, %v3084
        %v3086 = vpop.f32.mrb[0].mxu0
        %v3087 = vadd.f32 0.0, %v3086
        %v3088 = vpop.f32.mrb[0].mxu0
        %v3089 = vadd.f32 0.0, %v3088
        %3090 = vmatprep.mubr.bf16.mxu0 0
        %3091 = vmatmul.mubr.bf16.gmra.mrb[0].mxu0 %v1085
        %v3092 = vpop.f32.mrb[0].mxu0
        %v3093 = vadd.f32 0.0, %v3092
        %v3094 = vpop.f32.mrb[0].mxu0
        %v3095 = vadd.f32 0.0, %v3094
        %v3096 = vpop.f32.mrb[0].mxu0
        %v3097 = vadd.f32 0.0, %v3096
        %v3098 = vpop.f32.mrb[0].mxu0
        %v3099 = vadd.f32 0.0, %v3098
        %3100 = vmatprep.mubr.bf16.mxu0 0
        %3101 = vmatmul.mubr.bf16.gmra.mrb[0].mxu0 %v1088
        %v3102 = vpop.f32.mrb[0].mxu0
        %v3103 = vadd.f32 0.0, %v3102
        %v3104 = vpop.f32.mrb[0].mxu0
        %v3105 = vadd.f32 0.0, %v3104
        %v3106 = vpop.f32.mrb[0].mxu0
        %v3107 = vadd.f32 0.0, %v3106
        %v3108 = vpop.f32.mrb[0].mxu0
        %v3109 = vadd.f32 0.0, %v3108
        %3110 = vmatprep.mubr.bf16.mxu0 0
        %3111 = vmatmul.mubr.bf16.gmra.mrb[0].mxu0 %v1091
        %v3112 = vpop.f32.mrb[0].mxu0
        %v3113 = vadd.f32 0.0, %v3112
        %v3114 = vpop.f32.mrb[0].mxu0
        %v3115 = vadd.f32 0.0, %v3114
        %v3116 = vpop.f32.mrb[0].mxu0
        %v3117 = vadd.f32 0.0, %v3116
        %v3118 = vpop.f32.mrb[0].mxu0
        %v3119 = vadd.f32 0.0, %v3118
        %3120 = vmatprep.mubr.bf16.mxu0 0
        %3121 = vmatmul.mubr.bf16.gmra.mrb[0].mxu0 %v1094
        %v3122 = vpop.f32.mrb[0].mxu0
        %v3123 = vadd.f32 0.0, %v3122
        %v3124 = vpop.f32.mrb[0].mxu0
        %v3125 = vadd.f32 0.0, %v3124
        %v3126 = vpop.f32.mrb[0].mxu0
        %v3127 = vadd.f32 0.0, %v3126
        %v3128 = vpop.f32.mrb[0].mxu0
        %v3129 = vadd.f32 0.0, %v3128
        %3130 = vmatprep.mubr.bf16.mxu0 0
        %3131 = vmatmul.mubr.bf16.gmra.mrb[0].mxu0 %v1097
        %v3132 = vpop.f32.mrb[0].mxu0
        %v3133 = vadd.f32 0.0, %v3132
        %v3134 = vpop.f32.mrb[0].mxu0
        %v3135 = vadd.f32 0.0, %v3134
        %v3136 = vpop.f32.mrb[0].mxu0
        %v3137 = vadd.f32 0.0, %v3136
        %v3138 = vpop.f32.mrb[0].mxu0
        %v3139 = vadd.f32 0.0, %v3138
        %3140 = vmatprep.mubr.bf16.mxu0 0
        %3141 = vmatmul.mubr.bf16.gmra.mrb[0].mxu0 %v1100
        %v3142 = vpop.f32.mrb[0].mxu0
        %v3143 = vadd.f32 0.0, %v3142
        %v3144 = vpop.f32.mrb[0].mxu0
        %v3145 = vadd.f32 0.0, %v3144
        %v3146 = vpop.f32.mrb[0].mxu0
        %v3147 = vadd.f32 0.0, %v3146
        %v3148 = vpop.f32.mrb[0].mxu0
        %v3149 = vadd.f32 0.0, %v3148
        %3150 = vmatprep.mubr.bf16.mxu0 0
        %3151 = vmatmul.mubr.bf16.gmra.mrb[0].mxu0 %v1103
        %v3152 = vpop.f32.mrb[0].mxu0
        %v3153 = vadd.f32 0.0, %v3152
        %v3154 = vpop.f32.mrb[0].mxu0
        %v3155 = vadd.f32 0.0, %v3154
        %v3156 = vpop.f32.mrb[0].mxu0
        %v3157 = vadd.f32 0.0, %v3156
        %v3158 = vpop.f32.mrb[0].mxu0
        %v3159 = vadd.f32 0.0, %v3158
        %3160 = vmatprep.mubr.bf16.mxu0 0
        %3161 = vmatmul.mubr.bf16.gmra.mrb[0].mxu0 %v1106
        %v3162 = vpop.f32.mrb[0].mxu0
        %v3163 = vadd.f32 0.0, %v3162
        %v3164 = vpop.f32.mrb[0].mxu0
        %v3165 = vadd.f32 0.0, %v3164
        %v3166 = vpop.f32.mrb[0].mxu0
        %v3167 = vadd.f32 0.0, %v3166
        %v3168 = vpop.f32.mrb[0].mxu0
        %v3169 = vadd.f32 0.0, %v3168
        %3170 = vmatprep.mubr.bf16.mxu0 0
        %3171 = vmatmul.mubr.bf16.gmra.mrb[0].mxu0 %v1109
        %v3172 = vpop.f32.mrb[0].mxu0
        %v3173 = vadd.f32 0.0, %v3172
        %v3174 = vpop.f32.mrb[0].mxu0
        %v3175 = vadd.f32 0.0, %v3174
        %v3176 = vpop.f32.mrb[0].mxu0
        %v3177 = vadd.f32 0.0, %v3176
        %v3178 = vpop.f32.mrb[0].mxu0
        %v3179 = vadd.f32 0.0, %v3178
        %3180 = vmatprep.mubr.bf16.mxu0 0
        %3181 = vmatmul.mubr.bf16.gmra.mrb[0].mxu0 %v1884
        %v3182 = vpop.f32.mrb[0].mxu0
        %v3183 = vadd.f32 0.0, %v3182
        %v3184 = vpop.f32.mrb[0].mxu0
        %v3185 = vadd.f32 0.0, %v3184
        %v3186 = vpop.f32.mrb[0].mxu0
        %v3187 = vadd.f32 0.0, %v3186
        %v3188 = vpop.f32.mrb[0].mxu0
        %v3189 = vadd.f32 0.0, %v3188
        %3190 = vmatprep.mubr.bf16.mxu0 0
        %3191 = vmatmul.mubr.bf16.gmra.mrb[0].mxu0 %v2390
        %v3192 = vpop.f32.mrb[0].mxu0
        %v3193 = vadd.f32 0.0, %v3192
        %v3194 = vpop.f32.mrb[0].mxu0
        %v3195 = vadd.f32 0.0, %v3194
        %v3196 = vpop.f32.mrb[0].mxu0
        %v3197 = vadd.f32 0.0, %v3196
        %v3198 = vpop.f32.mrb[0].mxu0
        %v3199 = vadd.f32 0.0, %v3198
        %3200 = vmatprep.mubr.bf16.mxu0 0
        %3201 = vmatmul.mubr.bf16.gmra.mrb[0].mxu0 %v2896
        %v3202 = vpop.f32.mrb[0].mxu0
        %v3203 = vadd.f32 0.0, %v3202
        %v3204 = vpop.f32.mrb[0].mxu0
        %v3205 = vadd.f32 0.0, %v3204
        %v3206 = vpop.f32.mrb[0].mxu0
        %v3207 = vadd.f32 0.0, %v3206
        %v3208 = vpop.f32.mrb[0].mxu0
        %v3209 = vadd.f32 0.0, %v3208
        %3210 = vdwg.mxu0
        %v3211 = vadd.f32 %v2705, %v2933
        %v3212 = vadd.f32 %v2706, %v2935
        %v3213 = vadd.f32 %v2707, %v2937
        %v3214 = vadd.f32 %v2708, %v2939
        %v3215 = vadd.f32 %v2709, %v2943
        %v3216 = vadd.f32 %v2710, %v2945
        %v3217 = vadd.f32 %v2711, %v2947
        %v3218 = vadd.f32 %v2712, %v2949
        %v3219 = vadd.f32 %v2713, %v2953
        %v3220 = vadd.f32 %v2714, %v2955
        %v3221 = vadd.f32 %v2715, %v2957
        %v3222 = vadd.f32 %v2716, %v2959
        %v3223 = vadd.f32 %v2717, %v2963
        %v3224 = vadd.f32 %v2718, %v2965
        %v3225 = vadd.f32 %v2719, %v2967
        %v3226 = vadd.f32 %v2720, %v2969
        %v3227 = vadd.f32 %v2721, %v2973
        %v3228 = vadd.f32 %v2722, %v2975
        %v3229 = vadd.f32 %v2723, %v2977
        %v3230 = vadd.f32 %v2724, %v2979
        %v3231 = vadd.f32 %v2725, %v2983
        %v3232 = vadd.f32 %v2726, %v2985
        %v3233 = vadd.f32 %v2727, %v2987
        %v3234 = vadd.f32 %v2728, %v2989
        %v3235 = vadd.f32 %v2729, %v2993
        %v3236 = vadd.f32 %v2730, %v2995
        %v3237 = vadd.f32 %v2731, %v2997
        %v3238 = vadd.f32 %v2732, %v2999
        %v3239 = vadd.f32 %v2733, %v3003
        %v3240 = vadd.f32 %v2734, %v3005
        %v3241 = vadd.f32 %v2735, %v3007
        %v3242 = vadd.f32 %v2736, %v3009
        %v3243 = vadd.f32 %v2737, %v3013
        %v3244 = vadd.f32 %v2738, %v3015
        %v3245 = vadd.f32 %v2739, %v3017
        %v3246 = vadd.f32 %v2740, %v3019
        %v3247 = vadd.f32 %v2741, %v3023
        %v3248 = vadd.f32 %v2742, %v3025
        %v3249 = vadd.f32 %v2743, %v3027
        %v3250 = vadd.f32 %v2744, %v3029
        %v3251 = vadd.f32 %v2745, %v3033
        %v3252 = vadd.f32 %v2746, %v3035
        %v3253 = vadd.f32 %v2747, %v3037
        %v3254 = vadd.f32 %v2748, %v3039
        %v3255 = vadd.f32 %v2749, %v3043
        %v3256 = vadd.f32 %v2750, %v3045
        %v3257 = vadd.f32 %v2751, %v3047
        %v3258 = vadd.f32 %v2752, %v3049
        %v3259 = vadd.f32 %v2753, %v3053
        %v3260 = vadd.f32 %v2754, %v3055
        %v3261 = vadd.f32 %v2755, %v3057
        %v3262 = vadd.f32 %v2756, %v3059
        %v3263 = vadd.f32 %v2757, %v3063
        %v3264 = vadd.f32 %v2758, %v3065
        %v3265 = vadd.f32 %v2759, %v3067
        %v3266 = vadd.f32 %v2760, %v3069
        %v3267 = vadd.f32 %v2761, %v3073
        %v3268 = vadd.f32 %v2762, %v3075
        %v3269 = vadd.f32 %v2763, %v3077
        %v3270 = vadd.f32 %v2764, %v3079
        %v3271 = vadd.f32 %v2765, %v3083
        %v3272 = vadd.f32 %v2766, %v3085
        %v3273 = vadd.f32 %v2767, %v3087
        %v3274 = vadd.f32 %v2768, %v3089
        %v3275 = vadd.f32 %v2769, %v3093
        %v3276 = vadd.f32 %v2770, %v3095
        %v3277 = vadd.f32 %v2771, %v3097
        %v3278 = vadd.f32 %v2772, %v3099
        %v3279 = vadd.f32 %v2773, %v3103
        %v3280 = vadd.f32 %v2774, %v3105
        %v3281 = vadd.f32 %v2775, %v3107
        %v3282 = vadd.f32 %v2776, %v3109
        %v3283 = vadd.f32 %v2777, %v3113
        %v3284 = vadd.f32 %v2778, %v3115
        %v3285 = vadd.f32 %v2779, %v3117
        %v3286 = vadd.f32 %v2780, %v3119
        %v3287 = vadd.f32 %v2781, %v3123
        %v3288 = vadd.f32 %v2782, %v3125
        %v3289 = vadd.f32 %v2783, %v3127
        %v3290 = vadd.f32 %v2784, %v3129
        %v3291 = vadd.f32 %v2785, %v3133
        %v3292 = vadd.f32 %v2786, %v3135
        %v3293 = vadd.f32 %v2787, %v3137
        %v3294 = vadd.f32 %v2788, %v3139
        %v3295 = vadd.f32 %v2789, %v3143
        %v3296 = vadd.f32 %v2790, %v3145
        %v3297 = vadd.f32 %v2791, %v3147
        %v3298 = vadd.f32 %v2792, %v3149
        %v3299 = vadd.f32 %v2793, %v3153
        %v3300 = vadd.f32 %v2794, %v3155
        %v3301 = vadd.f32 %v2795, %v3157
        %v3302 = vadd.f32 %v2796, %v3159
        %v3303 = vadd.f32 %v2797, %v3163
        %v3304 = vadd.f32 %v2798, %v3165
        %v3305 = vadd.f32 %v2799, %v3167
        %v3306 = vadd.f32 %v2800, %v3169
        %v3307 = vadd.f32 %v2801, %v3173
        %v3308 = vadd.f32 %v2802, %v3175
        %v3309 = vadd.f32 %v2803, %v3177
        %v3310 = vadd.f32 %v2804, %v3179
        %v3311 = vadd.f32 %v2805, %v3183
        %v3312 = vadd.f32 %v2806, %v3185
        %v3313 = vadd.f32 %v2807, %v3187
        %v3314 = vadd.f32 %v2808, %v3189
        %v3315 = vadd.f32 %v2809, %v3193
        %v3316 = vadd.f32 %v2810, %v3195
        %v3317 = vadd.f32 %v2811, %v3197
        %v3318 = vadd.f32 %v2812, %v3199
        %v3319 = vadd.f32 %v2813, %v3203
        %v3320 = vadd.f32 %v2814, %v3205
        %v3321 = vadd.f32 %v2815, %v3207
        %v3322 = vadd.f32 %v2816, %v3209
        %v3323 = vld [vmem:[%s2] sm:$0x3]
        %v3325 = vlaneseq
        %v3326 = vshrl.u32 %v3325, 7
        %v3327 = vsub.s32 0, %v3326
        %v3328 = vrot.slane %v3323, %v3327
        %v3329 = vlaneseq
        %v3330 = vshrl.u32 %v3329, 7
        %v3331 = vsub.s32 1, %v3330
        %v3332 = vrot.slane %v3323, %v3331
        %v3335 = vadd.f32 %v3211, %v3328
        %v3336 = vadd.f32 %v3212, %v3332
        %v3337 = vadd.f32 %v3213, %v3328
        %v3338 = vadd.f32 %v3214, %v3332
        %v3339 = vadd.f32 %v3215, %v3328
        %v3340 = vadd.f32 %v3216, %v3332
        %v3341 = vadd.f32 %v3217, %v3328
        %v3342 = vadd.f32 %v3218, %v3332
        %v3343 = vadd.f32 %v3219, %v3328
        %v3344 = vadd.f32 %v3220, %v3332
        %v3345 = vadd.f32 %v3221, %v3328
        %v3346 = vadd.f32 %v3222, %v3332
        %v3347 = vadd.f32 %v3223, %v3328
        %v3348 = vadd.f32 %v3224, %v3332
        %v3349 = vadd.f32 %v3225, %v3328
        %v3350 = vadd.f32 %v3226, %v3332
        %v3351 = vadd.f32 %v3227, %v3328
        %v3352 = vadd.f32 %v3228, %v3332
        %v3353 = vadd.f32 %v3229, %v3328
        %v3354 = vadd.f32 %v3230, %v3332
        %v3355 = vadd.f32 %v3231, %v3328
        %v3356 = vadd.f32 %v3232, %v3332
        %v3357 = vadd.f32 %v3233, %v3328
        %v3358 = vadd.f32 %v3234, %v3332
        %v3359 = vadd.f32 %v3235, %v3328
        %v3360 = vadd.f32 %v3236, %v3332
        %v3361 = vadd.f32 %v3237, %v3328
        %v3362 = vadd.f32 %v3238, %v3332
        %v3363 = vadd.f32 %v3239, %v3328
        %v3364 = vadd.f32 %v3240, %v3332
        %v3365 = vadd.f32 %v3241, %v3328
        %v3366 = vadd.f32 %v3242, %v3332
        %v3367 = vadd.f32 %v3243, %v3328
        %v3368 = vadd.f32 %v3244, %v3332
        %v3369 = vadd.f32 %v3245, %v3328
        %v3370 = vadd.f32 %v3246, %v3332
        %v3371 = vadd.f32 %v3247, %v3328
        %v3372 = vadd.f32 %v3248, %v3332
        %v3373 = vadd.f32 %v3249, %v3328
        %v3374 = vadd.f32 %v3250, %v3332
        %v3375 = vadd.f32 %v3251, %v3328
        %v3376 = vadd.f32 %v3252, %v3332
        %v3377 = vadd.f32 %v3253, %v3328
        %v3378 = vadd.f32 %v3254, %v3332
        %v3379 = vadd.f32 %v3255, %v3328
        %v3380 = vadd.f32 %v3256, %v3332
        %v3381 = vadd.f32 %v3257, %v3328
        %v3382 = vadd.f32 %v3258, %v3332
        %v3383 = vadd.f32 %v3259, %v3328
        %v3384 = vadd.f32 %v3260, %v3332
        %v3385 = vadd.f32 %v3261, %v3328
        %v3386 = vadd.f32 %v3262, %v3332
        %v3387 = vadd.f32 %v3263, %v3328
        %v3388 = vadd.f32 %v3264, %v3332
        %v3389 = vadd.f32 %v3265, %v3328
        %v3390 = vadd.f32 %v3266, %v3332
        %v3391 = vadd.f32 %v3267, %v3328
        %v3392 = vadd.f32 %v3268, %v3332
        %v3393 = vadd.f32 %v3269, %v3328
        %v3394 = vadd.f32 %v3270, %v3332
        %v3395 = vadd.f32 %v3271, %v3328
        %v3396 = vadd.f32 %v3272, %v3332
        %v3397 = vadd.f32 %v3273, %v3328
        %v3398 = vadd.f32 %v3274, %v3332
        %v3399 = vadd.f32 %v3275, %v3328
        %v3400 = vadd.f32 %v3276, %v3332
        %v3401 = vadd.f32 %v3277, %v3328
        %v3402 = vadd.f32 %v3278, %v3332
        %v3403 = vadd.f32 %v3279, %v3328
        %v3404 = vadd.f32 %v3280, %v3332
        %v3405 = vadd.f32 %v3281, %v3328
        %v3406 = vadd.f32 %v3282, %v3332
        %v3407 = vadd.f32 %v3283, %v3328
        %v3408 = vadd.f32 %v3284, %v3332
        %v3409 = vadd.f32 %v3285, %v3328
        %v3410 = vadd.f32 %v3286, %v3332
        %v3411 = vadd.f32 %v3287, %v3328
        %v3412 = vadd.f32 %v3288, %v3332
        %v3413 = vadd.f32 %v3289, %v3328
        %v3414 = vadd.f32 %v3290, %v3332
        %v3415 = vadd.f32 %v3291, %v3328
        %v3416 = vadd.f32 %v3292, %v3332
        %v3417 = vadd.f32 %v3293, %v3328
        %v3418 = vadd.f32 %v3294, %v3332
        %v3419 = vadd.f32 %v3295, %v3328
        %v3420 = vadd.f32 %v3296, %v3332
        %v3421 = vadd.f32 %v3297, %v3328
        %v3422 = vadd.f32 %v3298, %v3332
        %v3423 = vadd.f32 %v3299, %v3328
        %v3424 = vadd.f32 %v3300, %v3332
        %v3425 = vadd.f32 %v3301, %v3328
        %v3426 = vadd.f32 %v3302, %v3332
        %v3427 = vadd.f32 %v3303, %v3328
        %v3428 = vadd.f32 %v3304, %v3332
        %v3429 = vadd.f32 %v3305, %v3328
        %v3430 = vadd.f32 %v3306, %v3332
        %v3431 = vadd.f32 %v3307, %v3328
        %v3432 = vadd.f32 %v3308, %v3332
        %v3433 = vadd.f32 %v3309, %v3328
        %v3434 = vadd.f32 %v3310, %v3332
        %v3435 = vadd.f32 %v3311, %v3328
        %v3436 = vadd.f32 %v3312, %v3332
        %v3437 = vadd.f32 %v3313, %v3328
        %v3438 = vadd.f32 %v3314, %v3332
        %v3439 = vadd.f32 %v3315, %v3328
        %v3440 = vadd.f32 %v3316, %v3332
        %v3441 = vadd.f32 %v3317, %v3328
        %v3442 = vadd.f32 %v3318, %v3332
        %v3443 = vadd.f32 %v3319, %v3328
        %v3444 = vadd.f32 %v3320, %v3332
        %v3445 = vadd.f32 %v3321, %v3328
        %v3446 = vadd.f32 %v3322, %v3332
        %v3447 = vmax.f32 %v3335, 0.0
        %v3448 = vmax.f32 %v3336, 0.0
        %v3449 = vmax.f32 %v3337, 0.0
        %v3450 = vmax.f32 %v3338, 0.0
        %v3451 = vmax.f32 %v3339, 0.0
        %v3452 = vmax.f32 %v3340, 0.0
        %v3453 = vmax.f32 %v3341, 0.0
        %v3454 = vmax.f32 %v3342, 0.0
        %v3455 = vmax.f32 %v3343, 0.0
        %v3456 = vmax.f32 %v3344, 0.0
        %v3457 = vmax.f32 %v3345, 0.0
        %v3458 = vmax.f32 %v3346, 0.0
        %v3459 = vmax.f32 %v3347, 0.0
        %v3460 = vmax.f32 %v3348, 0.0
        %v3461 = vmax.f32 %v3349, 0.0
        %v3462 = vmax.f32 %v3350, 0.0
        %v3463 = vmax.f32 %v3351, 0.0
        %v3464 = vmax.f32 %v3352, 0.0
        %v3465 = vmax.f32 %v3353, 0.0
        %v3466 = vmax.f32 %v3354, 0.0
        %v3467 = vmax.f32 %v3355, 0.0
        %v3468 = vmax.f32 %v3356, 0.0
        %v3469 = vmax.f32 %v3357, 0.0
        %v3470 = vmax.f32 %v3358, 0.0
        %v3471 = vmax.f32 %v3359, 0.0
        %v3472 = vmax.f32 %v3360, 0.0
        %v3473 = vmax.f32 %v3361, 0.0
        %v3474 = vmax.f32 %v3362, 0.0
        %v3475 = vmax.f32 %v3363, 0.0
        %v3476 = vmax.f32 %v3364, 0.0
        %v3477 = vmax.f32 %v3365, 0.0
        %v3478 = vmax.f32 %v3366, 0.0
        %v3479 = vmax.f32 %v3367, 0.0
        %v3480 = vmax.f32 %v3368, 0.0
        %v3481 = vmax.f32 %v3369, 0.0
        %v3482 = vmax.f32 %v3370, 0.0
        %v3483 = vmax.f32 %v3371, 0.0
        %v3484 = vmax.f32 %v3372, 0.0
        %v3485 = vmax.f32 %v3373, 0.0
        %v3486 = vmax.f32 %v3374, 0.0
        %v3487 = vmax.f32 %v3375, 0.0
        %v3488 = vmax.f32 %v3376, 0.0
        %v3489 = vmax.f32 %v3377, 0.0
        %v3490 = vmax.f32 %v3378, 0.0
        %v3491 = vmax.f32 %v3379, 0.0
        %v3492 = vmax.f32 %v3380, 0.0
        %v3493 = vmax.f32 %v3381, 0.0
        %v3494 = vmax.f32 %v3382, 0.0
        %v3495 = vmax.f32 %v3383, 0.0
        %v3496 = vmax.f32 %v3384, 0.0
        %v3497 = vmax.f32 %v3385, 0.0
        %v3498 = vmax.f32 %v3386, 0.0
        %v3499 = vmax.f32 %v3387, 0.0
        %v3500 = vmax.f32 %v3388, 0.0
        %v3501 = vmax.f32 %v3389, 0.0
        %v3502 = vmax.f32 %v3390, 0.0
        %v3503 = vmax.f32 %v3391, 0.0
        %v3504 = vmax.f32 %v3392, 0.0
        %v3505 = vmax.f32 %v3393, 0.0
        %v3506 = vmax.f32 %v3394, 0.0
        %v3507 = vmax.f32 %v3395, 0.0
        %v3508 = vmax.f32 %v3396, 0.0
        %v3509 = vmax.f32 %v3397, 0.0
        %v3510 = vmax.f32 %v3398, 0.0
        %v3511 = vmax.f32 %v3399, 0.0
        %v3512 = vmax.f32 %v3400, 0.0
        %v3513 = vmax.f32 %v3401, 0.0
        %v3514 = vmax.f32 %v3402, 0.0
        %v3515 = vmax.f32 %v3403, 0.0
        %v3516 = vmax.f32 %v3404, 0.0
        %v3517 = vmax.f32 %v3405, 0.0
        %v3518 = vmax.f32 %v3406, 0.0
        %v3519 = vmax.f32 %v3407, 0.0
        %v3520 = vmax.f32 %v3408, 0.0
        %v3521 = vmax.f32 %v3409, 0.0
        %v3522 = vmax.f32 %v3410, 0.0
        %v3523 = vmax.f32 %v3411, 0.0
        %v3524 = vmax.f32 %v3412, 0.0
        %v3525 = vmax.f32 %v3413, 0.0
        %v3526 = vmax.f32 %v3414, 0.0
        %v3527 = vmax.f32 %v3415, 0.0
        %v3528 = vmax.f32 %v3416, 0.0
        %v3529 = vmax.f32 %v3417, 0.0
        %v3530 = vmax.f32 %v3418, 0.0
        %v3531 = vmax.f32 %v3419, 0.0
        %v3532 = vmax.f32 %v3420, 0.0
        %v3533 = vmax.f32 %v3421, 0.0
        %v3534 = vmax.f32 %v3422, 0.0
        %v3535 = vmax.f32 %v3423, 0.0
        %v3536 = vmax.f32 %v3424, 0.0
        %v3537 = vmax.f32 %v3425, 0.0
        %v3538 = vmax.f32 %v3426, 0.0
        %v3539 = vmax.f32 %v3427, 0.0
        %v3540 = vmax.f32 %v3428, 0.0
        %v3541 = vmax.f32 %v3429, 0.0
        %v3542 = vmax.f32 %v3430, 0.0
        %v3543 = vmax.f32 %v3431, 0.0
        %v3544 = vmax.f32 %v3432, 0.0
        %v3545 = vmax.f32 %v3433, 0.0
        %v3546 = vmax.f32 %v3434, 0.0
        %v3547 = vmax.f32 %v3435, 0.0
        %v3548 = vmax.f32 %v3436, 0.0
        %v3549 = vmax.f32 %v3437, 0.0
        %v3550 = vmax.f32 %v3438, 0.0
        %v3551 = vmax.f32 %v3439, 0.0
        %v3552 = vmax.f32 %v3440, 0.0
        %v3553 = vmax.f32 %v3441, 0.0
        %v3554 = vmax.f32 %v3442, 0.0
        %v3555 = vmax.f32 %v3443, 0.0
        %v3556 = vmax.f32 %v3444, 0.0
        %v3557 = vmax.f32 %v3445, 0.0
        %v3558 = vmax.f32 %v3446, 0.0
        %v3559 = vmax.f32 %v3447, %v3451
        %v3560 = vmax.f32 %v3448, %v3452
        %v3561 = vmax.f32 %v3449, %v3453
        %v3562 = vmax.f32 %v3450, %v3454
        %v3563 = vmax.f32 %v3455, %v3459
        %v3564 = vmax.f32 %v3456, %v3460
        %v3565 = vmax.f32 %v3457, %v3461
        %v3566 = vmax.f32 %v3458, %v3462
        %v3567 = vmax.f32 %v3463, %v3467
        %v3568 = vmax.f32 %v3464, %v3468
        %v3569 = vmax.f32 %v3465, %v3469
        %v3570 = vmax.f32 %v3466, %v3470
        %v3571 = vmax.f32 %v3471, %v3475
        %v3572 = vmax.f32 %v3472, %v3476
        %v3573 = vmax.f32 %v3473, %v3477
        %v3574 = vmax.f32 %v3474, %v3478
        %v3575 = vmax.f32 %v3479, %v3483
        %v3576 = vmax.f32 %v3480, %v3484
        %v3577 = vmax.f32 %v3481, %v3485
        %v3578 = vmax.f32 %v3482, %v3486
        %v3579 = vmax.f32 %v3487, %v3491
        %v3580 = vmax.f32 %v3488, %v3492
        %v3581 = vmax.f32 %v3489, %v3493
        %v3582 = vmax.f32 %v3490, %v3494
        %v3583 = vmax.f32 %v3495, %v3499
        %v3584 = vmax.f32 %v3496, %v3500
        %v3585 = vmax.f32 %v3497, %v3501
        %v3586 = vmax.f32 %v3498, %v3502
        %v3587 = vmax.f32 %v3503, %v3507
        %v3588 = vmax.f32 %v3504, %v3508
        %v3589 = vmax.f32 %v3505, %v3509
        %v3590 = vmax.f32 %v3506, %v3510
        %v3591 = vmax.f32 %v3511, %v3515
        %v3592 = vmax.f32 %v3512, %v3516
        %v3593 = vmax.f32 %v3513, %v3517
        %v3594 = vmax.f32 %v3514, %v3518
        %v3595 = vmax.f32 %v3519, %v3523
        %v3596 = vmax.f32 %v3520, %v3524
        %v3597 = vmax.f32 %v3521, %v3525
        %v3598 = vmax.f32 %v3522, %v3526
        %v3599 = vmax.f32 %v3527, %v3531
        %v3600 = vmax.f32 %v3528, %v3532
        %v3601 = vmax.f32 %v3529, %v3533
        %v3602 = vmax.f32 %v3530, %v3534
        %v3603 = vmax.f32 %v3535, %v3539
        %v3604 = vmax.f32 %v3536, %v3540
        %v3605 = vmax.f32 %v3537, %v3541
        %v3606 = vmax.f32 %v3538, %v3542
        %v3607 = vmax.f32 %v3543, %v3547
        %v3608 = vmax.f32 %v3544, %v3548
        %v3609 = vmax.f32 %v3545, %v3549
        %v3610 = vmax.f32 %v3546, %v3550
        %v3611 = vmax.f32 %v3551, %v3555
        %v3612 = vmax.f32 %v3552, %v3556
        %v3613 = vmax.f32 %v3553, %v3557
        %v3614 = vmax.f32 %v3554, %v3558
        %v3615 = vmax.f32 %v3559, %v3560
        %v3616 = vmax.f32 %v3561, %v3562
        %v3617 = vmax.f32 %v3563, %v3564
        %v3618 = vmax.f32 %v3565, %v3566
        %v3619 = vmax.f32 %v3567, %v3568
        %v3620 = vmax.f32 %v3569, %v3570
        %v3621 = vmax.f32 %v3571, %v3572
        %v3622 = vmax.f32 %v3573, %v3574
        %v3623 = vmax.f32 %v3575, %v3576
        %v3624 = vmax.f32 %v3577, %v3578
        %v3625 = vmax.f32 %v3579, %v3580
        %v3626 = vmax.f32 %v3581, %v3582
        %v3627 = vmax.f32 %v3583, %v3584
        %v3628 = vmax.f32 %v3585, %v3586
        %v3629 = vmax.f32 %v3587, %v3588
        %v3630 = vmax.f32 %v3589, %v3590
        %v3631 = vmax.f32 %v3591, %v3592
        %v3632 = vmax.f32 %v3593, %v3594
        %v3633 = vmax.f32 %v3595, %v3596
        %v3634 = vmax.f32 %v3597, %v3598
        %v3635 = vmax.f32 %v3599, %v3600
        %v3636 = vmax.f32 %v3601, %v3602
        %v3637 = vmax.f32 %v3603, %v3604
        %v3638 = vmax.f32 %v3605, %v3606
        %v3639 = vmax.f32 %v3607, %v3608
        %v3640 = vmax.f32 %v3609, %v3610
        %v3641 = vmax.f32 %v3611, %v3612
        %v3642 = vmax.f32 %v3613, %v3614
        %v3643 = vpack.c.bf16 %v3616, %v3615
        %v3644 = vpack.c.bf16 %v3618, %v3617
        %v3645 = vpack.c.bf16 %v3620, %v3619
        %v3646 = vpack.c.bf16 %v3622, %v3621
        %v3647 = vpack.c.bf16 %v3624, %v3623
        %v3648 = vpack.c.bf16 %v3626, %v3625
        %v3649 = vpack.c.bf16 %v3628, %v3627
        %v3650 = vpack.c.bf16 %v3630, %v3629
        %v3651 = vpack.c.bf16 %v3632, %v3631
        %v3652 = vpack.c.bf16 %v3634, %v3633
        %v3653 = vpack.c.bf16 %v3636, %v3635
        %v3654 = vpack.c.bf16 %v3638, %v3637
        %v3655 = vpack.c.bf16 %v3640, %v3639
        %v3656 = vpack.c.bf16 %v3642, %v3641
        %v3657 = vld [vmem:[%s3] sm:$0xff]
        %v3658 = vld [vmem:[%s3 + $0x8] sm:$0xff]
        %v3659 = vld [vmem:[%s3 + $0x10] sm:$0xff]
        %v3660 = vld [vmem:[%s3 + $0x18] sm:$0xff]
        %v3661 = vld [vmem:[%s3 + $0x20] sm:$0xff]
        %v3662 = vld [vmem:[%s3 + $0x28] sm:$0xff]
        %v3663 = vld [vmem:[%s3 + $0x30] sm:$0xff]
        %v3664 = vld [vmem:[%s3 + $0x38] sm:$0xff]
        %v3665 = vld [vmem:[%s3 + $0x40] sm:$0xff]
        %v3666 = vld [vmem:[%s3 + $0x48] sm:$0xff]
        %v3667 = vld [vmem:[%s3 + $0x50] sm:$0xff]
        %v3668 = vld [vmem:[%s3 + $0x58] sm:$0xff]
        %v3669 = vld [vmem:[%s3 + $0x60] sm:$0xff]
        %v3670 = vld [vmem:[%s3 + $0x68] sm:$0xff]
        %s3671 = scalar_lea.vmem %s3, 112
        %v3672 = vld [vmem:[%s3671] sm:$0xff]
        %v3673 = vld [vmem:[%s3671 + $0x8] sm:$0xff]
        %v3674 = vld [vmem:[%s3671 + $0x10] sm:$0xff]
        %v3675 = vld [vmem:[%s3671 + $0x18] sm:$0xff]
        %v3676 = vld [vmem:[%s3671 + $0x20] sm:$0xff]
        %v3677 = vld [vmem:[%s3671 + $0x28] sm:$0xff]
        %v3678 = vld [vmem:[%s3671 + $0x30] sm:$0xff]
        %v3679 = vld [vmem:[%s3671 + $0x38] sm:$0xff]
        %v3680 = vld [vmem:[%s3671 + $0x40] sm:$0xff]
        %v3681 = vld [vmem:[%s3671 + $0x48] sm:$0xff]
        %v3682 = vld [vmem:[%s3671 + $0x50] sm:$0xff]
        %v3683 = vld [vmem:[%s3671 + $0x58] sm:$0xff]
        %v3684 = vld [vmem:[%s3671 + $0x60] sm:$0xff]
        %v3685 = vld [vmem:[%s3671 + $0x68] sm:$0xff]
        %v3700 = vunpack.c.l.b16 %v3672
        %v3701 = vunpack.c.h.b16 %v3672
        %v3702 = vunpack.c.l.b16 %v3673
        %v3703 = vunpack.c.h.b16 %v3673
        %v3704 = vunpack.c.l.b16 %v3674
        %v3705 = vunpack.c.h.b16 %v3674
        %v3706 = vunpack.c.l.b16 %v3675
        %v3707 = vunpack.c.h.b16 %v3675
        %v3708 = vunpack.c.l.b16 %v3676
        %v3709 = vunpack.c.h.b16 %v3676
        %v3710 = vunpack.c.l.b16 %v3677
        %v3711 = vunpack.c.h.b16 %v3677
        %v3712 = vunpack.c.l.b16 %v3678
        %v3713 = vunpack.c.h.b16 %v3678
        %v3714 = vunpack.c.l.b16 %v3679
        %v3715 = vunpack.c.h.b16 %v3679
        %v3716 = vunpack.c.l.b16 %v3680
        %v3717 = vunpack.c.h.b16 %v3680
        %v3718 = vunpack.c.l.b16 %v3681
        %v3719 = vunpack.c.h.b16 %v3681
        %v3720 = vunpack.c.l.b16 %v3682
        %v3721 = vunpack.c.h.b16 %v3682
        %v3722 = vunpack.c.l.b16 %v3683
        %v3723 = vunpack.c.h.b16 %v3683
        %v3724 = vunpack.c.l.b16 %v3684
        %v3725 = vunpack.c.h.b16 %v3684
        %v3726 = vunpack.c.l.b16 %v3685
        %v3727 = vunpack.c.h.b16 %v3685
        %v3728 = vpack.c.b16 %v3702, %v3700
        %v3729 = vpack.c.b16 %v3703, %v3701
        %v3730 = vpack.c.b16 %v3706, %v3704
        %v3731 = vpack.c.b16 %v3707, %v3705
        %v3732 = vpack.c.b16 %v3710, %v3708
        %v3733 = vpack.c.b16 %v3711, %v3709
        %v3734 = vpack.c.b16 %v3714, %v3712
        %v3735 = vpack.c.b16 %v3715, %v3713
        %v3736 = vpack.c.b16 %v3718, %v3716
        %v3737 = vpack.c.b16 %v3719, %v3717
        %v3738 = vpack.c.b16 %v3722, %v3720
        %v3739 = vpack.c.b16 %v3723, %v3721
        %v3740 = vpack.c.b16 %v3726, %v3724
        %v3741 = vpack.c.b16 %v3727, %v3725
        %vm3756 = vcmask 916480
        %v3758 = vsel %vm3756, %v3644, 0
        %v3761 = vsel %vm3756, %v3645, 0
        %v3764 = vsel %vm3756, %v3646, 0
        %v3767 = vsel %vm3756, %v3647, 0
        %v3770 = vsel %vm3756, %v3648, 0
        %v3773 = vsel %vm3756, %v3649, 0
        %v3776 = vsel %vm3756, %v3650, 0
        %v3779 = vsel %vm3756, %v3651, 0
        %v3782 = vsel %vm3756, %v3652, 0
        %v3785 = vsel %vm3756, %v3653, 0
        %3787 = vmatprep.subr.bf16.mxu0 %v3729
        %3788 = vmatpush1.bf16.msra.mxu0 %v3728
        %3789 = vmatprep.subr.bf16.mxu0 %v3731
        %3790 = vmatpush1.bf16.msra.mxu0 %v3730
        %3791 = vmatprep.subr.bf16.mxu0 %v3733
        %3792 = vmatpush1.bf16.msra.mxu0 %v3732
        %3793 = vmatprep.subr.bf16.mxu0 %v3735
        %3794 = vmatpush1.bf16.msra.mxu0 %v3734
        %3795 = vmatprep.subr.bf16.mxu0 %v3737
        %3796 = vmatpush1.bf16.msra.mxu0 %v3736
        %3797 = vmatprep.subr.bf16.mxu0 %v3739
        %3798 = vmatpush1.bf16.msra.mxu0 %v3738
        %3799 = vmatprep.subr.bf16.mxu0 %v3741
        %3800 = vmatpush1.bf16.msra.mxu0 %v3740
        %3801 = vmatprep.subr.bf16.mxu0 0
        %3802 = vmatpush1.bf16.msra.mxu0 0
        %3803 = vmatprep.subr.bf16.mxu0 0
        %3804 = vmatpush1.bf16.msra.mxu0 0
        %3805 = vmatprep.subr.bf16.mxu0 0
        %3806 = vmatpush1.bf16.msra.mxu0 0
        %3807 = vmatprep.subr.bf16.mxu0 0
        %3808 = vmatpush1.bf16.msra.mxu0 0
        %3809 = vmatprep.subr.bf16.mxu0 0
        %3810 = vmatpush1.bf16.msra.mxu0 0
        %3811 = vmatprep.subr.bf16.mxu0 0
        %3812 = vmatpush1.bf16.msra.mxu0 0
        %3813 = vmatprep.subr.bf16.mxu0 0
        %3814 = vmatpush1.bf16.msra.mxu0 0
        %3815 = vmatprep.subr.bf16.mxu0 0
        %3816 = vmatpush1.bf16.msra.mxu0 0
        %3817 = vmatprep.subr.bf16.mxu0 0
        %3818 = vmatpush1.bf16.msra.mxu0 0
        %3819 = vmatprep.mubr.bf16.mxu0 0
        %3820 = vmatmul.mubr.bf16.gmra.mrb[0].mxu0 %v3758
        %v3821 = vpop.f32.mrb[0].mxu0
        %v3822 = vadd.f32 0.0, %v3821
        %v3823 = vpop.f32.mrb[0].mxu0
        %v3824 = vadd.f32 0.0, %v3823
        %v3825 = vpop.f32.mrb[0].mxu0
        %v3826 = vadd.f32 0.0, %v3825
        %v3827 = vpop.f32.mrb[0].mxu0
        %v3828 = vadd.f32 0.0, %v3827
        %3829 = vmatprep.mubr.bf16.mxu0 0
        %3830 = vmatmul.mubr.bf16.gmra.mrb[0].mxu0 %v3761
        %v3831 = vpop.f32.mrb[0].mxu0
        %v3832 = vadd.f32 0.0, %v3831
        %v3833 = vpop.f32.mrb[0].mxu0
        %v3834 = vadd.f32 0.0, %v3833
        %v3835 = vpop.f32.mrb[0].mxu0
        %v3836 = vadd.f32 0.0, %v3835
        %v3837 = vpop.f32.mrb[0].mxu0
        %v3838 = vadd.f32 0.0, %v3837
        %3839 = vmatprep.mubr.bf16.mxu0 0
        %3840 = vmatmul.mubr.bf16.gmra.mrb[0].mxu0 %v3764
        %v3841 = vpop.f32.mrb[0].mxu0
        %v3842 = vadd.f32 0.0, %v3841
        %v3843 = vpop.f32.mrb[0].mxu0
        %v3844 = vadd.f32 0.0, %v3843
        %v3845 = vpop.f32.mrb[0].mxu0
        %v3846 = vadd.f32 0.0, %v3845
        %v3847 = vpop.f32.mrb[0].mxu0
        %v3848 = vadd.f32 0.0, %v3847
        %3849 = vmatprep.mubr.bf16.mxu0 0
        %3850 = vmatmul.mubr.bf16.gmra.mrb[0].mxu0 %v3767
        %v3851 = vpop.f32.mrb[0].mxu0
        %v3852 = vadd.f32 0.0, %v3851
        %v3853 = vpop.f32.mrb[0].mxu0
        %v3854 = vadd.f32 0.0, %v3853
        %v3855 = vpop.f32.mrb[0].mxu0
        %v3856 = vadd.f32 0.0, %v3855
        %v3857 = vpop.f32.mrb[0].mxu0
        %v3858 = vadd.f32 0.0, %v3857
        %3859 = vmatprep.mubr.bf16.mxu0 0
        %3860 = vmatmul.mubr.bf16.gmra.mrb[0].mxu0 %v3770
        %v3861 = vpop.f32.mrb[0].mxu0
        %v3862 = vadd.f32 0.0, %v3861
        %v3863 = vpop.f32.mrb[0].mxu0
        %v3864 = vadd.f32 0.0, %v3863
        %v3865 = vpop.f32.mrb[0].mxu0
        %v3866 = vadd.f32 0.0, %v3865
        %v3867 = vpop.f32.mrb[0].mxu0
        %v3868 = vadd.f32 0.0, %v3867
        %3869 = vmatprep.mubr.bf16.mxu0 0
        %3870 = vmatmul.mubr.bf16.gmra.mrb[0].mxu0 %v3773
        %v3871 = vpop.f32.mrb[0].mxu0
        %v3872 = vadd.f32 0.0, %v3871
        %v3873 = vpop.f32.mrb[0].mxu0
        %v3874 = vadd.f32 0.0, %v3873
        %v3875 = vpop.f32.mrb[0].mxu0
        %v3876 = vadd.f32 0.0, %v3875
        %v3877 = vpop.f32.mrb[0].mxu0
        %v3878 = vadd.f32 0.0, %v3877
        %3879 = vmatprep.mubr.bf16.mxu0 0
        %3880 = vmatmul.mubr.bf16.gmra.mrb[0].mxu0 %v3776
        %v3881 = vpop.f32.mrb[0].mxu0
        %v3882 = vadd.f32 0.0, %v3881
        %v3883 = vpop.f32.mrb[0].mxu0
        %v3884 = vadd.f32 0.0, %v3883
        %v3885 = vpop.f32.mrb[0].mxu0
        %v3886 = vadd.f32 0.0, %v3885
        %v3887 = vpop.f32.mrb[0].mxu0
        %v3888 = vadd.f32 0.0, %v3887
        %3889 = vmatprep.mubr.bf16.mxu0 0
        %3890 = vmatmul.mubr.bf16.gmra.mrb[0].mxu0 %v3779
        %v3891 = vpop.f32.mrb[0].mxu0
        %v3892 = vadd.f32 0.0, %v3891
        %v3893 = vpop.f32.mrb[0].mxu0
        %v3894 = vadd.f32 0.0, %v3893
        %v3895 = vpop.f32.mrb[0].mxu0
        %v3896 = vadd.f32 0.0, %v3895
        %v3897 = vpop.f32.mrb[0].mxu0
        %v3898 = vadd.f32 0.0, %v3897
        %3899 = vmatprep.mubr.bf16.mxu0 0
        %3900 = vmatmul.mubr.bf16.gmra.mrb[0].mxu0 %v3782
        %v3901 = vpop.f32.mrb[0].mxu0
        %v3902 = vadd.f32 0.0, %v3901
        %v3903 = vpop.f32.mrb[0].mxu0
        %v3904 = vadd.f32 0.0, %v3903
        %v3905 = vpop.f32.mrb[0].mxu0
        %v3906 = vadd.f32 0.0, %v3905
        %v3907 = vpop.f32.mrb[0].mxu0
        %v3908 = vadd.f32 0.0, %v3907
        %3909 = vmatprep.mubr.bf16.mxu0 0
        %3910 = vmatmul.mubr.bf16.gmra.mrb[0].mxu0 %v3785
        %v3911 = vpop.f32.mrb[0].mxu0
        %v3912 = vadd.f32 0.0, %v3911
        %v3913 = vpop.f32.mrb[0].mxu0
        %v3914 = vadd.f32 0.0, %v3913
        %v3915 = vpop.f32.mrb[0].mxu0
        %v3916 = vadd.f32 0.0, %v3915
        %v3917 = vpop.f32.mrb[0].mxu0
        %v3918 = vadd.f32 0.0, %v3917
        %3919 = vdwg.mxu0
        %v3934 = vunpack.c.l.b16 %v3657
        %v3935 = vunpack.c.h.b16 %v3657
        %v3936 = vunpack.c.l.b16 %v3658
        %v3937 = vunpack.c.h.b16 %v3658
        %v3938 = vunpack.c.l.b16 %v3659
        %v3939 = vunpack.c.h.b16 %v3659
        %v3940 = vunpack.c.l.b16 %v3660
        %v3941 = vunpack.c.h.b16 %v3660
        %v3942 = vunpack.c.l.b16 %v3661
        %v3943 = vunpack.c.h.b16 %v3661
        %v3944 = vunpack.c.l.b16 %v3662
        %v3945 = vunpack.c.h.b16 %v3662
        %v3946 = vunpack.c.l.b16 %v3663
        %v3947 = vunpack.c.h.b16 %v3663
        %v3948 = vunpack.c.l.b16 %v3664
        %v3949 = vunpack.c.h.b16 %v3664
        %v3950 = vunpack.c.l.b16 %v3665
        %v3951 = vunpack.c.h.b16 %v3665
        %v3952 = vunpack.c.l.b16 %v3666
        %v3953 = vunpack.c.h.b16 %v3666
        %v3954 = vunpack.c.l.b16 %v3667
        %v3955 = vunpack.c.h.b16 %v3667
        %v3956 = vunpack.c.l.b16 %v3668
        %v3957 = vunpack.c.h.b16 %v3668
        %v3958 = vunpack.c.l.b16 %v3669
        %v3959 = vunpack.c.h.b16 %v3669
        %v3960 = vunpack.c.l.b16 %v3670
        %v3961 = vunpack.c.h.b16 %v3670
        %v3962 = vpack.c.b16 %v3936, %v3934
        %v3963 = vpack.c.b16 %v3937, %v3935
        %v3964 = vpack.c.b16 %v3940, %v3938
        %v3965 = vpack.c.b16 %v3941, %v3939
        %v3966 = vpack.c.b16 %v3944, %v3942
        %v3967 = vpack.c.b16 %v3945, %v3943
        %v3968 = vpack.c.b16 %v3948, %v3946
        %v3969 = vpack.c.b16 %v3949, %v3947
        %v3970 = vpack.c.b16 %v3952, %v3950
        %v3971 = vpack.c.b16 %v3953, %v3951
        %v3972 = vpack.c.b16 %v3956, %v3954
        %v3973 = vpack.c.b16 %v3957, %v3955
        %v3974 = vpack.c.b16 %v3960, %v3958
        %v3975 = vpack.c.b16 %v3961, %v3959
        %v3991 = vsel %vm3756, %v3643, 0
        %3993 = vmatprep.subr.bf16.mxu0 %v3963
        %3994 = vmatpush1.bf16.msra.mxu0 %v3962
        %3995 = vmatprep.subr.bf16.mxu0 %v3965
        %3996 = vmatpush1.bf16.msra.mxu0 %v3964
        %3997 = vmatprep.subr.bf16.mxu0 %v3967
        %3998 = vmatpush1.bf16.msra.mxu0 %v3966
        %3999 = vmatprep.subr.bf16.mxu0 %v3969
        %4000 = vmatpush1.bf16.msra.mxu0 %v3968
        %4001 = vmatprep.subr.bf16.mxu0 %v3971
        %4002 = vmatpush1.bf16.msra.mxu0 %v3970
        %4003 = vmatprep.subr.bf16.mxu0 %v3973
        %4004 = vmatpush1.bf16.msra.mxu0 %v3972
        %4005 = vmatprep.subr.bf16.mxu0 %v3975
        %4006 = vmatpush1.bf16.msra.mxu0 %v3974
        %4007 = vmatprep.subr.bf16.mxu0 0
        %4008 = vmatpush1.bf16.msra.mxu0 0
        %4009 = vmatprep.subr.bf16.mxu0 0
        %4010 = vmatpush1.bf16.msra.mxu0 0
        %4011 = vmatprep.subr.bf16.mxu0 0
        %4012 = vmatpush1.bf16.msra.mxu0 0
        %4013 = vmatprep.subr.bf16.mxu0 0
        %4014 = vmatpush1.bf16.msra.mxu0 0
        %4015 = vmatprep.subr.bf16.mxu0 0
        %4016 = vmatpush1.bf16.msra.mxu0 0
        %4017 = vmatprep.subr.bf16.mxu0 0
        %4018 = vmatpush1.bf16.msra.mxu0 0
        %4019 = vmatprep.subr.bf16.mxu0 0
        %4020 = vmatpush1.bf16.msra.mxu0 0
        %4021 = vmatprep.subr.bf16.mxu0 0
        %4022 = vmatpush1.bf16.msra.mxu0 0
        %4023 = vmatprep.subr.bf16.mxu0 0
        %4024 = vmatpush1.bf16.msra.mxu0 0
        %4025 = vmatprep.mubr.bf16.mxu0 0
        %4026 = vmatmul.mubr.bf16.gmra.mrb[0].mxu0 %v3991
        %v4027 = vpop.f32.mrb[0].mxu0
        %v4028 = vadd.f32 %v3822, %v4027
        %v4029 = vpop.f32.mrb[0].mxu0
        %v4030 = vadd.f32 %v3824, %v4029
        %v4031 = vpop.f32.mrb[0].mxu0
        %v4032 = vadd.f32 %v3826, %v4031
        %v4033 = vpop.f32.mrb[0].mxu0
        %v4034 = vadd.f32 %v3828, %v4033
        %4035 = vmatprep.mubr.bf16.mxu0 0
        %4036 = vmatmul.mubr.bf16.gmra.mrb[0].mxu0 %v3758
        %v4037 = vpop.f32.mrb[0].mxu0
        %v4038 = vadd.f32 %v3832, %v4037
        %v4039 = vpop.f32.mrb[0].mxu0
        %v4040 = vadd.f32 %v3834, %v4039
        %v4041 = vpop.f32.mrb[0].mxu0
        %v4042 = vadd.f32 %v3836, %v4041
        %v4043 = vpop.f32.mrb[0].mxu0
        %v4044 = vadd.f32 %v3838, %v4043
        %4045 = vmatprep.mubr.bf16.mxu0 0
        %4046 = vmatmul.mubr.bf16.gmra.mrb[0].mxu0 %v3761
        %v4047 = vpop.f32.mrb[0].mxu0
        %v4048 = vadd.f32 %v3842, %v4047
        %v4049 = vpop.f32.mrb[0].mxu0
        %v4050 = vadd.f32 %v3844, %v4049
        %v4051 = vpop.f32.mrb[0].mxu0
        %v4052 = vadd.f32 %v3846, %v4051
        %v4053 = vpop.f32.mrb[0].mxu0
        %v4054 = vadd.f32 %v3848, %v4053
        %4055 = vmatprep.mubr.bf16.mxu0 0
        %4056 = vmatmul.mubr.bf16.gmra.mrb[0].mxu0 %v3764
        %v4057 = vpop.f32.mrb[0].mxu0
        %v4058 = vadd.f32 %v3852, %v4057
        %v4059 = vpop.f32.mrb[0].mxu0
        %v4060 = vadd.f32 %v3854, %v4059
        %v4061 = vpop.f32.mrb[0].mxu0
        %v4062 = vadd.f32 %v3856, %v4061
        %v4063 = vpop.f32.mrb[0].mxu0
        %v4064 = vadd.f32 %v3858, %v4063
        %4065 = vmatprep.mubr.bf16.mxu0 0
        %4066 = vmatmul.mubr.bf16.gmra.mrb[0].mxu0 %v3767
        %v4067 = vpop.f32.mrb[0].mxu0
        %v4068 = vadd.f32 %v3862, %v4067
        %v4069 = vpop.f32.mrb[0].mxu0
        %v4070 = vadd.f32 %v3864, %v4069
        %v4071 = vpop.f32.mrb[0].mxu0
        %v4072 = vadd.f32 %v3866, %v4071
        %v4073 = vpop.f32.mrb[0].mxu0
        %v4074 = vadd.f32 %v3868, %v4073
        %4075 = vmatprep.mubr.bf16.mxu0 0
        %4076 = vmatmul.mubr.bf16.gmra.mrb[0].mxu0 %v3770
        %v4077 = vpop.f32.mrb[0].mxu0
        %v4078 = vadd.f32 %v3872, %v4077
        %v4079 = vpop.f32.mrb[0].mxu0
        %v4080 = vadd.f32 %v3874, %v4079
        %v4081 = vpop.f32.mrb[0].mxu0
        %v4082 = vadd.f32 %v3876, %v4081
        %v4083 = vpop.f32.mrb[0].mxu0
        %v4084 = vadd.f32 %v3878, %v4083
        %4085 = vmatprep.mubr.bf16.mxu0 0
        %4086 = vmatmul.mubr.bf16.gmra.mrb[0].mxu0 %v3773
        %v4087 = vpop.f32.mrb[0].mxu0
        %v4088 = vadd.f32 %v3882, %v4087
        %v4089 = vpop.f32.mrb[0].mxu0
        %v4090 = vadd.f32 %v3884, %v4089
        %v4091 = vpop.f32.mrb[0].mxu0
        %v4092 = vadd.f32 %v3886, %v4091
        %v4093 = vpop.f32.mrb[0].mxu0
        %v4094 = vadd.f32 %v3888, %v4093
        %4095 = vmatprep.mubr.bf16.mxu0 0
        %4096 = vmatmul.mubr.bf16.gmra.mrb[0].mxu0 %v3776
        %v4097 = vpop.f32.mrb[0].mxu0
        %v4098 = vadd.f32 %v3892, %v4097
        %v4099 = vpop.f32.mrb[0].mxu0
        %v4100 = vadd.f32 %v3894, %v4099
        %v4101 = vpop.f32.mrb[0].mxu0
        %v4102 = vadd.f32 %v3896, %v4101
        %v4103 = vpop.f32.mrb[0].mxu0
        %v4104 = vadd.f32 %v3898, %v4103
        %4105 = vmatprep.mubr.bf16.mxu0 0
        %4106 = vmatmul.mubr.bf16.gmra.mrb[0].mxu0 %v3779
        %v4107 = vpop.f32.mrb[0].mxu0
        %v4108 = vadd.f32 %v3902, %v4107
        %v4109 = vpop.f32.mrb[0].mxu0
        %v4110 = vadd.f32 %v3904, %v4109
        %v4111 = vpop.f32.mrb[0].mxu0
        %v4112 = vadd.f32 %v3906, %v4111
        %v4113 = vpop.f32.mrb[0].mxu0
        %v4114 = vadd.f32 %v3908, %v4113
        %4115 = vmatprep.mubr.bf16.mxu0 0
        %4116 = vmatmul.mubr.bf16.gmra.mrb[0].mxu0 %v3782
        %v4117 = vpop.f32.mrb[0].mxu0
        %v4118 = vadd.f32 %v3912, %v4117
        %v4119 = vpop.f32.mrb[0].mxu0
        %v4120 = vadd.f32 %v3914, %v4119
        %v4121 = vpop.f32.mrb[0].mxu0
        %v4122 = vadd.f32 %v3916, %v4121
        %v4123 = vpop.f32.mrb[0].mxu0
        %v4124 = vadd.f32 %v3918, %v4123
        %4125 = vdwg.mxu0
        %s4126 = scalar_lea.vmem %s3, 224
        %v4127 = vld [vmem:[%s4126] sm:$0xff]
        %v4128 = vld [vmem:[%s4126 + $0x8] sm:$0xff]
        %v4129 = vld [vmem:[%s4126 + $0x10] sm:$0xff]
        %v4130 = vld [vmem:[%s4126 + $0x18] sm:$0xff]
        %v4131 = vld [vmem:[%s4126 + $0x20] sm:$0xff]
        %v4132 = vld [vmem:[%s4126 + $0x28] sm:$0xff]
        %v4133 = vld [vmem:[%s4126 + $0x30] sm:$0xff]
        %v4134 = vld [vmem:[%s4126 + $0x38] sm:$0xff]
        %v4135 = vld [vmem:[%s4126 + $0x40] sm:$0xff]
        %v4136 = vld [vmem:[%s4126 + $0x48] sm:$0xff]
        %v4137 = vld [vmem:[%s4126 + $0x50] sm:$0xff]
        %v4138 = vld [vmem:[%s4126 + $0x58] sm:$0xff]
        %v4139 = vld [vmem:[%s4126 + $0x60] sm:$0xff]
        %v4140 = vld [vmem:[%s4126 + $0x68] sm:$0xff]
        %v4155 = vunpack.c.l.b16 %v4127
        %v4156 = vunpack.c.h.b16 %v4127
        %v4157 = vunpack.c.l.b16 %v4128
        %v4158 = vunpack.c.h.b16 %v4128
        %v4159 = vunpack.c.l.b16 %v4129
        %v4160 = vunpack.c.h.b16 %v4129
        %v4161 = vunpack.c.l.b16 %v4130
        %v4162 = vunpack.c.h.b16 %v4130
        %v4163 = vunpack.c.l.b16 %v4131
        %v4164 = vunpack.c.h.b16 %v4131
        %v4165 = vunpack.c.l.b16 %v4132
        %v4166 = vunpack.c.h.b16 %v4132
        %v4167 = vunpack.c.l.b16 %v4133
        %v4168 = vunpack.c.h.b16 %v4133
        %v4169 = vunpack.c.l.b16 %v4134
        %v4170 = vunpack.c.h.b16 %v4134
        %v4171 = vunpack.c.l.b16 %v4135
        %v4172 = vunpack.c.h.b16 %v4135
        %v4173 = vunpack.c.l.b16 %v4136
        %v4174 = vunpack.c.h.b16 %v4136
        %v4175 = vunpack.c.l.b16 %v4137
        %v4176 = vunpack.c.h.b16 %v4137
        %v4177 = vunpack.c.l.b16 %v4138
        %v4178 = vunpack.c.h.b16 %v4138
        %v4179 = vunpack.c.l.b16 %v4139
        %v4180 = vunpack.c.h.b16 %v4139
        %v4181 = vunpack.c.l.b16 %v4140
        %v4182 = vunpack.c.h.b16 %v4140
        %v4183 = vpack.c.b16 %v4157, %v4155
        %v4184 = vpack.c.b16 %v4158, %v4156
        %v4185 = vpack.c.b16 %v4161, %v4159
        %v4186 = vpack.c.b16 %v4162, %v4160
        %v4187 = vpack.c.b16 %v4165, %v4163
        %v4188 = vpack.c.b16 %v4166, %v4164
        %v4189 = vpack.c.b16 %v4169, %v4167
        %v4190 = vpack.c.b16 %v4170, %v4168
        %v4191 = vpack.c.b16 %v4173, %v4171
        %v4192 = vpack.c.b16 %v4174, %v4172
        %v4193 = vpack.c.b16 %v4177, %v4175
        %v4194 = vpack.c.b16 %v4178, %v4176
        %v4195 = vpack.c.b16 %v4181, %v4179
        %v4196 = vpack.c.b16 %v4182, %v4180
        %v4212 = vsel %vm3756, %v3654, 0
        %4214 = vmatprep.subr.bf16.mxu0 %v4184
        %4215 = vmatpush1.bf16.msra.mxu0 %v4183
        %4216 = vmatprep.subr.bf16.mxu0 %v4186
        %4217 = vmatpush1.bf16.msra.mxu0 %v4185
        %4218 = vmatprep.subr.bf16.mxu0 %v4188
        %4219 = vmatpush1.bf16.msra.mxu0 %v4187
        %4220 = vmatprep.subr.bf16.mxu0 %v4190
        %4221 = vmatpush1.bf16.msra.mxu0 %v4189
        %4222 = vmatprep.subr.bf16.mxu0 %v4192
        %4223 = vmatpush1.bf16.msra.mxu0 %v4191
        %4224 = vmatprep.subr.bf16.mxu0 %v4194
        %4225 = vmatpush1.bf16.msra.mxu0 %v4193
        %4226 = vmatprep.subr.bf16.mxu0 %v4196
        %4227 = vmatpush1.bf16.msra.mxu0 %v4195
        %4228 = vmatprep.subr.bf16.mxu0 0
        %4229 = vmatpush1.bf16.msra.mxu0 0
        %4230 = vmatprep.subr.bf16.mxu0 0
        %4231 = vmatpush1.bf16.msra.mxu0 0
        %4232 = vmatprep.subr.bf16.mxu0 0
        %4233 = vmatpush1.bf16.msra.mxu0 0
        %4234 = vmatprep.subr.bf16.mxu0 0
        %4235 = vmatpush1.bf16.msra.mxu0 0
        %4236 = vmatprep.subr.bf16.mxu0 0
        %4237 = vmatpush1.bf16.msra.mxu0 0
        %4238 = vmatprep.subr.bf16.mxu0 0
        %4239 = vmatpush1.bf16.msra.mxu0 0
        %4240 = vmatprep.subr.bf16.mxu0 0
        %4241 = vmatpush1.bf16.msra.mxu0 0
        %4242 = vmatprep.subr.bf16.mxu0 0
        %4243 = vmatpush1.bf16.msra.mxu0 0
        %4244 = vmatprep.subr.bf16.mxu0 0
        %4245 = vmatpush1.bf16.msra.mxu0 0
        %4246 = vmatprep.mubr.bf16.mxu0 0
        %4247 = vmatmul.mubr.bf16.gmra.mrb[0].mxu0 %v3761
        %v4248 = vpop.f32.mrb[0].mxu0
        %v4249 = vadd.f32 0.0, %v4248
        %v4250 = vpop.f32.mrb[0].mxu0
        %v4251 = vadd.f32 0.0, %v4250
        %v4252 = vpop.f32.mrb[0].mxu0
        %v4253 = vadd.f32 0.0, %v4252
        %v4254 = vpop.f32.mrb[0].mxu0
        %v4255 = vadd.f32 0.0, %v4254
        %4256 = vmatprep.mubr.bf16.mxu0 0
        %4257 = vmatmul.mubr.bf16.gmra.mrb[0].mxu0 %v3764
        %v4258 = vpop.f32.mrb[0].mxu0
        %v4259 = vadd.f32 0.0, %v4258
        %v4260 = vpop.f32.mrb[0].mxu0
        %v4261 = vadd.f32 0.0, %v4260
        %v4262 = vpop.f32.mrb[0].mxu0
        %v4263 = vadd.f32 0.0, %v4262
        %v4264 = vpop.f32.mrb[0].mxu0
        %v4265 = vadd.f32 0.0, %v4264
        %4266 = vmatprep.mubr.bf16.mxu0 0
        %4267 = vmatmul.mubr.bf16.gmra.mrb[0].mxu0 %v3767
        %v4268 = vpop.f32.mrb[0].mxu0
        %v4269 = vadd.f32 0.0, %v4268
        %v4270 = vpop.f32.mrb[0].mxu0
        %v4271 = vadd.f32 0.0, %v4270
        %v4272 = vpop.f32.mrb[0].mxu0
        %v4273 = vadd.f32 0.0, %v4272
        %v4274 = vpop.f32.mrb[0].mxu0
        %v4275 = vadd.f32 0.0, %v4274
        %4276 = vmatprep.mubr.bf16.mxu0 0
        %4277 = vmatmul.mubr.bf16.gmra.mrb[0].mxu0 %v3770
        %v4278 = vpop.f32.mrb[0].mxu0
        %v4279 = vadd.f32 0.0, %v4278
        %v4280 = vpop.f32.mrb[0].mxu0
        %v4281 = vadd.f32 0.0, %v4280
        %v4282 = vpop.f32.mrb[0].mxu0
        %v4283 = vadd.f32 0.0, %v4282
        %v4284 = vpop.f32.mrb[0].mxu0
        %v4285 = vadd.f32 0.0, %v4284
        %4286 = vmatprep.mubr.bf16.mxu0 0
        %4287 = vmatmul.mubr.bf16.gmra.mrb[0].mxu0 %v3773
        %v4288 = vpop.f32.mrb[0].mxu0
        %v4289 = vadd.f32 0.0, %v4288
        %v4290 = vpop.f32.mrb[0].mxu0
        %v4291 = vadd.f32 0.0, %v4290
        %v4292 = vpop.f32.mrb[0].mxu0
        %v4293 = vadd.f32 0.0, %v4292
        %v4294 = vpop.f32.mrb[0].mxu0
        %v4295 = vadd.f32 0.0, %v4294
        %4296 = vmatprep.mubr.bf16.mxu0 0
        %4297 = vmatmul.mubr.bf16.gmra.mrb[0].mxu0 %v3776
        %v4298 = vpop.f32.mrb[0].mxu0
        %v4299 = vadd.f32 0.0, %v4298
        %v4300 = vpop.f32.mrb[0].mxu0
        %v4301 = vadd.f32 0.0, %v4300
        %v4302 = vpop.f32.mrb[0].mxu0
        %v4303 = vadd.f32 0.0, %v4302
        %v4304 = vpop.f32.mrb[0].mxu0
        %v4305 = vadd.f32 0.0, %v4304
        %4306 = vmatprep.mubr.bf16.mxu0 0
        %4307 = vmatmul.mubr.bf16.gmra.mrb[0].mxu0 %v3779
        %v4308 = vpop.f32.mrb[0].mxu0
        %v4309 = vadd.f32 0.0, %v4308
        %v4310 = vpop.f32.mrb[0].mxu0
        %v4311 = vadd.f32 0.0, %v4310
        %v4312 = vpop.f32.mrb[0].mxu0
        %v4313 = vadd.f32 0.0, %v4312
        %v4314 = vpop.f32.mrb[0].mxu0
        %v4315 = vadd.f32 0.0, %v4314
        %4316 = vmatprep.mubr.bf16.mxu0 0
        %4317 = vmatmul.mubr.bf16.gmra.mrb[0].mxu0 %v3782
        %v4318 = vpop.f32.mrb[0].mxu0
        %v4319 = vadd.f32 0.0, %v4318
        %v4320 = vpop.f32.mrb[0].mxu0
        %v4321 = vadd.f32 0.0, %v4320
        %v4322 = vpop.f32.mrb[0].mxu0
        %v4323 = vadd.f32 0.0, %v4322
        %v4324 = vpop.f32.mrb[0].mxu0
        %v4325 = vadd.f32 0.0, %v4324
        %4326 = vmatprep.mubr.bf16.mxu0 0
        %4327 = vmatmul.mubr.bf16.gmra.mrb[0].mxu0 %v3785
        %v4328 = vpop.f32.mrb[0].mxu0
        %v4329 = vadd.f32 0.0, %v4328
        %v4330 = vpop.f32.mrb[0].mxu0
        %v4331 = vadd.f32 0.0, %v4330
        %v4332 = vpop.f32.mrb[0].mxu0
        %v4333 = vadd.f32 0.0, %v4332
        %v4334 = vpop.f32.mrb[0].mxu0
        %v4335 = vadd.f32 0.0, %v4334
        %4336 = vmatprep.mubr.bf16.mxu0 0
        %4337 = vmatmul.mubr.bf16.gmra.mrb[0].mxu0 %v4212
        %v4338 = vpop.f32.mrb[0].mxu0
        %v4339 = vadd.f32 0.0, %v4338
        %v4340 = vpop.f32.mrb[0].mxu0
        %v4341 = vadd.f32 0.0, %v4340
        %v4342 = vpop.f32.mrb[0].mxu0
        %v4343 = vadd.f32 0.0, %v4342
        %v4344 = vpop.f32.mrb[0].mxu0
        %v4345 = vadd.f32 0.0, %v4344
        %4346 = vdwg.mxu0
        %v4347 = vadd.f32 %v4028, %v4249
        %v4348 = vadd.f32 %v4030, %v4251
        %v4349 = vadd.f32 %v4032, %v4253
        %v4350 = vadd.f32 %v4034, %v4255
        %v4351 = vadd.f32 %v4038, %v4259
        %v4352 = vadd.f32 %v4040, %v4261
        %v4353 = vadd.f32 %v4042, %v4263
        %v4354 = vadd.f32 %v4044, %v4265
        %v4355 = vadd.f32 %v4048, %v4269
        %v4356 = vadd.f32 %v4050, %v4271
        %v4357 = vadd.f32 %v4052, %v4273
        %v4358 = vadd.f32 %v4054, %v4275
        %v4359 = vadd.f32 %v4058, %v4279
        %v4360 = vadd.f32 %v4060, %v4281
        %v4361 = vadd.f32 %v4062, %v4283
        %v4362 = vadd.f32 %v4064, %v4285
        %v4363 = vadd.f32 %v4068, %v4289
        %v4364 = vadd.f32 %v4070, %v4291
        %v4365 = vadd.f32 %v4072, %v4293
        %v4366 = vadd.f32 %v4074, %v4295
        %v4367 = vadd.f32 %v4078, %v4299
        %v4368 = vadd.f32 %v4080, %v4301
        %v4369 = vadd.f32 %v4082, %v4303
        %v4370 = vadd.f32 %v4084, %v4305
        %v4371 = vadd.f32 %v4088, %v4309
        %v4372 = vadd.f32 %v4090, %v4311
        %v4373 = vadd.f32 %v4092, %v4313
        %v4374 = vadd.f32 %v4094, %v4315
        %v4375 = vadd.f32 %v4098, %v4319
        %v4376 = vadd.f32 %v4100, %v4321
        %v4377 = vadd.f32 %v4102, %v4323
        %v4378 = vadd.f32 %v4104, %v4325
        %v4379 = vadd.f32 %v4108, %v4329
        %v4380 = vadd.f32 %v4110, %v4331
        %v4381 = vadd.f32 %v4112, %v4333
        %v4382 = vadd.f32 %v4114, %v4335
        %v4383 = vadd.f32 %v4118, %v4339
        %v4384 = vadd.f32 %v4120, %v4341
        %v4385 = vadd.f32 %v4122, %v4343
        %v4386 = vadd.f32 %v4124, %v4345
        %s4387 = scalar_lea.vmem %s3, 336
        %v4388 = vld [vmem:[%s4387] sm:$0xff]
        %v4389 = vld [vmem:[%s4387 + $0x8] sm:$0xff]
        %v4390 = vld [vmem:[%s4387 + $0x10] sm:$0xff]
        %v4391 = vld [vmem:[%s4387 + $0x18] sm:$0xff]
        %v4392 = vld [vmem:[%s4387 + $0x20] sm:$0xff]
        %v4393 = vld [vmem:[%s4387 + $0x28] sm:$0xff]
        %v4394 = vld [vmem:[%s4387 + $0x30] sm:$0xff]
        %v4395 = vld [vmem:[%s4387 + $0x38] sm:$0xff]
        %v4396 = vld [vmem:[%s4387 + $0x40] sm:$0xff]
        %v4397 = vld [vmem:[%s4387 + $0x48] sm:$0xff]
        %v4398 = vld [vmem:[%s4387 + $0x50] sm:$0xff]
        %v4399 = vld [vmem:[%s4387 + $0x58] sm:$0xff]
        %v4400 = vld [vmem:[%s4387 + $0x60] sm:$0xff]
        %v4401 = vld [vmem:[%s4387 + $0x68] sm:$0xff]
        %v4416 = vunpack.c.l.b16 %v4388
        %v4417 = vunpack.c.h.b16 %v4388
        %v4418 = vunpack.c.l.b16 %v4389
        %v4419 = vunpack.c.h.b16 %v4389
        %v4420 = vunpack.c.l.b16 %v4390
        %v4421 = vunpack.c.h.b16 %v4390
        %v4422 = vunpack.c.l.b16 %v4391
        %v4423 = vunpack.c.h.b16 %v4391
        %v4424 = vunpack.c.l.b16 %v4392
        %v4425 = vunpack.c.h.b16 %v4392
        %v4426 = vunpack.c.l.b16 %v4393
        %v4427 = vunpack.c.h.b16 %v4393
        %v4428 = vunpack.c.l.b16 %v4394
        %v4429 = vunpack.c.h.b16 %v4394
        %v4430 = vunpack.c.l.b16 %v4395
        %v4431 = vunpack.c.h.b16 %v4395
        %v4432 = vunpack.c.l.b16 %v4396
        %v4433 = vunpack.c.h.b16 %v4396
        %v4434 = vunpack.c.l.b16 %v4397
        %v4435 = vunpack.c.h.b16 %v4397
        %v4436 = vunpack.c.l.b16 %v4398
        %v4437 = vunpack.c.h.b16 %v4398
        %v4438 = vunpack.c.l.b16 %v4399
        %v4439 = vunpack.c.h.b16 %v4399
        %v4440 = vunpack.c.l.b16 %v4400
        %v4441 = vunpack.c.h.b16 %v4400
        %v4442 = vunpack.c.l.b16 %v4401
        %v4443 = vunpack.c.h.b16 %v4401
        %v4444 = vpack.c.b16 %v4418, %v4416
        %v4445 = vpack.c.b16 %v4419, %v4417
        %v4446 = vpack.c.b16 %v4422, %v4420
        %v4447 = vpack.c.b16 %v4423, %v4421
        %v4448 = vpack.c.b16 %v4426, %v4424
        %v4449 = vpack.c.b16 %v4427, %v4425
        %v4450 = vpack.c.b16 %v4430, %v4428
        %v4451 = vpack.c.b16 %v4431, %v4429
        %v4452 = vpack.c.b16 %v4434, %v4432
        %v4453 = vpack.c.b16 %v4435, %v4433
        %v4454 = vpack.c.b16 %v4438, %v4436
        %v4455 = vpack.c.b16 %v4439, %v4437
        %v4456 = vpack.c.b16 %v4442, %v4440
        %v4457 = vpack.c.b16 %v4443, %v4441
        %v4473 = vsel %vm3756, %v3655, 0
        %4475 = vmatprep.subr.bf16.mxu0 %v4445
        %4476 = vmatpush1.bf16.msra.mxu0 %v4444
        %4477 = vmatprep.subr.bf16.mxu0 %v4447
        %4478 = vmatpush1.bf16.msra.mxu0 %v4446
        %4479 = vmatprep.subr.bf16.mxu0 %v4449
        %4480 = vmatpush1.bf16.msra.mxu0 %v4448
        %4481 = vmatprep.subr.bf16.mxu0 %v4451
        %4482 = vmatpush1.bf16.msra.mxu0 %v4450
        %4483 = vmatprep.subr.bf16.mxu0 %v4453
        %4484 = vmatpush1.bf16.msra.mxu0 %v4452
        %4485 = vmatprep.subr.bf16.mxu0 %v4455
        %4486 = vmatpush1.bf16.msra.mxu0 %v4454
        %4487 = vmatprep.subr.bf16.mxu0 %v4457
        %4488 = vmatpush1.bf16.msra.mxu0 %v4456
        %4489 = vmatprep.subr.bf16.mxu0 0
        %4490 = vmatpush1.bf16.msra.mxu0 0
        %4491 = vmatprep.subr.bf16.mxu0 0
        %4492 = vmatpush1.bf16.msra.mxu0 0
        %4493 = vmatprep.subr.bf16.mxu0 0
        %4494 = vmatpush1.bf16.msra.mxu0 0
        %4495 = vmatprep.subr.bf16.mxu0 0
        %4496 = vmatpush1.bf16.msra.mxu0 0
        %4497 = vmatprep.subr.bf16.mxu0 0
        %4498 = vmatpush1.bf16.msra.mxu0 0
        %4499 = vmatprep.subr.bf16.mxu0 0
        %4500 = vmatpush1.bf16.msra.mxu0 0
        %4501 = vmatprep.subr.bf16.mxu0 0
        %4502 = vmatpush1.bf16.msra.mxu0 0
        %4503 = vmatprep.subr.bf16.mxu0 0
        %4504 = vmatpush1.bf16.msra.mxu0 0
        %4505 = vmatprep.subr.bf16.mxu0 0
        %4506 = vmatpush1.bf16.msra.mxu0 0
        %4507 = vmatprep.mubr.bf16.mxu0 0
        %4508 = vmatmul.mubr.bf16.gmra.mrb[0].mxu0 %v3764
        %v4509 = vpop.f32.mrb[0].mxu0
        %v4510 = vadd.f32 0.0, %v4509
        %v4511 = vpop.f32.mrb[0].mxu0
        %v4512 = vadd.f32 0.0, %v4511
        %v4513 = vpop.f32.mrb[0].mxu0
        %v4514 = vadd.f32 0.0, %v4513
        %v4515 = vpop.f32.mrb[0].mxu0
        %v4516 = vadd.f32 0.0, %v4515
        %4517 = vmatprep.mubr.bf16.mxu0 0
        %4518 = vmatmul.mubr.bf16.gmra.mrb[0].mxu0 %v3767
        %v4519 = vpop.f32.mrb[0].mxu0
        %v4520 = vadd.f32 0.0, %v4519
        %v4521 = vpop.f32.mrb[0].mxu0
        %v4522 = vadd.f32 0.0, %v4521
        %v4523 = vpop.f32.mrb[0].mxu0
        %v4524 = vadd.f32 0.0, %v4523
        %v4525 = vpop.f32.mrb[0].mxu0
        %v4526 = vadd.f32 0.0, %v4525
        %4527 = vmatprep.mubr.bf16.mxu0 0
        %4528 = vmatmul.mubr.bf16.gmra.mrb[0].mxu0 %v3770
        %v4529 = vpop.f32.mrb[0].mxu0
        %v4530 = vadd.f32 0.0, %v4529
        %v4531 = vpop.f32.mrb[0].mxu0
        %v4532 = vadd.f32 0.0, %v4531
        %v4533 = vpop.f32.mrb[0].mxu0
        %v4534 = vadd.f32 0.0, %v4533
        %v4535 = vpop.f32.mrb[0].mxu0
        %v4536 = vadd.f32 0.0, %v4535
        %4537 = vmatprep.mubr.bf16.mxu0 0
        %4538 = vmatmul.mubr.bf16.gmra.mrb[0].mxu0 %v3773
        %v4539 = vpop.f32.mrb[0].mxu0
        %v4540 = vadd.f32 0.0, %v4539
        %v4541 = vpop.f32.mrb[0].mxu0
        %v4542 = vadd.f32 0.0, %v4541
        %v4543 = vpop.f32.mrb[0].mxu0
        %v4544 = vadd.f32 0.0, %v4543
        %v4545 = vpop.f32.mrb[0].mxu0
        %v4546 = vadd.f32 0.0, %v4545
        %4547 = vmatprep.mubr.bf16.mxu0 0
        %4548 = vmatmul.mubr.bf16.gmra.mrb[0].mxu0 %v3776
        %v4549 = vpop.f32.mrb[0].mxu0
        %v4550 = vadd.f32 0.0, %v4549
        %v4551 = vpop.f32.mrb[0].mxu0
        %v4552 = vadd.f32 0.0, %v4551
        %v4553 = vpop.f32.mrb[0].mxu0
        %v4554 = vadd.f32 0.0, %v4553
        %v4555 = vpop.f32.mrb[0].mxu0
        %v4556 = vadd.f32 0.0, %v4555
        %4557 = vmatprep.mubr.bf16.mxu0 0
        %4558 = vmatmul.mubr.bf16.gmra.mrb[0].mxu0 %v3779
        %v4559 = vpop.f32.mrb[0].mxu0
        %v4560 = vadd.f32 0.0, %v4559
        %v4561 = vpop.f32.mrb[0].mxu0
        %v4562 = vadd.f32 0.0, %v4561
        %v4563 = vpop.f32.mrb[0].mxu0
        %v4564 = vadd.f32 0.0, %v4563
        %v4565 = vpop.f32.mrb[0].mxu0
        %v4566 = vadd.f32 0.0, %v4565
        %4567 = vmatprep.mubr.bf16.mxu0 0
        %4568 = vmatmul.mubr.bf16.gmra.mrb[0].mxu0 %v3782
        %v4569 = vpop.f32.mrb[0].mxu0
        %v4570 = vadd.f32 0.0, %v4569
        %v4571 = vpop.f32.mrb[0].mxu0
        %v4572 = vadd.f32 0.0, %v4571
        %v4573 = vpop.f32.mrb[0].mxu0
        %v4574 = vadd.f32 0.0, %v4573
        %v4575 = vpop.f32.mrb[0].mxu0
        %v4576 = vadd.f32 0.0, %v4575
        %4577 = vmatprep.mubr.bf16.mxu0 0
        %4578 = vmatmul.mubr.bf16.gmra.mrb[0].mxu0 %v3785
        %v4579 = vpop.f32.mrb[0].mxu0
        %v4580 = vadd.f32 0.0, %v4579
        %v4581 = vpop.f32.mrb[0].mxu0
        %v4582 = vadd.f32 0.0, %v4581
        %v4583 = vpop.f32.mrb[0].mxu0
        %v4584 = vadd.f32 0.0, %v4583
        %v4585 = vpop.f32.mrb[0].mxu0
        %v4586 = vadd.f32 0.0, %v4585
        %4587 = vmatprep.mubr.bf16.mxu0 0
        %4588 = vmatmul.mubr.bf16.gmra.mrb[0].mxu0 %v4212
        %v4589 = vpop.f32.mrb[0].mxu0
        %v4590 = vadd.f32 0.0, %v4589
        %v4591 = vpop.f32.mrb[0].mxu0
        %v4592 = vadd.f32 0.0, %v4591
        %v4593 = vpop.f32.mrb[0].mxu0
        %v4594 = vadd.f32 0.0, %v4593
        %v4595 = vpop.f32.mrb[0].mxu0
        %v4596 = vadd.f32 0.0, %v4595
        %4597 = vmatprep.mubr.bf16.mxu0 0
        %4598 = vmatmul.mubr.bf16.gmra.mrb[0].mxu0 %v4473
        %v4599 = vpop.f32.mrb[0].mxu0
        %v4600 = vadd.f32 0.0, %v4599
        %v4601 = vpop.f32.mrb[0].mxu0
        %v4602 = vadd.f32 0.0, %v4601
        %v4603 = vpop.f32.mrb[0].mxu0
        %v4604 = vadd.f32 0.0, %v4603
        %v4605 = vpop.f32.mrb[0].mxu0
        %v4606 = vadd.f32 0.0, %v4605
        %4607 = vdwg.mxu0
        %v4608 = vadd.f32 %v4347, %v4510
        %v4609 = vadd.f32 %v4348, %v4512
        %v4610 = vadd.f32 %v4349, %v4514
        %v4611 = vadd.f32 %v4350, %v4516
        %v4612 = vadd.f32 %v4351, %v4520
        %v4613 = vadd.f32 %v4352, %v4522
        %v4614 = vadd.f32 %v4353, %v4524
        %v4615 = vadd.f32 %v4354, %v4526
        %v4616 = vadd.f32 %v4355, %v4530
        %v4617 = vadd.f32 %v4356, %v4532
        %v4618 = vadd.f32 %v4357, %v4534
        %v4619 = vadd.f32 %v4358, %v4536
        %v4620 = vadd.f32 %v4359, %v4540
        %v4621 = vadd.f32 %v4360, %v4542
        %v4622 = vadd.f32 %v4361, %v4544
        %v4623 = vadd.f32 %v4362, %v4546
        %v4624 = vadd.f32 %v4363, %v4550
        %v4625 = vadd.f32 %v4364, %v4552
        %v4626 = vadd.f32 %v4365, %v4554
        %v4627 = vadd.f32 %v4366, %v4556
        %v4628 = vadd.f32 %v4367, %v4560
        %v4629 = vadd.f32 %v4368, %v4562
        %v4630 = vadd.f32 %v4369, %v4564
        %v4631 = vadd.f32 %v4370, %v4566
        %v4632 = vadd.f32 %v4371, %v4570
        %v4633 = vadd.f32 %v4372, %v4572
        %v4634 = vadd.f32 %v4373, %v4574
        %v4635 = vadd.f32 %v4374, %v4576
        %v4636 = vadd.f32 %v4375, %v4580
        %v4637 = vadd.f32 %v4376, %v4582
        %v4638 = vadd.f32 %v4377, %v4584
        %v4639 = vadd.f32 %v4378, %v4586
        %v4640 = vadd.f32 %v4379, %v4590
        %v4641 = vadd.f32 %v4380, %v4592
        %v4642 = vadd.f32 %v4381, %v4594
        %v4643 = vadd.f32 %v4382, %v4596
        %v4644 = vadd.f32 %v4383, %v4600
        %v4645 = vadd.f32 %v4384, %v4602
        %v4646 = vadd.f32 %v4385, %v4604
        %v4647 = vadd.f32 %v4386, %v4606
        %s4648 = scalar_lea.vmem %s3, 448
        %v4649 = vld [vmem:[%s4648] sm:$0xff]
        %v4650 = vld [vmem:[%s4648 + $0x8] sm:$0xff]
        %v4651 = vld [vmem:[%s4648 + $0x10] sm:$0xff]
        %v4652 = vld [vmem:[%s4648 + $0x18] sm:$0xff]
        %v4653 = vld [vmem:[%s4648 + $0x20] sm:$0xff]
        %v4654 = vld [vmem:[%s4648 + $0x28] sm:$0xff]
        %v4655 = vld [vmem:[%s4648 + $0x30] sm:$0xff]
        %v4656 = vld [vmem:[%s4648 + $0x38] sm:$0xff]
        %v4657 = vld [vmem:[%s4648 + $0x40] sm:$0xff]
        %v4658 = vld [vmem:[%s4648 + $0x48] sm:$0xff]
        %v4659 = vld [vmem:[%s4648 + $0x50] sm:$0xff]
        %v4660 = vld [vmem:[%s4648 + $0x58] sm:$0xff]
        %v4661 = vld [vmem:[%s4648 + $0x60] sm:$0xff]
        %v4662 = vld [vmem:[%s4648 + $0x68] sm:$0xff]
        %v4677 = vunpack.c.l.b16 %v4649
        %v4678 = vunpack.c.h.b16 %v4649
        %v4679 = vunpack.c.l.b16 %v4650
        %v4680 = vunpack.c.h.b16 %v4650
        %v4681 = vunpack.c.l.b16 %v4651
        %v4682 = vunpack.c.h.b16 %v4651
        %v4683 = vunpack.c.l.b16 %v4652
        %v4684 = vunpack.c.h.b16 %v4652
        %v4685 = vunpack.c.l.b16 %v4653
        %v4686 = vunpack.c.h.b16 %v4653
        %v4687 = vunpack.c.l.b16 %v4654
        %v4688 = vunpack.c.h.b16 %v4654
        %v4689 = vunpack.c.l.b16 %v4655
        %v4690 = vunpack.c.h.b16 %v4655
        %v4691 = vunpack.c.l.b16 %v4656
        %v4692 = vunpack.c.h.b16 %v4656
        %v4693 = vunpack.c.l.b16 %v4657
        %v4694 = vunpack.c.h.b16 %v4657
        %v4695 = vunpack.c.l.b16 %v4658
        %v4696 = vunpack.c.h.b16 %v4658
        %v4697 = vunpack.c.l.b16 %v4659
        %v4698 = vunpack.c.h.b16 %v4659
        %v4699 = vunpack.c.l.b16 %v4660
        %v4700 = vunpack.c.h.b16 %v4660
        %v4701 = vunpack.c.l.b16 %v4661
        %v4702 = vunpack.c.h.b16 %v4661
        %v4703 = vunpack.c.l.b16 %v4662
        %v4704 = vunpack.c.h.b16 %v4662
        %v4705 = vpack.c.b16 %v4679, %v4677
        %v4706 = vpack.c.b16 %v4680, %v4678
        %v4707 = vpack.c.b16 %v4683, %v4681
        %v4708 = vpack.c.b16 %v4684, %v4682
        %v4709 = vpack.c.b16 %v4687, %v4685
        %v4710 = vpack.c.b16 %v4688, %v4686
        %v4711 = vpack.c.b16 %v4691, %v4689
        %v4712 = vpack.c.b16 %v4692, %v4690
        %v4713 = vpack.c.b16 %v4695, %v4693
        %v4714 = vpack.c.b16 %v4696, %v4694
        %v4715 = vpack.c.b16 %v4699, %v4697
        %v4716 = vpack.c.b16 %v4700, %v4698
        %v4717 = vpack.c.b16 %v4703, %v4701
        %v4718 = vpack.c.b16 %v4704, %v4702
        %v4734 = vsel %vm3756, %v3656, 0
        %4736 = vmatprep.subr.bf16.mxu0 %v4706
        %4737 = vmatpush1.bf16.msra.mxu0 %v4705
        %4738 = vmatprep.subr.bf16.mxu0 %v4708
        %4739 = vmatpush1.bf16.msra.mxu0 %v4707
        %4740 = vmatprep.subr.bf16.mxu0 %v4710
        %4741 = vmatpush1.bf16.msra.mxu0 %v4709
        %4742 = vmatprep.subr.bf16.mxu0 %v4712
        %4743 = vmatpush1.bf16.msra.mxu0 %v4711
        %4744 = vmatprep.subr.bf16.mxu0 %v4714
        %4745 = vmatpush1.bf16.msra.mxu0 %v4713
        %4746 = vmatprep.subr.bf16.mxu0 %v4716
        %4747 = vmatpush1.bf16.msra.mxu0 %v4715
        %4748 = vmatprep.subr.bf16.mxu0 %v4718
        %4749 = vmatpush1.bf16.msra.mxu0 %v4717
        %4750 = vmatprep.subr.bf16.mxu0 0
        %4751 = vmatpush1.bf16.msra.mxu0 0
        %4752 = vmatprep.subr.bf16.mxu0 0
        %4753 = vmatpush1.bf16.msra.mxu0 0
        %4754 = vmatprep.subr.bf16.mxu0 0
        %4755 = vmatpush1.bf16.msra.mxu0 0
        %4756 = vmatprep.subr.bf16.mxu0 0
        %4757 = vmatpush1.bf16.msra.mxu0 0
        %4758 = vmatprep.subr.bf16.mxu0 0
        %4759 = vmatpush1.bf16.msra.mxu0 0
        %4760 = vmatprep.subr.bf16.mxu0 0
        %4761 = vmatpush1.bf16.msra.mxu0 0
        %4762 = vmatprep.subr.bf16.mxu0 0
        %4763 = vmatpush1.bf16.msra.mxu0 0
        %4764 = vmatprep.subr.bf16.mxu0 0
        %4765 = vmatpush1.bf16.msra.mxu0 0
        %4766 = vmatprep.subr.bf16.mxu0 0
        %4767 = vmatpush1.bf16.msra.mxu0 0
        %4768 = vmatprep.mubr.bf16.mxu0 0
        %4769 = vmatmul.mubr.bf16.gmra.mrb[0].mxu0 %v3767
        %v4770 = vpop.f32.mrb[0].mxu0
        %v4771 = vadd.f32 0.0, %v4770
        %v4772 = vpop.f32.mrb[0].mxu0
        %v4773 = vadd.f32 0.0, %v4772
        %v4774 = vpop.f32.mrb[0].mxu0
        %v4775 = vadd.f32 0.0, %v4774
        %v4776 = vpop.f32.mrb[0].mxu0
        %v4777 = vadd.f32 0.0, %v4776
        %4778 = vmatprep.mubr.bf16.mxu0 0
        %4779 = vmatmul.mubr.bf16.gmra.mrb[0].mxu0 %v3770
        %v4780 = vpop.f32.mrb[0].mxu0
        %v4781 = vadd.f32 0.0, %v4780
        %v4782 = vpop.f32.mrb[0].mxu0
        %v4783 = vadd.f32 0.0, %v4782
        %v4784 = vpop.f32.mrb[0].mxu0
        %v4785 = vadd.f32 0.0, %v4784
        %v4786 = vpop.f32.mrb[0].mxu0
        %v4787 = vadd.f32 0.0, %v4786
        %4788 = vmatprep.mubr.bf16.mxu0 0
        %4789 = vmatmul.mubr.bf16.gmra.mrb[0].mxu0 %v3773
        %v4790 = vpop.f32.mrb[0].mxu0
        %v4791 = vadd.f32 0.0, %v4790
        %v4792 = vpop.f32.mrb[0].mxu0
        %v4793 = vadd.f32 0.0, %v4792
        %v4794 = vpop.f32.mrb[0].mxu0
        %v4795 = vadd.f32 0.0, %v4794
        %v4796 = vpop.f32.mrb[0].mxu0
        %v4797 = vadd.f32 0.0, %v4796
        %4798 = vmatprep.mubr.bf16.mxu0 0
        %4799 = vmatmul.mubr.bf16.gmra.mrb[0].mxu0 %v3776
        %v4800 = vpop.f32.mrb[0].mxu0
        %v4801 = vadd.f32 0.0, %v4800
        %v4802 = vpop.f32.mrb[0].mxu0
        %v4803 = vadd.f32 0.0, %v4802
        %v4804 = vpop.f32.mrb[0].mxu0
        %v4805 = vadd.f32 0.0, %v4804
        %v4806 = vpop.f32.mrb[0].mxu0
        %v4807 = vadd.f32 0.0, %v4806
        %4808 = vmatprep.mubr.bf16.mxu0 0
        %4809 = vmatmul.mubr.bf16.gmra.mrb[0].mxu0 %v3779
        %v4810 = vpop.f32.mrb[0].mxu0
        %v4811 = vadd.f32 0.0, %v4810
        %v4812 = vpop.f32.mrb[0].mxu0
        %v4813 = vadd.f32 0.0, %v4812
        %v4814 = vpop.f32.mrb[0].mxu0
        %v4815 = vadd.f32 0.0, %v4814
        %v4816 = vpop.f32.mrb[0].mxu0
        %v4817 = vadd.f32 0.0, %v4816
        %4818 = vmatprep.mubr.bf16.mxu0 0
        %4819 = vmatmul.mubr.bf16.gmra.mrb[0].mxu0 %v3782
        %v4820 = vpop.f32.mrb[0].mxu0
        %v4821 = vadd.f32 0.0, %v4820
        %v4822 = vpop.f32.mrb[0].mxu0
        %v4823 = vadd.f32 0.0, %v4822
        %v4824 = vpop.f32.mrb[0].mxu0
        %v4825 = vadd.f32 0.0, %v4824
        %v4826 = vpop.f32.mrb[0].mxu0
        %v4827 = vadd.f32 0.0, %v4826
        %4828 = vmatprep.mubr.bf16.mxu0 0
        %4829 = vmatmul.mubr.bf16.gmra.mrb[0].mxu0 %v3785
        %v4830 = vpop.f32.mrb[0].mxu0
        %v4831 = vadd.f32 0.0, %v4830
        %v4832 = vpop.f32.mrb[0].mxu0
        %v4833 = vadd.f32 0.0, %v4832
        %v4834 = vpop.f32.mrb[0].mxu0
        %v4835 = vadd.f32 0.0, %v4834
        %v4836 = vpop.f32.mrb[0].mxu0
        %v4837 = vadd.f32 0.0, %v4836
        %4838 = vmatprep.mubr.bf16.mxu0 0
        %4839 = vmatmul.mubr.bf16.gmra.mrb[0].mxu0 %v4212
        %v4840 = vpop.f32.mrb[0].mxu0
        %v4841 = vadd.f32 0.0, %v4840
        %v4842 = vpop.f32.mrb[0].mxu0
        %v4843 = vadd.f32 0.0, %v4842
        %v4844 = vpop.f32.mrb[0].mxu0
        %v4845 = vadd.f32 0.0, %v4844
        %v4846 = vpop.f32.mrb[0].mxu0
        %v4847 = vadd.f32 0.0, %v4846
        %4848 = vmatprep.mubr.bf16.mxu0 0
        %4849 = vmatmul.mubr.bf16.gmra.mrb[0].mxu0 %v4473
        %v4850 = vpop.f32.mrb[0].mxu0
        %v4851 = vadd.f32 0.0, %v4850
        %v4852 = vpop.f32.mrb[0].mxu0
        %v4853 = vadd.f32 0.0, %v4852
        %v4854 = vpop.f32.mrb[0].mxu0
        %v4855 = vadd.f32 0.0, %v4854
        %v4856 = vpop.f32.mrb[0].mxu0
        %v4857 = vadd.f32 0.0, %v4856
        %4858 = vmatprep.mubr.bf16.mxu0 0
        %4859 = vmatmul.mubr.bf16.gmra.mrb[0].mxu0 %v4734
        %v4860 = vpop.f32.mrb[0].mxu0
        %v4861 = vadd.f32 0.0, %v4860
        %v4862 = vpop.f32.mrb[0].mxu0
        %v4863 = vadd.f32 0.0, %v4862
        %v4864 = vpop.f32.mrb[0].mxu0
        %v4865 = vadd.f32 0.0, %v4864
        %v4866 = vpop.f32.mrb[0].mxu0
        %v4867 = vadd.f32 0.0, %v4866
        %4868 = vdwg.mxu0
        %v4869 = vadd.f32 %v4608, %v4771
        %v4870 = vadd.f32 %v4609, %v4773
        %v4871 = vadd.f32 %v4610, %v4775
        %v4872 = vadd.f32 %v4611, %v4777
        %v4873 = vadd.f32 %v4612, %v4781
        %v4874 = vadd.f32 %v4613, %v4783
        %v4875 = vadd.f32 %v4614, %v4785
        %v4876 = vadd.f32 %v4615, %v4787
        %v4877 = vadd.f32 %v4616, %v4791
        %v4878 = vadd.f32 %v4617, %v4793
        %v4879 = vadd.f32 %v4618, %v4795
        %v4880 = vadd.f32 %v4619, %v4797
        %v4881 = vadd.f32 %v4620, %v4801
        %v4882 = vadd.f32 %v4621, %v4803
        %v4883 = vadd.f32 %v4622, %v4805
        %v4884 = vadd.f32 %v4623, %v4807
        %v4885 = vadd.f32 %v4624, %v4811
        %v4886 = vadd.f32 %v4625, %v4813
        %v4887 = vadd.f32 %v4626, %v4815
        %v4888 = vadd.f32 %v4627, %v4817
        %v4889 = vadd.f32 %v4628, %v4821
        %v4890 = vadd.f32 %v4629, %v4823
        %v4891 = vadd.f32 %v4630, %v4825
        %v4892 = vadd.f32 %v4631, %v4827
        %v4893 = vadd.f32 %v4632, %v4831
        %v4894 = vadd.f32 %v4633, %v4833
        %v4895 = vadd.f32 %v4634, %v4835
        %v4896 = vadd.f32 %v4635, %v4837
        %v4897 = vadd.f32 %v4636, %v4841
        %v4898 = vadd.f32 %v4637, %v4843
        %v4899 = vadd.f32 %v4638, %v4845
        %v4900 = vadd.f32 %v4639, %v4847
        %v4901 = vadd.f32 %v4640, %v4851
        %v4902 = vadd.f32 %v4641, %v4853
        %v4903 = vadd.f32 %v4642, %v4855
        %v4904 = vadd.f32 %v4643, %v4857
        %v4905 = vadd.f32 %v4644, %v4861
        %v4906 = vadd.f32 %v4645, %v4863
        %v4907 = vadd.f32 %v4646, %v4865
        %v4908 = vadd.f32 %v4647, %v4867
        %v4909 = vld [vmem:[#allocation3] sm:$0x3]
        %v4911 = vlaneseq
        %v4912 = vshrl.u32 %v4911, 7
        %v4913 = vsub.s32 0, %v4912
        %v4914 = vrot.slane %v4909, %v4913
        %v4915 = vlaneseq
        %v4916 = vshrl.u32 %v4915, 7
        %v4917 = vsub.s32 1, %v4916
        %v4918 = vrot.slane %v4909, %v4917
        %v4921 = vadd.f32 %v4869, %v4914
        %v4922 = vadd.f32 %v4870, %v4918
        %v4923 = vadd.f32 %v4871, %v4914
        %v4924 = vadd.f32 %v4872, %v4918
        %v4925 = vadd.f32 %v4873, %v4914
        %v4926 = vadd.f32 %v4874, %v4918
        %v4927 = vadd.f32 %v4875, %v4914
        %v4928 = vadd.f32 %v4876, %v4918
        %v4929 = vadd.f32 %v4877, %v4914
        %v4930 = vadd.f32 %v4878, %v4918
        %v4931 = vadd.f32 %v4879, %v4914
        %v4932 = vadd.f32 %v4880, %v4918
        %v4933 = vadd.f32 %v4881, %v4914
        %v4934 = vadd.f32 %v4882, %v4918
        %v4935 = vadd.f32 %v4883, %v4914
        %v4936 = vadd.f32 %v4884, %v4918
        %v4937 = vadd.f32 %v4885, %v4914
        %v4938 = vadd.f32 %v4886, %v4918
        %v4939 = vadd.f32 %v4887, %v4914
        %v4940 = vadd.f32 %v4888, %v4918
        %v4941 = vadd.f32 %v4889, %v4914
        %v4942 = vadd.f32 %v4890, %v4918
        %v4943 = vadd.f32 %v4891, %v4914
        %v4944 = vadd.f32 %v4892, %v4918
        %v4945 = vadd.f32 %v4893, %v4914
        %v4946 = vadd.f32 %v4894, %v4918
        %v4947 = vadd.f32 %v4895, %v4914
        %v4948 = vadd.f32 %v4896, %v4918
        %v4949 = vadd.f32 %v4897, %v4914
        %v4950 = vadd.f32 %v4898, %v4918
        %v4951 = vadd.f32 %v4899, %v4914
        %v4952 = vadd.f32 %v4900, %v4918
        %v4953 = vadd.f32 %v4901, %v4914
        %v4954 = vadd.f32 %v4902, %v4918
        %v4955 = vadd.f32 %v4903, %v4914
        %v4956 = vadd.f32 %v4904, %v4918
        %v4957 = vadd.f32 %v4905, %v4914
        %v4958 = vadd.f32 %v4906, %v4918
        %v4959 = vadd.f32 %v4907, %v4914
        %v4960 = vadd.f32 %v4908, %v4918
        %v4961 = vmax.f32 %v4921, 0.0
        %v4962 = vmax.f32 %v4922, 0.0
        %v4963 = vmax.f32 %v4923, 0.0
        %v4964 = vmax.f32 %v4924, 0.0
        %v4965 = vmax.f32 %v4925, 0.0
        %v4966 = vmax.f32 %v4926, 0.0
        %v4967 = vmax.f32 %v4927, 0.0
        %v4968 = vmax.f32 %v4928, 0.0
        %v4969 = vmax.f32 %v4929, 0.0
        %v4970 = vmax.f32 %v4930, 0.0
        %v4971 = vmax.f32 %v4931, 0.0
        %v4972 = vmax.f32 %v4932, 0.0
        %v4973 = vmax.f32 %v4933, 0.0
        %v4974 = vmax.f32 %v4934, 0.0
        %v4975 = vmax.f32 %v4935, 0.0
        %v4976 = vmax.f32 %v4936, 0.0
        %v4977 = vmax.f32 %v4937, 0.0
        %v4978 = vmax.f32 %v4938, 0.0
        %v4979 = vmax.f32 %v4939, 0.0
        %v4980 = vmax.f32 %v4940, 0.0
        %v4981 = vmax.f32 %v4941, 0.0
        %v4982 = vmax.f32 %v4942, 0.0
        %v4983 = vmax.f32 %v4943, 0.0
        %v4984 = vmax.f32 %v4944, 0.0
        %v4985 = vmax.f32 %v4945, 0.0
        %v4986 = vmax.f32 %v4946, 0.0
        %v4987 = vmax.f32 %v4947, 0.0
        %v4988 = vmax.f32 %v4948, 0.0
        %v4989 = vmax.f32 %v4949, 0.0
        %v4990 = vmax.f32 %v4950, 0.0
        %v4991 = vmax.f32 %v4951, 0.0
        %v4992 = vmax.f32 %v4952, 0.0
        %v4993 = vmax.f32 %v4953, 0.0
        %v4994 = vmax.f32 %v4954, 0.0
        %v4995 = vmax.f32 %v4955, 0.0
        %v4996 = vmax.f32 %v4956, 0.0
        %v4997 = vmax.f32 %v4957, 0.0
        %v4998 = vmax.f32 %v4958, 0.0
        %v4999 = vmax.f32 %v4959, 0.0
        %v5000 = vmax.f32 %v4960, 0.0
        %v5001 = vmax.f32 %v4961, %v4965
        %v5002 = vmax.f32 %v4962, %v4966
        %v5003 = vmax.f32 %v4963, %v4967
        %v5004 = vmax.f32 %v4964, %v4968
        %v5005 = vmax.f32 %v4969, %v4973
        %v5006 = vmax.f32 %v4970, %v4974
        %v5007 = vmax.f32 %v4971, %v4975
        %v5008 = vmax.f32 %v4972, %v4976
        %v5009 = vmax.f32 %v4977, %v4981
        %v5010 = vmax.f32 %v4978, %v4982
        %v5011 = vmax.f32 %v4979, %v4983
        %v5012 = vmax.f32 %v4980, %v4984
        %v5013 = vmax.f32 %v4985, %v4989
        %v5014 = vmax.f32 %v4986, %v4990
        %v5015 = vmax.f32 %v4987, %v4991
        %v5016 = vmax.f32 %v4988, %v4992
        %v5017 = vmax.f32 %v4993, %v4997
        %v5018 = vmax.f32 %v4994, %v4998
        %v5019 = vmax.f32 %v4995, %v4999
        %v5020 = vmax.f32 %v4996, %v5000
        %v5021 = vmax.f32 %v5001, %v5002
        %v5022 = vmax.f32 %v5003, %v5004
        %v5023 = vmax.f32 %v5005, %v5006
        %v5024 = vmax.f32 %v5007, %v5008
        %v5025 = vmax.f32 %v5009, %v5010
        %v5026 = vmax.f32 %v5011, %v5012
        %v5027 = vmax.f32 %v5013, %v5014
        %v5028 = vmax.f32 %v5015, %v5016
        %v5029 = vmax.f32 %v5017, %v5018
        %v5030 = vmax.f32 %v5019, %v5020
        %v5031 = vpack.c.bf16 %v5022, %v5021
        %v5032 = vpack.c.bf16 %v5024, %v5023
        %v5033 = vpack.c.bf16 %v5026, %v5025
        %v5034 = vpack.c.bf16 %v5028, %v5027
        %v5035 = vpack.c.bf16 %v5030, %v5029
        %v5036 = vld [vmem:[#allocation5] sm:$0xf]
        %v5037 = vld [vmem:[#allocation5 + $0x4] sm:$0xf]
        %v5038 = vld [vmem:[#allocation5 + $0x8] sm:$0xf]
        %v5039 = vld [vmem:[#allocation5 + $0xc] sm:$0xf]
        %v5040 = vld [vmem:[#allocation5 + $0x10] sm:$0xf]
        %v5041 = vld [vmem:[#allocation5 + $0x14] sm:$0xf]
        %v5042 = vld [vmem:[#allocation5 + $0x18] sm:$0xf]
        %v5043 = vld [vmem:[#allocation5 + $0x1c] sm:$0xf]
        %v5044 = vld [vmem:[#allocation5 + $0x20] sm:$0xf]
        %v5045 = vld [vmem:[#allocation5 + $0x24] sm:$0xf]
        %s5046 = scalar_lea.vmem [#allocation5], 40
        %v5047 = vld [vmem:[%s5046] sm:$0xf]
        %v5048 = vld [vmem:[%s5046 + $0x4] sm:$0xf]
        %v5049 = vld [vmem:[%s5046 + $0x8] sm:$0xf]
        %v5050 = vld [vmem:[%s5046 + $0xc] sm:$0xf]
        %v5051 = vld [vmem:[%s5046 + $0x10] sm:$0xf]
        %v5052 = vld [vmem:[%s5046 + $0x14] sm:$0xf]
        %v5053 = vld [vmem:[%s5046 + $0x18] sm:$0xf]
        %v5054 = vld [vmem:[%s5046 + $0x1c] sm:$0xf]
        %v5055 = vld [vmem:[%s5046 + $0x20] sm:$0xf]
        %v5056 = vld [vmem:[%s5046 + $0x24] sm:$0xf]
        %v5067 = vunpack.c.l.b16 %v5047
        %v5068 = vunpack.c.l.b16 %v5048
        %v5069 = vunpack.c.l.b16 %v5049
        %v5070 = vunpack.c.l.b16 %v5050
        %v5071 = vunpack.c.l.b16 %v5051
        %v5072 = vunpack.c.l.b16 %v5052
        %v5073 = vunpack.c.l.b16 %v5053
        %v5074 = vunpack.c.l.b16 %v5054
        %v5075 = vunpack.c.l.b16 %v5055
        %v5076 = vunpack.c.l.b16 %v5056
        %v5077 = vpack.c.b16 %v5068, %v5067
        %v5078 = vpack.c.b16 %v5070, %v5069
        %v5079 = vpack.c.b16 %v5072, %v5071
        %v5080 = vpack.c.b16 %v5074, %v5073
        %v5081 = vpack.c.b16 %v5076, %v5075
        %vm5087 = vcmask 654336
        %v5089 = vsel %vm5087, %v5032, 0
        %5091 = vmatprep.subr.bf16.mxu0 0
        %5092 = vmatpush1.bf16.msra.mxu0 %v5077
        %5093 = vmatprep.subr.bf16.mxu0 0
        %5094 = vmatpush1.bf16.msra.mxu0 %v5078
        %5095 = vmatprep.subr.bf16.mxu0 0
        %5096 = vmatpush1.bf16.msra.mxu0 %v5079
        %5097 = vmatprep.subr.bf16.mxu0 0
        %5098 = vmatpush1.bf16.msra.mxu0 %v5080
        %5099 = vmatprep.subr.bf16.mxu0 0
        %5100 = vmatpush1.bf16.msra.mxu0 %v5081
        %5101 = vmatprep.subr.bf16.mxu0 0
        %5102 = vmatpush1.bf16.msra.mxu0 0
        %5103 = vmatprep.subr.bf16.mxu0 0
        %5104 = vmatpush1.bf16.msra.mxu0 0
        %5105 = vmatprep.subr.bf16.mxu0 0
        %5106 = vmatpush1.bf16.msra.mxu0 0
        %5107 = vmatprep.subr.bf16.mxu0 0
        %5108 = vmatpush1.bf16.msra.mxu0 0
        %5109 = vmatprep.subr.bf16.mxu0 0
        %5110 = vmatpush1.bf16.msra.mxu0 0
        %5111 = vmatprep.subr.bf16.mxu0 0
        %5112 = vmatpush1.bf16.msra.mxu0 0
        %5113 = vmatprep.subr.bf16.mxu0 0
        %5114 = vmatpush1.bf16.msra.mxu0 0
        %5115 = vmatprep.subr.bf16.mxu0 0
        %5116 = vmatpush1.bf16.msra.mxu0 0
        %5117 = vmatprep.subr.bf16.mxu0 0
        %5118 = vmatpush1.bf16.msra.mxu0 0
        %5119 = vmatprep.subr.bf16.mxu0 0
        %5120 = vmatpush1.bf16.msra.mxu0 0
        %5121 = vmatprep.subr.bf16.mxu0 0
        %5122 = vmatpush1.bf16.msra.mxu0 0
        %5123 = vmatprep.mubr.bf16.mxu0 0
        %5124 = vmatmul.mubr.bf16.gmra.mrb[0].mxu0 %v5089
        %v5125 = vpop.f32.mrb[0].mxu0
        %v5126 = vadd.f32 0.0, %v5125
        %v5127 = vpop.f32.mrb[0].mxu0
        %v5128 = vpop.f32.mrb[0].mxu0
        %v5129 = vadd.f32 0.0, %v5128
        %v5130 = vpop.f32.mrb[0].mxu0
        %5131 = vdwg.mxu0
        %v5142 = vunpack.c.l.b16 %v5036
        %v5143 = vunpack.c.l.b16 %v5037
        %v5144 = vunpack.c.l.b16 %v5038
        %v5145 = vunpack.c.l.b16 %v5039
        %v5146 = vunpack.c.l.b16 %v5040
        %v5147 = vunpack.c.l.b16 %v5041
        %v5148 = vunpack.c.l.b16 %v5042
        %v5149 = vunpack.c.l.b16 %v5043
        %v5150 = vunpack.c.l.b16 %v5044
        %v5151 = vunpack.c.l.b16 %v5045
        %v5152 = vpack.c.b16 %v5143, %v5142
        %v5153 = vpack.c.b16 %v5145, %v5144
        %v5154 = vpack.c.b16 %v5147, %v5146
        %v5155 = vpack.c.b16 %v5149, %v5148
        %v5156 = vpack.c.b16 %v5151, %v5150
        %v5163 = vsel %vm5087, %v5031, 0
        %5165 = vmatprep.subr.bf16.mxu0 0
        %5166 = vmatpush1.bf16.msra.mxu0 %v5152
        %5167 = vmatprep.subr.bf16.mxu0 0
        %5168 = vmatpush1.bf16.msra.mxu0 %v5153
        %5169 = vmatprep.subr.bf16.mxu0 0
        %5170 = vmatpush1.bf16.msra.mxu0 %v5154
        %5171 = vmatprep.subr.bf16.mxu0 0
        %5172 = vmatpush1.bf16.msra.mxu0 %v5155
        %5173 = vmatprep.subr.bf16.mxu0 0
        %5174 = vmatpush1.bf16.msra.mxu0 %v5156
        %5175 = vmatprep.subr.bf16.mxu0 0
        %5176 = vmatpush1.bf16.msra.mxu0 0
        %5177 = vmatprep.subr.bf16.mxu0 0
        %5178 = vmatpush1.bf16.msra.mxu0 0
        %5179 = vmatprep.subr.bf16.mxu0 0
        %5180 = vmatpush1.bf16.msra.mxu0 0
        %5181 = vmatprep.subr.bf16.mxu0 0
        %5182 = vmatpush1.bf16.msra.mxu0 0
        %5183 = vmatprep.subr.bf16.mxu0 0
        %5184 = vmatpush1.bf16.msra.mxu0 0
        %5185 = vmatprep.subr.bf16.mxu0 0
        %5186 = vmatpush1.bf16.msra.mxu0 0
        %5187 = vmatprep.subr.bf16.mxu0 0
        %5188 = vmatpush1.bf16.msra.mxu0 0
        %5189 = vmatprep.subr.bf16.mxu0 0
        %5190 = vmatpush1.bf16.msra.mxu0 0
        %5191 = vmatprep.subr.bf16.mxu0 0
        %5192 = vmatpush1.bf16.msra.mxu0 0
        %5193 = vmatprep.subr.bf16.mxu0 0
        %5194 = vmatpush1.bf16.msra.mxu0 0
        %5195 = vmatprep.subr.bf16.mxu0 0
        %5196 = vmatpush1.bf16.msra.mxu0 0
        %5197 = vmatprep.mubr.bf16.mxu0 0
        %5198 = vmatmul.mubr.bf16.gmra.mrb[0].mxu0 %v5163
        %v5199 = vpop.f32.mrb[0].mxu0
        %v5200 = vadd.f32 %v5126, %v5199
        %v5201 = vpop.f32.mrb[0].mxu0
        %v5202 = vpop.f32.mrb[0].mxu0
        %v5203 = vadd.f32 %v5129, %v5202
        %v5204 = vpop.f32.mrb[0].mxu0
        %5205 = vdwg.mxu0
        %s5206 = scalar_lea.vmem [#allocation5], 80
        %v5207 = vld [vmem:[%s5206] sm:$0xf]
        %v5208 = vld [vmem:[%s5206 + $0x4] sm:$0xf]
        %v5209 = vld [vmem:[%s5206 + $0x8] sm:$0xf]
        %v5210 = vld [vmem:[%s5206 + $0xc] sm:$0xf]
        %v5211 = vld [vmem:[%s5206 + $0x10] sm:$0xf]
        %v5212 = vld [vmem:[%s5206 + $0x14] sm:$0xf]
        %v5213 = vld [vmem:[%s5206 + $0x18] sm:$0xf]
        %v5214 = vld [vmem:[%s5206 + $0x1c] sm:$0xf]
        %v5215 = vld [vmem:[%s5206 + $0x20] sm:$0xf]
        %v5216 = vld [vmem:[%s5206 + $0x24] sm:$0xf]
        %v5227 = vunpack.c.l.b16 %v5207
        %v5228 = vunpack.c.l.b16 %v5208
        %v5229 = vunpack.c.l.b16 %v5209
        %v5230 = vunpack.c.l.b16 %v5210
        %v5231 = vunpack.c.l.b16 %v5211
        %v5232 = vunpack.c.l.b16 %v5212
        %v5233 = vunpack.c.l.b16 %v5213
        %v5234 = vunpack.c.l.b16 %v5214
        %v5235 = vunpack.c.l.b16 %v5215
        %v5236 = vunpack.c.l.b16 %v5216
        %v5237 = vpack.c.b16 %v5228, %v5227
        %v5238 = vpack.c.b16 %v5230, %v5229
        %v5239 = vpack.c.b16 %v5232, %v5231
        %v5240 = vpack.c.b16 %v5234, %v5233
        %v5241 = vpack.c.b16 %v5236, %v5235
        %v5248 = vsel %vm5087, %v5033, 0
        %5250 = vmatprep.subr.bf16.mxu0 0
        %5251 = vmatpush1.bf16.msra.mxu0 %v5237
        %5252 = vmatprep.subr.bf16.mxu0 0
        %5253 = vmatpush1.bf16.msra.mxu0 %v5238
        %5254 = vmatprep.subr.bf16.mxu0 0
        %5255 = vmatpush1.bf16.msra.mxu0 %v5239
        %5256 = vmatprep.subr.bf16.mxu0 0
        %5257 = vmatpush1.bf16.msra.mxu0 %v5240
        %5258 = vmatprep.subr.bf16.mxu0 0
        %5259 = vmatpush1.bf16.msra.mxu0 %v5241
        %5260 = vmatprep.subr.bf16.mxu0 0
        %5261 = vmatpush1.bf16.msra.mxu0 0
        %5262 = vmatprep.subr.bf16.mxu0 0
        %5263 = vmatpush1.bf16.msra.mxu0 0
        %5264 = vmatprep.subr.bf16.mxu0 0
        %5265 = vmatpush1.bf16.msra.mxu0 0
        %5266 = vmatprep.subr.bf16.mxu0 0
        %5267 = vmatpush1.bf16.msra.mxu0 0
        %5268 = vmatprep.subr.bf16.mxu0 0
        %5269 = vmatpush1.bf16.msra.mxu0 0
        %5270 = vmatprep.subr.bf16.mxu0 0
        %5271 = vmatpush1.bf16.msra.mxu0 0
        %5272 = vmatprep.subr.bf16.mxu0 0
        %5273 = vmatpush1.bf16.msra.mxu0 0
        %5274 = vmatprep.subr.bf16.mxu0 0
        %5275 = vmatpush1.bf16.msra.mxu0 0
        %5276 = vmatprep.subr.bf16.mxu0 0
        %5277 = vmatpush1.bf16.msra.mxu0 0
        %5278 = vmatprep.subr.bf16.mxu0 0
        %5279 = vmatpush1.bf16.msra.mxu0 0
        %5280 = vmatprep.subr.bf16.mxu0 0
        %5281 = vmatpush1.bf16.msra.mxu0 0
        %5282 = vmatprep.mubr.bf16.mxu0 0
        %5283 = vmatmul.mubr.bf16.gmra.mrb[0].mxu0 %v5248
        %v5284 = vpop.f32.mrb[0].mxu0
        %v5285 = vadd.f32 0.0, %v5284
        %v5286 = vpop.f32.mrb[0].mxu0
        %v5287 = vpop.f32.mrb[0].mxu0
        %v5288 = vadd.f32 0.0, %v5287
        %v5289 = vpop.f32.mrb[0].mxu0
        %5290 = vdwg.mxu0
        %v5291 = vadd.f32 %v5200, %v5285
        %v5292 = vadd.f32 %v5203, %v5288
        %s5293 = scalar_lea.vmem [#allocation5], 120
        %v5294 = vld [vmem:[%s5293] sm:$0xf]
        %v5295 = vld [vmem:[%s5293 + $0x4] sm:$0xf]
        %v5296 = vld [vmem:[%s5293 + $0x8] sm:$0xf]
        %v5297 = vld [vmem:[%s5293 + $0xc] sm:$0xf]
        %v5298 = vld [vmem:[%s5293 + $0x10] sm:$0xf]
        %v5299 = vld [vmem:[%s5293 + $0x14] sm:$0xf]
        %v5300 = vld [vmem:[%s5293 + $0x18] sm:$0xf]
        %v5301 = vld [vmem:[%s5293 + $0x1c] sm:$0xf]
        %v5302 = vld [vmem:[%s5293 + $0x20] sm:$0xf]
        %v5303 = vld [vmem:[%s5293 + $0x24] sm:$0xf]
        %v5314 = vunpack.c.l.b16 %v5294
        %v5315 = vunpack.c.l.b16 %v5295
        %v5316 = vunpack.c.l.b16 %v5296
        %v5317 = vunpack.c.l.b16 %v5297
        %v5318 = vunpack.c.l.b16 %v5298
        %v5319 = vunpack.c.l.b16 %v5299
        %v5320 = vunpack.c.l.b16 %v5300
        %v5321 = vunpack.c.l.b16 %v5301
        %v5322 = vunpack.c.l.b16 %v5302
        %v5323 = vunpack.c.l.b16 %v5303
        %v5324 = vpack.c.b16 %v5315, %v5314
        %v5325 = vpack.c.b16 %v5317, %v5316
        %v5326 = vpack.c.b16 %v5319, %v5318
        %v5327 = vpack.c.b16 %v5321, %v5320
        %v5328 = vpack.c.b16 %v5323, %v5322
        %v5335 = vsel %vm5087, %v5034, 0
        %5337 = vmatprep.subr.bf16.mxu0 0
        %5338 = vmatpush1.bf16.msra.mxu0 %v5324
        %5339 = vmatprep.subr.bf16.mxu0 0
        %5340 = vmatpush1.bf16.msra.mxu0 %v5325
        %5341 = vmatprep.subr.bf16.mxu0 0
        %5342 = vmatpush1.bf16.msra.mxu0 %v5326
        %5343 = vmatprep.subr.bf16.mxu0 0
        %5344 = vmatpush1.bf16.msra.mxu0 %v5327
        %5345 = vmatprep.subr.bf16.mxu0 0
        %5346 = vmatpush1.bf16.msra.mxu0 %v5328
        %5347 = vmatprep.subr.bf16.mxu0 0
        %5348 = vmatpush1.bf16.msra.mxu0 0
        %5349 = vmatprep.subr.bf16.mxu0 0
        %5350 = vmatpush1.bf16.msra.mxu0 0
        %5351 = vmatprep.subr.bf16.mxu0 0
        %5352 = vmatpush1.bf16.msra.mxu0 0
        %5353 = vmatprep.subr.bf16.mxu0 0
        %5354 = vmatpush1.bf16.msra.mxu0 0
        %5355 = vmatprep.subr.bf16.mxu0 0
        %5356 = vmatpush1.bf16.msra.mxu0 0
        %5357 = vmatprep.subr.bf16.mxu0 0
        %5358 = vmatpush1.bf16.msra.mxu0 0
        %5359 = vmatprep.subr.bf16.mxu0 0
        %5360 = vmatpush1.bf16.msra.mxu0 0
        %5361 = vmatprep.subr.bf16.mxu0 0
        %5362 = vmatpush1.bf16.msra.mxu0 0
        %5363 = vmatprep.subr.bf16.mxu0 0
        %5364 = vmatpush1.bf16.msra.mxu0 0
        %5365 = vmatprep.subr.bf16.mxu0 0
        %5366 = vmatpush1.bf16.msra.mxu0 0
        %5367 = vmatprep.subr.bf16.mxu0 0
        %5368 = vmatpush1.bf16.msra.mxu0 0
        %5369 = vmatprep.mubr.bf16.mxu0 0
        %5370 = vmatmul.mubr.bf16.gmra.mrb[0].mxu0 %v5335
        %v5371 = vpop.f32.mrb[0].mxu0
        %v5372 = vadd.f32 0.0, %v5371
        %v5373 = vpop.f32.mrb[0].mxu0
        %v5374 = vpop.f32.mrb[0].mxu0
        %v5375 = vadd.f32 0.0, %v5374
        %v5376 = vpop.f32.mrb[0].mxu0
        %5377 = vdwg.mxu0
        %v5378 = vadd.f32 %v5291, %v5372
        %v5379 = vadd.f32 %v5292, %v5375
        %s5380 = scalar_lea.vmem [#allocation5], 160
        %v5381 = vld [vmem:[%s5380] sm:$0xf]
        %v5382 = vld [vmem:[%s5380 + $0x4] sm:$0xf]
        %v5383 = vld [vmem:[%s5380 + $0x8] sm:$0xf]
        %v5384 = vld [vmem:[%s5380 + $0xc] sm:$0xf]
        %v5385 = vld [vmem:[%s5380 + $0x10] sm:$0xf]
        %v5386 = vld [vmem:[%s5380 + $0x14] sm:$0xf]
        %v5387 = vld [vmem:[%s5380 + $0x18] sm:$0xf]
        %v5388 = vld [vmem:[%s5380 + $0x1c] sm:$0xf]
        %v5389 = vld [vmem:[%s5380 + $0x20] sm:$0xf]
        %v5390 = vld [vmem:[%s5380 + $0x24] sm:$0xf]
        %v5401 = vunpack.c.l.b16 %v5381
        %v5402 = vunpack.c.l.b16 %v5382
        %v5403 = vunpack.c.l.b16 %v5383
        %v5404 = vunpack.c.l.b16 %v5384
        %v5405 = vunpack.c.l.b16 %v5385
        %v5406 = vunpack.c.l.b16 %v5386
        %v5407 = vunpack.c.l.b16 %v5387
        %v5408 = vunpack.c.l.b16 %v5388
        %v5409 = vunpack.c.l.b16 %v5389
        %v5410 = vunpack.c.l.b16 %v5390
        %v5411 = vpack.c.b16 %v5402, %v5401
        %v5412 = vpack.c.b16 %v5404, %v5403
        %v5413 = vpack.c.b16 %v5406, %v5405
        %v5414 = vpack.c.b16 %v5408, %v5407
        %v5415 = vpack.c.b16 %v5410, %v5409
        %v5422 = vsel %vm5087, %v5035, 0
        %5424 = vmatprep.subr.bf16.mxu0 0
        %5425 = vmatpush1.bf16.msra.mxu0 %v5411
        %5426 = vmatprep.subr.bf16.mxu0 0
        %5427 = vmatpush1.bf16.msra.mxu0 %v5412
        %5428 = vmatprep.subr.bf16.mxu0 0
        %5429 = vmatpush1.bf16.msra.mxu0 %v5413
        %5430 = vmatprep.subr.bf16.mxu0 0
        %5431 = vmatpush1.bf16.msra.mxu0 %v5414
        %5432 = vmatprep.subr.bf16.mxu0 0
        %5433 = vmatpush1.bf16.msra.mxu0 %v5415
        %5434 = vmatprep.subr.bf16.mxu0 0
        %5435 = vmatpush1.bf16.msra.mxu0 0
        %5436 = vmatprep.subr.bf16.mxu0 0
        %5437 = vmatpush1.bf16.msra.mxu0 0
        %5438 = vmatprep.subr.bf16.mxu0 0
        %5439 = vmatpush1.bf16.msra.mxu0 0
        %5440 = vmatprep.subr.bf16.mxu0 0
        %5441 = vmatpush1.bf16.msra.mxu0 0
        %5442 = vmatprep.subr.bf16.mxu0 0
        %5443 = vmatpush1.bf16.msra.mxu0 0
        %5444 = vmatprep.subr.bf16.mxu0 0
        %5445 = vmatpush1.bf16.msra.mxu0 0
        %5446 = vmatprep.subr.bf16.mxu0 0
        %5447 = vmatpush1.bf16.msra.mxu0 0
        %5448 = vmatprep.subr.bf16.mxu0 0
        %5449 = vmatpush1.bf16.msra.mxu0 0
        %5450 = vmatprep.subr.bf16.mxu0 0
        %5451 = vmatpush1.bf16.msra.mxu0 0
        %5452 = vmatprep.subr.bf16.mxu0 0
        %5453 = vmatpush1.bf16.msra.mxu0 0
        %5454 = vmatprep.subr.bf16.mxu0 0
        %5455 = vmatpush1.bf16.msra.mxu0 0
        %5456 = vmatprep.mubr.bf16.mxu0 0
        %5457 = vmatmul.mubr.bf16.gmra.mrb[0].mxu0 %v5422
        %v5458 = vpop.f32.mrb[0].mxu0
        %v5459 = vadd.f32 0.0, %v5458
        %v5460 = vpop.f32.mrb[0].mxu0
        %v5461 = vpop.f32.mrb[0].mxu0
        %v5462 = vadd.f32 0.0, %v5461
        %v5463 = vpop.f32.mrb[0].mxu0
        %5464 = vdwg.mxu0
        %v5465 = vadd.f32 %v5378, %v5459
        %v5466 = vadd.f32 %v5379, %v5462
        %v5467 = vld [vmem:[%s6] sm:$0x1]
        %v5469 = vlaneseq
        %v5470 = vshrl.u32 %v5469, 7
        %v5471 = vsub.s32 0, %v5470
        %v5472 = vrot.slane %v5467, %v5471
        %v5474 = vadd.f32 %v5465, %v5472
        %v5475 = vadd.f32 %v5466, %v5472
        %v5476 = vmax.f32 %v5474, 0.0
        %v5477 = vmax.f32 %v5475, 0.0
        %v5478 = vpack.c.bf16 %v5477, %v5476
        %v5479 = vld [vmem:[%s7] sm:$0xf]
        %v5480 = vld [vmem:[%s7 + $0x4] sm:$0xf]
        %v5481 = vld [vmem:[%s7 + $0x8] sm:$0xf]
        %v5482 = vld [vmem:[%s7 + $0xc] sm:$0xf]
        %v5483 = vld [vmem:[%s7 + $0x10] sm:$0xf]
        %v5484 = vld [vmem:[%s7 + $0x14] sm:$0xf]
        %v5485 = vld [vmem:[%s7 + $0x18] sm:$0xf]
        %v5486 = vld [vmem:[%s7 + $0x1c] sm:$0xf]
        %v5487 = vld [vmem:[%s7 + $0x20] sm:$0xf]
        %v5488 = vld [vmem:[%s7 + $0x24] sm:$0xf]
        %v5489 = vld [vmem:[%s7 + $0x28] sm:$0xf]
        %v5490 = vld [vmem:[%s7 + $0x2c] sm:$0xf]
        %v5491 = vld [vmem:[%s7 + $0x30] sm:$0xf]
        %v5492 = vld [vmem:[%s7 + $0x34] sm:$0xf]
        %v5493 = vld [vmem:[%s7 + $0x38] sm:$0xf]
        %v5494 = vld [vmem:[%s7 + $0x3c] sm:$0xf]
        %v5495 = vld [vmem:[#allocation7] sm:$0x1]
        %v5497 = vlaneseq
        %v5498 = vshrl.u32 %v5497, 7
        %v5499 = vsub.s32 0, %v5498
        %v5500 = vrot.slane %v5495, %v5499
        %v5518 = vunpack.c.l.b16 %v5479
        %v5519 = vunpack.c.l.b16 %v5480
        %v5520 = vunpack.c.l.b16 %v5481
        %v5521 = vunpack.c.l.b16 %v5482
        %v5522 = vunpack.c.l.b16 %v5483
        %v5523 = vunpack.c.l.b16 %v5484
        %v5524 = vunpack.c.l.b16 %v5485
        %v5525 = vunpack.c.l.b16 %v5486
        %v5526 = vunpack.c.l.b16 %v5487
        %v5527 = vunpack.c.l.b16 %v5488
        %v5528 = vunpack.c.l.b16 %v5489
        %v5529 = vunpack.c.l.b16 %v5490
        %v5530 = vunpack.c.l.b16 %v5491
        %v5531 = vunpack.c.l.b16 %v5492
        %v5532 = vunpack.c.l.b16 %v5493
        %v5533 = vunpack.c.l.b16 %v5494
        %v5534 = vpack.c.b16 %v5519, %v5518
        %v5535 = vpack.c.b16 %v5521, %v5520
        %v5536 = vpack.c.b16 %v5523, %v5522
        %v5537 = vpack.c.b16 %v5525, %v5524
        %v5538 = vpack.c.b16 %v5527, %v5526
        %v5539 = vpack.c.b16 %v5529, %v5528
        %v5540 = vpack.c.b16 %v5531, %v5530
        %v5541 = vpack.c.b16 %v5533, %v5532
        %5550 = vmatprep.subr.bf16.mxu0 0
        %5551 = vmatpush1.bf16.msra.mxu0 %v5534
        %5552 = vmatprep.subr.bf16.mxu0 0
        %5553 = vmatpush1.bf16.msra.mxu0 %v5535
        %5554 = vmatprep.subr.bf16.mxu0 0
        %5555 = vmatpush1.bf16.msra.mxu0 %v5536
        %5556 = vmatprep.subr.bf16.mxu0 0
        %5557 = vmatpush1.bf16.msra.mxu0 %v5537
        %5558 = vmatprep.subr.bf16.mxu0 0
        %5559 = vmatpush1.bf16.msra.mxu0 %v5538
        %5560 = vmatprep.subr.bf16.mxu0 0
        %5561 = vmatpush1.bf16.msra.mxu0 %v5539
        %5562 = vmatprep.subr.bf16.mxu0 0
        %5563 = vmatpush1.bf16.msra.mxu0 %v5540
        %5564 = vmatprep.subr.bf16.mxu0 0
        %5565 = vmatpush1.bf16.msra.mxu0 %v5541
        %5566 = vmatprep.subr.bf16.mxu0 0
        %5567 = vmatpush1.bf16.msra.mxu0 0
        %5568 = vmatprep.subr.bf16.mxu0 0
        %5569 = vmatpush1.bf16.msra.mxu0 0
        %5570 = vmatprep.subr.bf16.mxu0 0
        %5571 = vmatpush1.bf16.msra.mxu0 0
        %5572 = vmatprep.subr.bf16.mxu0 0
        %5573 = vmatpush1.bf16.msra.mxu0 0
        %5574 = vmatprep.subr.bf16.mxu0 0
        %5575 = vmatpush1.bf16.msra.mxu0 0
        %5576 = vmatprep.subr.bf16.mxu0 0
        %5577 = vmatpush1.bf16.msra.mxu0 0
        %5578 = vmatprep.subr.bf16.mxu0 0
        %5579 = vmatpush1.bf16.msra.mxu0 0
        %5580 = vmatprep.subr.bf16.mxu0 0
        %5581 = vmatpush1.bf16.msra.mxu0 0
        %5582 = vmatprep.mubr.bf16.mxu0 0
        %5583 = vmatmul.mubr.bf16.gmra.mrb[0].mxu0 %v5478
        %v5584 = vpop.f32.mrb[0].mxu0
        %v5585 = vadd.f32 %v5500, %v5584
        %v5586 = vpop.f32.mrb[0].mxu0
        %v5587 = vpop.f32.mrb[0].mxu0
        %v5588 = vadd.f32 %v5500, %v5587
        %v5589 = vpop.f32.mrb[0].mxu0
        %5590 = vdwg.mxu0
        %v5591 = vmax.f32 %v5585, 0.0
        %v5592 = vmax.f32 %v5588, 0.0
        %v5593 = vpack.c.bf16 %v5592, %v5591
        %v5594 = vld [vmem:[%s9] sm:$0xf]
        %v5595 = vld [vmem:[%s9 + $0x4] sm:$0xf]
        %v5596 = vld [vmem:[%s9 + $0x8] sm:$0xf]
        %v5597 = vld [vmem:[%s9 + $0xc] sm:$0xf]
        %v5598 = vld [vmem:[%s9 + $0x10] sm:$0xf]
        %v5599 = vld [vmem:[%s9 + $0x14] sm:$0xf]
        %v5600 = vld [vmem:[%s9 + $0x18] sm:$0xf]
        %v5601 = vld [vmem:[%s9 + $0x1c] sm:$0xf]
        %v5602 = vld [vmem:[%s9 + $0x20] sm:$0xf]
        %v5603 = vld [vmem:[%s9 + $0x24] sm:$0xf]
        %v5604 = vld [vmem:[%s9 + $0x28] sm:$0xf]
        %v5605 = vld [vmem:[%s9 + $0x2c] sm:$0xf]
        %v5606 = vld [vmem:[%s9 + $0x30] sm:$0xf]
        %v5607 = vld [vmem:[%s9 + $0x34] sm:$0xf]
        %v5608 = vld [vmem:[%s9 + $0x38] sm:$0xf]
        %v5609 = vld [vmem:[%s9 + $0x3c] sm:$0xf]
        %v5610 = vld [vmem:[#allocation8] sm:$0x1]
        %v5612 = vlaneseq
        %v5613 = vshrl.u32 %v5612, 7
        %v5614 = vsub.s32 0, %v5613
        %v5615 = vrot.slane %v5610, %v5614
        %v5633 = vunpack.c.l.b16 %v5594
        %v5634 = vunpack.c.l.b16 %v5595
        %v5635 = vunpack.c.l.b16 %v5596
        %v5636 = vunpack.c.l.b16 %v5597
        %v5637 = vunpack.c.l.b16 %v5598
        %v5638 = vunpack.c.l.b16 %v5599
        %v5639 = vunpack.c.l.b16 %v5600
        %v5640 = vunpack.c.l.b16 %v5601
        %v5641 = vunpack.c.l.b16 %v5602
        %v5642 = vunpack.c.l.b16 %v5603
        %v5643 = vunpack.c.l.b16 %v5604
        %v5644 = vunpack.c.l.b16 %v5605
        %v5645 = vunpack.c.l.b16 %v5606
        %v5646 = vunpack.c.l.b16 %v5607
        %v5647 = vunpack.c.l.b16 %v5608
        %v5648 = vunpack.c.l.b16 %v5609
        %v5649 = vpack.c.b16 %v5634, %v5633
        %v5650 = vpack.c.b16 %v5636, %v5635
        %v5651 = vpack.c.b16 %v5638, %v5637
        %v5652 = vpack.c.b16 %v5640, %v5639
        %v5653 = vpack.c.b16 %v5642, %v5641
        %v5654 = vpack.c.b16 %v5644, %v5643
        %v5655 = vpack.c.b16 %v5646, %v5645
        %v5656 = vpack.c.b16 %v5648, %v5647
        %5665 = vmatprep.subr.bf16.mxu0 0
        %5666 = vmatpush1.bf16.msra.mxu0 %v5649
        %5667 = vmatprep.subr.bf16.mxu0 0
        %5668 = vmatpush1.bf16.msra.mxu0 %v5650
        %5669 = vmatprep.subr.bf16.mxu0 0
        %5670 = vmatpush1.bf16.msra.mxu0 %v5651
        %5671 = vmatprep.subr.bf16.mxu0 0
        %5672 = vmatpush1.bf16.msra.mxu0 %v5652
        %5673 = vmatprep.subr.bf16.mxu0 0
        %5674 = vmatpush1.bf16.msra.mxu0 %v5653
        %5675 = vmatprep.subr.bf16.mxu0 0
        %5676 = vmatpush1.bf16.msra.mxu0 %v5654
        %5677 = vmatprep.subr.bf16.mxu0 0
        %5678 = vmatpush1.bf16.msra.mxu0 %v5655
        %5679 = vmatprep.subr.bf16.mxu0 0
        %5680 = vmatpush1.bf16.msra.mxu0 %v5656
        %5681 = vmatprep.subr.bf16.mxu0 0
        %5682 = vmatpush1.bf16.msra.mxu0 0
        %5683 = vmatprep.subr.bf16.mxu0 0
        %5684 = vmatpush1.bf16.msra.mxu0 0
        %5685 = vmatprep.subr.bf16.mxu0 0
        %5686 = vmatpush1.bf16.msra.mxu0 0
        %5687 = vmatprep.subr.bf16.mxu0 0
        %5688 = vmatpush1.bf16.msra.mxu0 0
        %5689 = vmatprep.subr.bf16.mxu0 0
        %5690 = vmatpush1.bf16.msra.mxu0 0
        %5691 = vmatprep.subr.bf16.mxu0 0
        %5692 = vmatpush1.bf16.msra.mxu0 0
        %5693 = vmatprep.subr.bf16.mxu0 0
        %5694 = vmatpush1.bf16.msra.mxu0 0
        %5695 = vmatprep.subr.bf16.mxu0 0
        %5696 = vmatpush1.bf16.msra.mxu0 0
        %5697 = vmatprep.mubr.bf16.mxu0 0
        %5698 = vmatmul.mubr.bf16.gmra.mrb[0].mxu0 %v5593
        %v5699 = vpop.f32.mrb[0].mxu0
        %v5700 = vadd.f32 %v5615, %v5699
        %v5701 = vpop.f32.mrb[0].mxu0
        %v5702 = vpop.f32.mrb[0].mxu0
        %v5703 = vadd.f32 %v5615, %v5702
        %v5704 = vpop.f32.mrb[0].mxu0
        %5705 = vdwg.mxu0
        %5706 = vst [vmem:[%s734] sm:$0xff] %v5700
        %5707 = vst [vmem:[%s734 + $0x8] sm:$0xff] %v5703
        %s5708 = smul.u32 2, %s25
        %p5709 = scmp.lt.s32.totalorder %s5708, 3
        %s5710 = scalar_select %p5709, %s5708, 3
        %s5711 = smul.addr %s5710, 8
        %s5712 = scalar_lea.vmem %s11, %s5711
        // Predicated region
        $region122: #{cnn_forward.1} parent=100 // pred_check
          %p5713 = pneg %p279
        $region123: #{cnn_forward.1} parent=100 // pred_check_branch
          %5715 = sbr.rel (%p5713) target = $region125
        $region124: #{cnn_forward.1} parent=100 // pred_region
          %s5716 = smul.u32 2, %s25
        $region125: #{cnn_forward.1} parent=100 // pred_fallthru
          _
      $region101: #{cnn_forward.1} parent=5 // pred_fallthru
        _
      %p5717 = scmp.le.s32.totalorder 2, %s20
      // Predicated region
      $region126: #{cnn_forward.1} parent=5 // pred_check
        %p5718 = pneg %p5717
      $region127: #{cnn_forward.1} parent=5 // pred_check_branch
        %5720 = sbr.rel (%p5718) target = $region129
      $region128: #{cnn_forward.1} parent=5 // pred_region
        %s5721 = ssub.s32 %s20, 2
        // Predicated region
        $region130: #{cnn_forward.1} parent=128 // pred_check
          %p5722 = pneg %p285
        $region131: #{cnn_forward.1} parent=128 // pred_check_branch
          %5724 = sbr.rel (%p5722) target = $region133
        $region132: #{cnn_forward.1} parent=128 // pred_region
          %s5725 = smul.u32 2, %s26
          %p5726 = scmp.lt.s32.totalorder %s5725, 3
          %s5727 = scalar_select %p5726, %s5725, 3
          %s5728 = smul.addr %s5727, 8
          %s5729 = scalar_lea.vmem %s11, %s5728
        $region133: #{cnn_forward.1} parent=128 // pred_fallthru
          _
      $region129: #{cnn_forward.1} parent=5 // pred_fallthru
        _
    $region6: #{cnn_forward.1} parent=1 // loop_footer
      %s24 = sadd.s32 1, %s20
    $region7: #{cnn_forward.1} parent=1 // loop_footer_branch
      %19 = sbr.rel target = $region3
    $region8: #{cnn_forward.1} parent=1 // loop_exit
      _
    %5730 = vsyncpa [#allocation4], 1
    %s5731 = scalar_lea.sflag [#allocation4], 1
    %5732 = vsyncpa %s5731, 1
    %5733 = vsyncpa [#allocation6], 1
    %5734 = vsyncpa [#allocation9], 1

</llo_original>
